<compile_context>
chip_gen: v6e
topology: v6e:2x2x1
jax: 0.10.0
libtpu: 0.0.40
codegen_flags: <defaults>
</compile_context>

<pallas_src>
import functools

import jax
import jax.numpy as jnp
from jax import lax
from jax.experimental import pallas as pl
from jax.experimental.pallas import tpu as pltpu


def _inception_kernel(x_ref, wf_ref, bf_ref, out_ref, *, H, W):
    """One grid step = one image.

    x_ref  : (1, H+4, W+4, Cin)   zero-padded input (serves convs AND pool)
    wf_ref : (25*Cin, Cconv)      fused conv weight, (kh, kw, cin)-major K
    bf_ref : (1, Cconv)           fused bias  [b1 ++ b3 ++ b5]
    out_ref: (1, H, W, Cconv+Cin) [conv1x1 ++ conv3x3 ++ conv5x5 ++ maxpool]
    """
    Cin = x_ref.shape[-1]
    Cconv = wf_ref.shape[-1]

    # ---- fused convs: one im2col build + one MXU matmul ----------------------
    patches = [x_ref[0, kh:kh + H, kw:kw + W, :]
               for kh in range(5) for kw in range(5)]
    lhs = jnp.concatenate(patches, axis=-1).reshape(H * W, 25 * Cin)
    conv = jnp.dot(lhs, wf_ref[...], preferred_element_type=jnp.float32)
    conv = (conv + bf_ref[...]).reshape(H, W, Cconv)

    # ---- 3x3 max pool, stride 1, pad 1 (reuse zero-padded input) -------------
    # Tap (kh, kw) reads original row i+kh-1 / col j+kw-1; positions falling
    # into the zero pad must act as -inf (PyTorch MaxPool2d semantics).  The
    # centre tap (kh=kw=1) is always valid, so the result is never -inf.
    rows = lax.broadcasted_iota(jnp.int32, (H, W, Cin), 0)
    cols = lax.broadcasted_iota(jnp.int32, (H, W, Cin), 1)
    neg_inf = jnp.float32(-jnp.inf)
    mx = None
    for kh in range(3):
        for kw in range(3):
            tap = x_ref[0, kh + 1:kh + 1 + H, kw + 1:kw + 1 + W, :]
            conds = []
            if kh == 0:
                conds.append(rows >= 1)
            elif kh == 2:
                conds.append(rows <= H - 2)
            if kw == 0:
                conds.append(cols >= 1)
            elif kw == 2:
                conds.append(cols <= W - 2)
            if conds:
                valid = functools.reduce(lambda a, b: a & b, conds)
                tap = jnp.where(valid, tap, neg_inf)
            mx = tap if mx is None else jnp.maximum(mx, tap)

    # ---- single store of every output channel --------------------------------
    out_ref[0] = jnp.concatenate([conv, mx], axis=-1)


def _fuse_params(w1, b1, w3, b3, w5, b5):
    """Fold the 1x1 / 3x3 / 5x5 conv weights into one 5x5 tap grid."""
    Cin, C0 = w1.shape
    C1 = w3.shape[-1]
    C2 = w5.shape[-1]
    Cconv = C0 + C1 + C2
    wf = jnp.zeros((5, 5, Cin, Cconv), jnp.float32)
    wf = wf.at[2, 2, :, 0:C0].set(w1)                # 1x1 at the centre tap
    wf = wf.at[1:4, 1:4, :, C0:C0 + C1].set(w3)      # 3x3 in the centre 3x3
    wf = wf.at[:, :, :, C0 + C1:].set(w5)            # 5x5 everywhere
    wf = wf.reshape(25 * Cin, Cconv)                 # K ordered (kh, kw, cin)
    bf = jnp.concatenate([b1, b3, b5], axis=-1)      # (1, Cconv)
    return wf, bf


def inception_block(x_nchw, params):
    """Pallas implementation of InceptionBlock.forward. Returns NCHW output."""
    w1, b1, w3, b3, w5, b5 = params
    x = jnp.transpose(x_nchw, (0, 2, 3, 1)).astype(jnp.float32)  # -> NHWC
    N, H, W, Cin = x.shape
    C0, C1, C2 = w1.shape[-1], w3.shape[-1], w5.shape[-1]
    Cconv = C0 + C1 + C2
    Ctot = Cconv + Cin

    wf, bf = _fuse_params(w1, b1, w3, b3, w5, b5)

    # One zero pad (width 2) serves the 3x3 (pad 1) and 5x5 (pad 2) convs and,
    # with in-kernel border masking, the maxpool as well.
    xc = jnp.pad(x, ((0, 0), (2, 2), (2, 2), (0, 0)))

    kernel = functools.partial(_inception_kernel, H=H, W=W)

    # TODO(synk): for production Inception sizes (e.g. 224x224x3 -> 227ch),
    # replace whole-image blocks with an H-strip grid axis + 2-row halo so the
    # double-buffered blocks stay within v7x's 64 MiB VMEM.
    out_nhwc = pl.pallas_call(
        kernel,
        out_shape=jax.ShapeDtypeStruct((N, H, W, Ctot), jnp.float32),
        grid_spec=pltpu.PrefetchScalarGridSpec(
            num_scalar_prefetch=0,
            grid=(N,),
            in_specs=[
                pl.BlockSpec((1, H + 4, W + 4, Cin), lambda n: (n, 0, 0, 0)),
                pl.BlockSpec((25 * Cin, Cconv), lambda n: (0, 0)),
                pl.BlockSpec((1, Cconv), lambda n: (0, 0)),
            ],
            out_specs=pl.BlockSpec((1, H, W, Ctot), lambda n: (n, 0, 0, 0)),
        ),
        compiler_params=pltpu.CompilerParams(
            dimension_semantics=("parallel",),
            vmem_limit_bytes=64 * 1024 * 1024),
    )(xc, wf, bf)

    return jnp.transpose(out_nhwc, (0, 3, 1, 2))  # -> NCHW


def init_params(key, in_channels, out_channels):
    """Deterministic parameter init (shapes match the nn.Conv2d layers)."""
    k1, k2, k3, k4, k5, k6 = jax.random.split(key, 6)
    C0, C1, C2 = out_channels[0], out_channels[1], out_channels[2]
    scale = 0.1
    w1 = scale * jax.random.normal(k1, (in_channels, C0), jnp.float32)
    b1 = scale * jax.random.normal(k2, (1, C0), jnp.float32)
    w3 = scale * jax.random.normal(k3, (3, 3, in_channels, C1), jnp.float32)
    b3 = scale * jax.random.normal(k4, (1, C1), jnp.float32)
    w5 = scale * jax.random.normal(k5, (5, 5, in_channels, C2), jnp.float32)
    b5 = scale * jax.random.normal(k6, (1, C2), jnp.float32)
    return (w1, b1, w3, b3, w5, b5)


def reference(x_nchw, params):
    """Pure-JAX reference (lax conv / reduce_window) for correctness check."""
    w1, b1, w3, b3, w5, b5 = params
    x = jnp.transpose(x_nchw, (0, 2, 3, 1)).astype(jnp.float32)  # NHWC
    dn = ('NHWC', 'HWIO', 'NHWC')

    def conv(x, w, b, pad):
        y = lax.conv_general_dilated(x, w, (1, 1), ((pad, pad), (pad, pad)),
                                     dimension_numbers=dn)
        return y + b.reshape(1, 1, 1, -1)

    br1 = conv(x, w1.reshape(1, 1, *w1.shape), b1, 0)
    br2 = conv(x, w3, b3, 1)
    br3 = conv(x, w5, b5, 2)
    br4 = lax.reduce_window(x, -jnp.inf, lax.max, (1, 3, 3, 1), (1, 1, 1, 1),
                            ((0, 0), (1, 1), (1, 1), (0, 0)))
    out = jnp.concatenate([br1, br2, br3, br4], axis=-1)
    return jnp.transpose(out, (0, 3, 1, 2))


if __name__ == "__main__":
    # small shapes consistent with the module: batch=2, in_channels=4, 16x16
    in_channels = 4
    out_channels = [8, 16, 8, 8]   # last entry unused, like the PyTorch module
    key = jax.random.PRNGKey(0)
    kx, kp = jax.random.split(key)

    x = jax.random.normal(kx, (2, in_channels, 16, 16), jnp.float32)  # NCHW
    params = init_params(kp, in_channels, out_channels)

    out = inception_block(x, params)
    out = jax.block_until_ready(out)

    ref = jax.block_until_ready(reference(x, params))
    assert out.shape == (2, out_channels[0] + out_channels[1] +
                         out_channels[2] + in_channels, 16, 16), out.shape
    assert jnp.allclose(out, ref, rtol=1e-4, atol=1e-4), \
        float(jnp.max(jnp.abs(out - ref)))

    print("KERNEL_OK")
</pallas_src>

<mosaic_0001>
module attributes {stable_mosaic.version = 11 : i64} {
  func.func @_inception_kernel(%arg0: i32, %arg1: memref<1x20x20x4xf32, #tpu.memory_space<vmem>>, %arg2: memref<100x32xf32, #tpu.memory_space<vmem>>, %arg3: memref<1x32xf32, #tpu.memory_space<vmem>>, %arg4: memref<1x16x16x36xf32, #tpu.memory_space<vmem>>) attributes {dimension_semantics = [#tpu.dimension_semantics<parallel>], iteration_bounds = array<i64: 2>, scalar_prefetch = 0 : i64, scratch_operands = 0 : i64, tpu.core_type = #tpu.core_type<tc>, window_params = [{transform_indices = @transform_0, window_bounds = array<i64: 1, 20, 20, 4>}, {pipeline_mode = #tpu.pipeline_mode<synchronous>, transform_indices = @transform_1, window_bounds = array<i64: 100, 32>}, {pipeline_mode = #tpu.pipeline_mode<synchronous>, transform_indices = @transform_2, window_bounds = array<i64: 1, 32>}, {transform_indices = @transform_3, window_bounds = array<i64: 1, 16, 16, 36>}]} {
    %c0 = arith.constant 0 : index
    %c0_0 = arith.constant 0 : index
    %c0_1 = arith.constant 0 : index
    %c0_2 = arith.constant 0 : index
    %0 = vector.load %arg1[%c0, %c0_0, %c0_1, %c0_2] : memref<1x20x20x4xf32, #tpu.memory_space<vmem>>, vector<1x16x16x4xf32>
    %1 = vector.shape_cast %0 : vector<1x16x16x4xf32> to vector<16x16x4xf32>
    %c0_3 = arith.constant 0 : index
    %c0_4 = arith.constant 0 : index
    %c1 = arith.constant 1 : index
    %c0_5 = arith.constant 0 : index
    %2 = vector.load %arg1[%c0_3, %c0_4, %c1, %c0_5] : memref<1x20x20x4xf32, #tpu.memory_space<vmem>>, vector<1x16x16x4xf32>
    %3 = vector.shape_cast %2 : vector<1x16x16x4xf32> to vector<16x16x4xf32>
    %c0_6 = arith.constant 0 : index
    %c0_7 = arith.constant 0 : index
    %c2 = arith.constant 2 : index
    %c0_8 = arith.constant 0 : index
    %4 = vector.load %arg1[%c0_6, %c0_7, %c2, %c0_8] : memref<1x20x20x4xf32, #tpu.memory_space<vmem>>, vector<1x16x16x4xf32>
    %5 = vector.shape_cast %4 : vector<1x16x16x4xf32> to vector<16x16x4xf32>
    %c0_9 = arith.constant 0 : index
    %c0_10 = arith.constant 0 : index
    %c3 = arith.constant 3 : index
    %c0_11 = arith.constant 0 : index
    %6 = vector.load %arg1[%c0_9, %c0_10, %c3, %c0_11] : memref<1x20x20x4xf32, #tpu.memory_space<vmem>>, vector<1x16x16x4xf32>
    %7 = vector.shape_cast %6 : vector<1x16x16x4xf32> to vector<16x16x4xf32>
    %c0_12 = arith.constant 0 : index
    %c0_13 = arith.constant 0 : index
    %c4 = arith.constant 4 : index
    %c0_14 = arith.constant 0 : index
    %8 = vector.load %arg1[%c0_12, %c0_13, %c4, %c0_14] : memref<1x20x20x4xf32, #tpu.memory_space<vmem>>, vector<1x16x16x4xf32>
    %9 = vector.shape_cast %8 : vector<1x16x16x4xf32> to vector<16x16x4xf32>
    %c0_15 = arith.constant 0 : index
    %c1_16 = arith.constant 1 : index
    %c0_17 = arith.constant 0 : index
    %c0_18 = arith.constant 0 : index
    %10 = vector.load %arg1[%c0_15, %c1_16, %c0_17, %c0_18] : memref<1x20x20x4xf32, #tpu.memory_space<vmem>>, vector<1x16x16x4xf32>
    %11 = vector.shape_cast %10 : vector<1x16x16x4xf32> to vector<16x16x4xf32>
    %c0_19 = arith.constant 0 : index
    %c1_20 = arith.constant 1 : index
    %c1_21 = arith.constant 1 : index
    %c0_22 = arith.constant 0 : index
    %12 = vector.load %arg1[%c0_19, %c1_20, %c1_21, %c0_22] : memref<1x20x20x4xf32, #tpu.memory_space<vmem>>, vector<1x16x16x4xf32>
    %13 = vector.shape_cast %12 : vector<1x16x16x4xf32> to vector<16x16x4xf32>
    %c0_23 = arith.constant 0 : index
    %c1_24 = arith.constant 1 : index
    %c2_25 = arith.constant 2 : index
    %c0_26 = arith.constant 0 : index
    %14 = vector.load %arg1[%c0_23, %c1_24, %c2_25, %c0_26] : memref<1x20x20x4xf32, #tpu.memory_space<vmem>>, vector<1x16x16x4xf32>
    %15 = vector.shape_cast %14 : vector<1x16x16x4xf32> to vector<16x16x4xf32>
    %c0_27 = arith.constant 0 : index
    %c1_28 = arith.constant 1 : index
    %c3_29 = arith.constant 3 : index
    %c0_30 = arith.constant 0 : index
    %16 = vector.load %arg1[%c0_27, %c1_28, %c3_29, %c0_30] : memref<1x20x20x4xf32, #tpu.memory_space<vmem>>, vector<1x16x16x4xf32>
    %17 = vector.shape_cast %16 : vector<1x16x16x4xf32> to vector<16x16x4xf32>
    %c0_31 = arith.constant 0 : index
    %c1_32 = arith.constant 1 : index
    %c4_33 = arith.constant 4 : index
    %c0_34 = arith.constant 0 : index
    %18 = vector.load %arg1[%c0_31, %c1_32, %c4_33, %c0_34] : memref<1x20x20x4xf32, #tpu.memory_space<vmem>>, vector<1x16x16x4xf32>
    %19 = vector.shape_cast %18 : vector<1x16x16x4xf32> to vector<16x16x4xf32>
    %c0_35 = arith.constant 0 : index
    %c2_36 = arith.constant 2 : index
    %c0_37 = arith.constant 0 : index
    %c0_38 = arith.constant 0 : index
    %20 = vector.load %arg1[%c0_35, %c2_36, %c0_37, %c0_38] : memref<1x20x20x4xf32, #tpu.memory_space<vmem>>, vector<1x16x16x4xf32>
    %21 = vector.shape_cast %20 : vector<1x16x16x4xf32> to vector<16x16x4xf32>
    %c0_39 = arith.constant 0 : index
    %c2_40 = arith.constant 2 : index
    %c1_41 = arith.constant 1 : index
    %c0_42 = arith.constant 0 : index
    %22 = vector.load %arg1[%c0_39, %c2_40, %c1_41, %c0_42] : memref<1x20x20x4xf32, #tpu.memory_space<vmem>>, vector<1x16x16x4xf32>
    %23 = vector.shape_cast %22 : vector<1x16x16x4xf32> to vector<16x16x4xf32>
    %c0_43 = arith.constant 0 : index
    %c2_44 = arith.constant 2 : index
    %c2_45 = arith.constant 2 : index
    %c0_46 = arith.constant 0 : index
    %24 = vector.load %arg1[%c0_43, %c2_44, %c2_45, %c0_46] : memref<1x20x20x4xf32, #tpu.memory_space<vmem>>, vector<1x16x16x4xf32>
    %25 = vector.shape_cast %24 : vector<1x16x16x4xf32> to vector<16x16x4xf32>
    %c0_47 = arith.constant 0 : index
    %c2_48 = arith.constant 2 : index
    %c3_49 = arith.constant 3 : index
    %c0_50 = arith.constant 0 : index
    %26 = vector.load %arg1[%c0_47, %c2_48, %c3_49, %c0_50] : memref<1x20x20x4xf32, #tpu.memory_space<vmem>>, vector<1x16x16x4xf32>
    %27 = vector.shape_cast %26 : vector<1x16x16x4xf32> to vector<16x16x4xf32>
    %c0_51 = arith.constant 0 : index
    %c2_52 = arith.constant 2 : index
    %c4_53 = arith.constant 4 : index
    %c0_54 = arith.constant 0 : index
    %28 = vector.load %arg1[%c0_51, %c2_52, %c4_53, %c0_54] : memref<1x20x20x4xf32, #tpu.memory_space<vmem>>, vector<1x16x16x4xf32>
    %29 = vector.shape_cast %28 : vector<1x16x16x4xf32> to vector<16x16x4xf32>
    %c0_55 = arith.constant 0 : index
    %c3_56 = arith.constant 3 : index
    %c0_57 = arith.constant 0 : index
    %c0_58 = arith.constant 0 : index
    %30 = vector.load %arg1[%c0_55, %c3_56, %c0_57, %c0_58] : memref<1x20x20x4xf32, #tpu.memory_space<vmem>>, vector<1x16x16x4xf32>
    %31 = vector.shape_cast %30 : vector<1x16x16x4xf32> to vector<16x16x4xf32>
    %c0_59 = arith.constant 0 : index
    %c3_60 = arith.constant 3 : index
    %c1_61 = arith.constant 1 : index
    %c0_62 = arith.constant 0 : index
    %32 = vector.load %arg1[%c0_59, %c3_60, %c1_61, %c0_62] : memref<1x20x20x4xf32, #tpu.memory_space<vmem>>, vector<1x16x16x4xf32>
    %33 = vector.shape_cast %32 : vector<1x16x16x4xf32> to vector<16x16x4xf32>
    %c0_63 = arith.constant 0 : index
    %c3_64 = arith.constant 3 : index
    %c2_65 = arith.constant 2 : index
    %c0_66 = arith.constant 0 : index
    %34 = vector.load %arg1[%c0_63, %c3_64, %c2_65, %c0_66] : memref<1x20x20x4xf32, #tpu.memory_space<vmem>>, vector<1x16x16x4xf32>
    %35 = vector.shape_cast %34 : vector<1x16x16x4xf32> to vector<16x16x4xf32>
    %c0_67 = arith.constant 0 : index
    %c3_68 = arith.constant 3 : index
    %c3_69 = arith.constant 3 : index
    %c0_70 = arith.constant 0 : index
    %36 = vector.load %arg1[%c0_67, %c3_68, %c3_69, %c0_70] : memref<1x20x20x4xf32, #tpu.memory_space<vmem>>, vector<1x16x16x4xf32>
    %37 = vector.shape_cast %36 : vector<1x16x16x4xf32> to vector<16x16x4xf32>
    %c0_71 = arith.constant 0 : index
    %c3_72 = arith.constant 3 : index
    %c4_73 = arith.constant 4 : index
    %c0_74 = arith.constant 0 : index
    %38 = vector.load %arg1[%c0_71, %c3_72, %c4_73, %c0_74] : memref<1x20x20x4xf32, #tpu.memory_space<vmem>>, vector<1x16x16x4xf32>
    %39 = vector.shape_cast %38 : vector<1x16x16x4xf32> to vector<16x16x4xf32>
    %c0_75 = arith.constant 0 : index
    %c4_76 = arith.constant 4 : index
    %c0_77 = arith.constant 0 : index
    %c0_78 = arith.constant 0 : index
    %40 = vector.load %arg1[%c0_75, %c4_76, %c0_77, %c0_78] : memref<1x20x20x4xf32, #tpu.memory_space<vmem>>, vector<1x16x16x4xf32>
    %41 = vector.shape_cast %40 : vector<1x16x16x4xf32> to vector<16x16x4xf32>
    %c0_79 = arith.constant 0 : index
    %c4_80 = arith.constant 4 : index
    %c1_81 = arith.constant 1 : index
    %c0_82 = arith.constant 0 : index
    %42 = vector.load %arg1[%c0_79, %c4_80, %c1_81, %c0_82] : memref<1x20x20x4xf32, #tpu.memory_space<vmem>>, vector<1x16x16x4xf32>
    %43 = vector.shape_cast %42 : vector<1x16x16x4xf32> to vector<16x16x4xf32>
    %c0_83 = arith.constant 0 : index
    %c4_84 = arith.constant 4 : index
    %c2_85 = arith.constant 2 : index
    %c0_86 = arith.constant 0 : index
    %44 = vector.load %arg1[%c0_83, %c4_84, %c2_85, %c0_86] : memref<1x20x20x4xf32, #tpu.memory_space<vmem>>, vector<1x16x16x4xf32>
    %45 = vector.shape_cast %44 : vector<1x16x16x4xf32> to vector<16x16x4xf32>
    %c0_87 = arith.constant 0 : index
    %c4_88 = arith.constant 4 : index
    %c3_89 = arith.constant 3 : index
    %c0_90 = arith.constant 0 : index
    %46 = vector.load %arg1[%c0_87, %c4_88, %c3_89, %c0_90] : memref<1x20x20x4xf32, #tpu.memory_space<vmem>>, vector<1x16x16x4xf32>
    %47 = vector.shape_cast %46 : vector<1x16x16x4xf32> to vector<16x16x4xf32>
    %c0_91 = arith.constant 0 : index
    %c4_92 = arith.constant 4 : index
    %c4_93 = arith.constant 4 : index
    %c0_94 = arith.constant 0 : index
    %48 = vector.load %arg1[%c0_91, %c4_92, %c4_93, %c0_94] : memref<1x20x20x4xf32, #tpu.memory_space<vmem>>, vector<1x16x16x4xf32>
    %49 = vector.shape_cast %48 : vector<1x16x16x4xf32> to vector<16x16x4xf32>
    %50 = tpu.concatenate %1, %3, %5, %7, %9, %11, %13, %15, %17, %19, %21, %23, %25, %27, %29, %31 in 2 : vector<16x16x4xf32>, vector<16x16x4xf32>, vector<16x16x4xf32>, vector<16x16x4xf32>, vector<16x16x4xf32>, vector<16x16x4xf32>, vector<16x16x4xf32>, vector<16x16x4xf32>, vector<16x16x4xf32>, vector<16x16x4xf32>, vector<16x16x4xf32>, vector<16x16x4xf32>, vector<16x16x4xf32>, vector<16x16x4xf32>, vector<16x16x4xf32>, vector<16x16x4xf32> -> vector<16x16x64xf32>
    %51 = tpu.concatenate %33, %35, %37, %39, %41, %43, %45, %47, %49 in 2 : vector<16x16x4xf32>, vector<16x16x4xf32>, vector<16x16x4xf32>, vector<16x16x4xf32>, vector<16x16x4xf32>, vector<16x16x4xf32>, vector<16x16x4xf32>, vector<16x16x4xf32>, vector<16x16x4xf32> -> vector<16x16x36xf32>
    %52 = tpu.concatenate %50, %51 in 2 : vector<16x16x64xf32>, vector<16x16x36xf32> -> vector<16x16x100xf32>
    %53 = vector.shape_cast %52 : vector<16x16x100xf32> to vector<256x100xf32>
    %c0_95 = arith.constant 0 : index
    %c0_96 = arith.constant 0 : index
    %54 = vector.load %arg2[%c0_95, %c0_96] : memref<100x32xf32, #tpu.memory_space<vmem>>, vector<100x32xf32>
    %cst = arith.constant dense<0.000000e+00> : vector<256x32xf32>
    %55 = tpu.matmul %53, %54, %cst {dimension_numbers = #tpu.dot_dimension_numbers<[1], [0], [0], [1], [0, 0, 1, 1], [], []>} : vector<256x100xf32>, vector<100x32xf32>, vector<256x32xf32> -> vector<256x32xf32>
    %c0_97 = arith.constant 0 : index
    %c0_98 = arith.constant 0 : index
    %56 = vector.load %arg3[%c0_97, %c0_98] : memref<1x32xf32, #tpu.memory_space<vmem>>, vector<1x32xf32>
    %57 = vector.broadcast %56 : vector<1x32xf32> to vector<256x32xf32>
    %58 = arith.addf %55, %57 : vector<256x32xf32>
    %59 = vector.shape_cast %58 : vector<256x32xf32> to vector<16x16x32xf32>
    %60 = tpu.iota {dimensions = array<i32: 0>} : vector<16x16x4xi32>
    %61 = tpu.iota {dimensions = array<i32: 1>} : vector<16x16x4xi32>
    %c0_99 = arith.constant 0 : index
    %c1_100 = arith.constant 1 : index
    %c1_101 = arith.constant 1 : index
    %c0_102 = arith.constant 0 : index
    %62 = vector.load %arg1[%c0_99, %c1_100, %c1_101, %c0_102] : memref<1x20x20x4xf32, #tpu.memory_space<vmem>>, vector<1x16x16x4xf32>
    %63 = vector.shape_cast %62 : vector<1x16x16x4xf32> to vector<16x16x4xf32>
    %c1_i32 = arith.constant 1 : i32
    %64 = vector.broadcast %c1_i32 : i32 to vector<16x16x4xi32>
    %65 = arith.cmpi sge, %60, %64 : vector<16x16x4xi32>
    %c1_i32_103 = arith.constant 1 : i32
    %66 = vector.broadcast %c1_i32_103 : i32 to vector<16x16x4xi32>
    %67 = arith.cmpi sge, %61, %66 : vector<16x16x4xi32>
    %68 = arith.andi %65, %67 : vector<16x16x4xi1>
    %cst_104 = arith.constant 0xFF800000 : f32
    %69 = vector.broadcast %cst_104 : f32 to vector<16x16x4xf32>
    %70 = arith.select %68, %63, %69 : vector<16x16x4xi1>, vector<16x16x4xf32>
    %c0_105 = arith.constant 0 : index
    %c1_106 = arith.constant 1 : index
    %c2_107 = arith.constant 2 : index
    %c0_108 = arith.constant 0 : index
    %71 = vector.load %arg1[%c0_105, %c1_106, %c2_107, %c0_108] : memref<1x20x20x4xf32, #tpu.memory_space<vmem>>, vector<1x16x16x4xf32>
    %72 = vector.shape_cast %71 : vector<1x16x16x4xf32> to vector<16x16x4xf32>
    %c1_i32_109 = arith.constant 1 : i32
    %73 = vector.broadcast %c1_i32_109 : i32 to vector<16x16x4xi32>
    %74 = arith.cmpi sge, %60, %73 : vector<16x16x4xi32>
    %cst_110 = arith.constant 0xFF800000 : f32
    %75 = vector.broadcast %cst_110 : f32 to vector<16x16x4xf32>
    %76 = arith.select %74, %72, %75 : vector<16x16x4xi1>, vector<16x16x4xf32>
    %77 = arith.maximumf %70, %76 : vector<16x16x4xf32>
    %c0_111 = arith.constant 0 : index
    %c1_112 = arith.constant 1 : index
    %c3_113 = arith.constant 3 : index
    %c0_114 = arith.constant 0 : index
    %78 = vector.load %arg1[%c0_111, %c1_112, %c3_113, %c0_114] : memref<1x20x20x4xf32, #tpu.memory_space<vmem>>, vector<1x16x16x4xf32>
    %79 = vector.shape_cast %78 : vector<1x16x16x4xf32> to vector<16x16x4xf32>
    %c1_i32_115 = arith.constant 1 : i32
    %80 = vector.broadcast %c1_i32_115 : i32 to vector<16x16x4xi32>
    %81 = arith.cmpi sge, %60, %80 : vector<16x16x4xi32>
    %c14_i32 = arith.constant 14 : i32
    %82 = vector.broadcast %c14_i32 : i32 to vector<16x16x4xi32>
    %83 = arith.cmpi sle, %61, %82 : vector<16x16x4xi32>
    %84 = arith.andi %81, %83 : vector<16x16x4xi1>
    %cst_116 = arith.constant 0xFF800000 : f32
    %85 = vector.broadcast %cst_116 : f32 to vector<16x16x4xf32>
    %86 = arith.select %84, %79, %85 : vector<16x16x4xi1>, vector<16x16x4xf32>
    %87 = arith.maximumf %77, %86 : vector<16x16x4xf32>
    %c0_117 = arith.constant 0 : index
    %c2_118 = arith.constant 2 : index
    %c1_119 = arith.constant 1 : index
    %c0_120 = arith.constant 0 : index
    %88 = vector.load %arg1[%c0_117, %c2_118, %c1_119, %c0_120] : memref<1x20x20x4xf32, #tpu.memory_space<vmem>>, vector<1x16x16x4xf32>
    %89 = vector.shape_cast %88 : vector<1x16x16x4xf32> to vector<16x16x4xf32>
    %c1_i32_121 = arith.constant 1 : i32
    %90 = vector.broadcast %c1_i32_121 : i32 to vector<16x16x4xi32>
    %91 = arith.cmpi sge, %61, %90 : vector<16x16x4xi32>
    %cst_122 = arith.constant 0xFF800000 : f32
    %92 = vector.broadcast %cst_122 : f32 to vector<16x16x4xf32>
    %93 = arith.select %91, %89, %92 : vector<16x16x4xi1>, vector<16x16x4xf32>
    %94 = arith.maximumf %87, %93 : vector<16x16x4xf32>
    %c0_123 = arith.constant 0 : index
    %c2_124 = arith.constant 2 : index
    %c2_125 = arith.constant 2 : index
    %c0_126 = arith.constant 0 : index
    %95 = vector.load %arg1[%c0_123, %c2_124, %c2_125, %c0_126] : memref<1x20x20x4xf32, #tpu.memory_space<vmem>>, vector<1x16x16x4xf32>
    %96 = vector.shape_cast %95 : vector<1x16x16x4xf32> to vector<16x16x4xf32>
    %97 = arith.maximumf %94, %96 : vector<16x16x4xf32>
    %c0_127 = arith.constant 0 : index
    %c2_128 = arith.constant 2 : index
    %c3_129 = arith.constant 3 : index
    %c0_130 = arith.constant 0 : index
    %98 = vector.load %arg1[%c0_127, %c2_128, %c3_129, %c0_130] : memref<1x20x20x4xf32, #tpu.memory_space<vmem>>, vector<1x16x16x4xf32>
    %99 = vector.shape_cast %98 : vector<1x16x16x4xf32> to vector<16x16x4xf32>
    %c14_i32_131 = arith.constant 14 : i32
    %100 = vector.broadcast %c14_i32_131 : i32 to vector<16x16x4xi32>
    %101 = arith.cmpi sle, %61, %100 : vector<16x16x4xi32>
    %cst_132 = arith.constant 0xFF800000 : f32
    %102 = vector.broadcast %cst_132 : f32 to vector<16x16x4xf32>
    %103 = arith.select %101, %99, %102 : vector<16x16x4xi1>, vector<16x16x4xf32>
    %104 = arith.maximumf %97, %103 : vector<16x16x4xf32>
    %c0_133 = arith.constant 0 : index
    %c3_134 = arith.constant 3 : index
    %c1_135 = arith.constant 1 : index
    %c0_136 = arith.constant 0 : index
    %105 = vector.load %arg1[%c0_133, %c3_134, %c1_135, %c0_136] : memref<1x20x20x4xf32, #tpu.memory_space<vmem>>, vector<1x16x16x4xf32>
    %106 = vector.shape_cast %105 : vector<1x16x16x4xf32> to vector<16x16x4xf32>
    %c14_i32_137 = arith.constant 14 : i32
    %107 = vector.broadcast %c14_i32_137 : i32 to vector<16x16x4xi32>
    %108 = arith.cmpi sle, %60, %107 : vector<16x16x4xi32>
    %c1_i32_138 = arith.constant 1 : i32
    %109 = vector.broadcast %c1_i32_138 : i32 to vector<16x16x4xi32>
    %110 = arith.cmpi sge, %61, %109 : vector<16x16x4xi32>
    %111 = arith.andi %108, %110 : vector<16x16x4xi1>
    %cst_139 = arith.constant 0xFF800000 : f32
    %112 = vector.broadcast %cst_139 : f32 to vector<16x16x4xf32>
    %113 = arith.select %111, %106, %112 : vector<16x16x4xi1>, vector<16x16x4xf32>
    %114 = arith.maximumf %104, %113 : vector<16x16x4xf32>
    %c0_140 = arith.constant 0 : index
    %c3_141 = arith.constant 3 : index
    %c2_142 = arith.constant 2 : index
    %c0_143 = arith.constant 0 : index
    %115 = vector.load %arg1[%c0_140, %c3_141, %c2_142, %c0_143] : memref<1x20x20x4xf32, #tpu.memory_space<vmem>>, vector<1x16x16x4xf32>
    %116 = vector.shape_cast %115 : vector<1x16x16x4xf32> to vector<16x16x4xf32>
    %c14_i32_144 = arith.constant 14 : i32
    %117 = vector.broadcast %c14_i32_144 : i32 to vector<16x16x4xi32>
    %118 = arith.cmpi sle, %60, %117 : vector<16x16x4xi32>
    %cst_145 = arith.constant 0xFF800000 : f32
    %119 = vector.broadcast %cst_145 : f32 to vector<16x16x4xf32>
    %120 = arith.select %118, %116, %119 : vector<16x16x4xi1>, vector<16x16x4xf32>
    %121 = arith.maximumf %114, %120 : vector<16x16x4xf32>
    %c0_146 = arith.constant 0 : index
    %c3_147 = arith.constant 3 : index
    %c3_148 = arith.constant 3 : index
    %c0_149 = arith.constant 0 : index
    %122 = vector.load %arg1[%c0_146, %c3_147, %c3_148, %c0_149] : memref<1x20x20x4xf32, #tpu.memory_space<vmem>>, vector<1x16x16x4xf32>
    %123 = vector.shape_cast %122 : vector<1x16x16x4xf32> to vector<16x16x4xf32>
    %c14_i32_150 = arith.constant 14 : i32
    %124 = vector.broadcast %c14_i32_150 : i32 to vector<16x16x4xi32>
    %125 = arith.cmpi sle, %60, %124 : vector<16x16x4xi32>
    %c14_i32_151 = arith.constant 14 : i32
    %126 = vector.broadcast %c14_i32_151 : i32 to vector<16x16x4xi32>
    %127 = arith.cmpi sle, %61, %126 : vector<16x16x4xi32>
    %128 = arith.andi %125, %127 : vector<16x16x4xi1>
    %cst_152 = arith.constant 0xFF800000 : f32
    %129 = vector.broadcast %cst_152 : f32 to vector<16x16x4xf32>
    %130 = arith.select %128, %123, %129 : vector<16x16x4xi1>, vector<16x16x4xf32>
    %131 = arith.maximumf %121, %130 : vector<16x16x4xf32>
    %132 = tpu.concatenate %59, %131 in 2 : vector<16x16x32xf32>, vector<16x16x4xf32> -> vector<16x16x36xf32>
    %c0_153 = arith.constant 0 : index
    %c0_154 = arith.constant 0 : index
    %c0_155 = arith.constant 0 : index
    %c0_156 = arith.constant 0 : index
    %133 = vector.load %arg4[%c0_153, %c0_154, %c0_155, %c0_156] : memref<1x16x16x36xf32, #tpu.memory_space<vmem>>, vector<1x16x16x36xf32>
    %134 = vector.shape_cast %133 : vector<1x16x16x36xf32> to vector<16x16x36xf32>
    %135 = vector.shape_cast %132 : vector<16x16x36xf32> to vector<1x16x16x36xf32>
    tpu.vector_store %arg4[%c0_153, %c0_154, %c0_155, %c0_156], %135 {strides = array<i32>} : memref<1x16x16x36xf32, #tpu.memory_space<vmem>>, vector<1x16x16x36xf32>,
    return
  }
  func.func @transform_0(%arg0: i32) -> (i32, i32, i32, i32) {
    %c0_i32 = arith.constant 0 : i32
    %c0_i32_0 = arith.constant 0 : i32
    %c0_i32_1 = arith.constant 0 : i32
    %c0_i32_2 = arith.constant 0 : i32
    return %arg0, %c0_i32, %c0_i32_0, %c0_i32_1 : i32, i32, i32, i32
  }
  func.func @transform_1(%arg0: i32) -> (i32, i32) {
    %c0_i32 = arith.constant 0 : i32
    %c0_i32_0 = arith.constant 0 : i32
    %c0_i32_1 = arith.constant 0 : i32
    return %c0_i32, %c0_i32_0 : i32, i32
  }
  func.func @transform_2(%arg0: i32) -> (i32, i32) {
    %c0_i32 = arith.constant 0 : i32
    %c0_i32_0 = arith.constant 0 : i32
    %c0_i32_1 = arith.constant 0 : i32
    return %c0_i32, %c0_i32_0 : i32, i32
  }
  func.func @transform_3(%arg0: i32) -> (i32, i32, i32, i32) {
    %c0_i32 = arith.constant 0 : i32
    %c0_i32_0 = arith.constant 0 : i32
    %c0_i32_1 = arith.constant 0 : i32
    %c0_i32_2 = arith.constant 0 : i32
    return %arg0, %c0_i32, %c0_i32_0, %c0_i32_1 : i32, i32, i32, i32
  }
}

</mosaic_0001>

<llo_original>
// kernel: tpu_custom_call.1
$region0: #{tpu_custom_call.1}
  #allocation0 [shape = 'u32[]', space=smem, size = 0x4, offset = 0x4, fixed_abs, tag = 'smem constant byte address 0x4 - core index']
  #allocation1 [shape = 'u32[144,128]{1,0:T(1,128)}', space=vmem, size = 0x12000, scoped, tag = 'internal scratch']
  %s0 = inlined_call_operand.vmem [shape: f32[2,20,20,4], index: 0, kind: input, shape index: {}]
  %s1 = inlined_call_operand.vmem [shape: f32[100,32], index: 1, kind: input, shape index: {}]
  %s2 = inlined_call_operand.vmem [shape: f32[1,32], index: 2, kind: input, shape index: {}]
  %s3 = inlined_call_operand.hbm [shape: f32[2,16,16,36], index: 3, kind: output, shape index: {}]
  %s4 = sld [smem:[#allocation0]]
  $region45: #{tpu_custom_call.1} parent=0
    _
  %s6 = ssub.s32 1, %s4
  %s7 = scalar_select 0, %s6, %s4
  $region1: #{tpu_custom_call.1} parent=0
    #allocation2 [shape = 'u8[262144]{0}', space=vmem, size = 0x40000, scoped, tag = 'output window, operand 0']
    #allocation3 [shape = 's32[2]{0}', space=sflag, size = 0x8, scoped, tag = 'scoped memory for tpu_custom_call.1']
    %8 = vsyncpa [#allocation3], 0
    %s9 = scalar_lea.sflag [#allocation3], 1
    %10 = vsyncpa %s9, 0
    loop: start=0, step=1, limit=4
    $region2: #{tpu_custom_call.1} parent=1 // loop_pre_header
      _
    $region3: #{tpu_custom_call.1} parent=1 // loop_header
      %s12 = sphi 0, %s16
      %p13 = scmp.ge.s32.totalorder %s12, 4
      %s22 = sphi 0, %s24
      %s25 = sphi 0, %s22
      %s26 = sphi 0, %s25
      %s42 = sphi 0, %s26
      %s46 = sphi 0, %s46
      %s48 = sphi 0, %s46
      %s49 = sphi 0, %s48
      %s63 = sphi 0, %s49
      %s67 = sphi 0, %s67
      %s69 = sphi 0, %s67
      %s70 = sphi 0, %s69
      %s84 = sphi 0, %s70
      %s90 = sphi 0, %s92
      %s93 = sphi 0, %s90
      %s94 = sphi 0, %s93
      %s110 = sphi 0, %s94
    $region4: #{tpu_custom_call.1} parent=1 // loop_header_branch
      %15 = sbr.rel (%p13) target = $region8
    $region5: #{tpu_custom_call.1} parent=1 // loop_body
      %s17 = ssub.s32 %s12, 1
      %s18 = ssub.s32 %s12, 2
      %s19 = sadd.s32 %s12, 1
      %s20 = ssub.s32 %s12, %s19
      %p21 = scmp.eq.s32.totalorder %s20, 0
      %s23 = sadd.s32 %s22, 1
      %s24 = scalar_select %p21, %s22, %s23
      %p27 = pneg %p21
      %p28 = scmp.eq.s32.totalorder %s12, 1
      %p29 = por %p27, %p28
      %p30 = scmp.ne.s32.totalorder %s22, %s25
      %p31 = scmp.eq.s32.totalorder %s12, 0
      %p32 = por %p30, %p31
      %p33 = scmp.ne.s32.totalorder %s22, %s25
      %p34 = scmp.eq.s32.totalorder %s17, 1
      %p35 = por %p33, %p34
      %p36 = scmp.ne.s32.totalorder %s25, %s26
      %p37 = scmp.eq.s32.totalorder %s17, 0
      %p38 = por %p36, %p37
      %p39 = scmp.ne.s32.totalorder %s25, %s26
      %p40 = scmp.eq.s32.totalorder %s18, 1
      %p41 = por %p39, %p40
      %p43 = scmp.ne.s32.totalorder %s26, %s42
      %p44 = scmp.eq.s32.totalorder %s18, 0
      %p45 = por %p43, %p44
      %s47 = sadd.s32 %s46, 1
      %p50 = scmp.eq.s32.totalorder %s12, 1
      %p51 = scmp.ne.s32.totalorder %s46, %s48
      %p52 = scmp.eq.s32.totalorder %s12, 0
      %p53 = por %p51, %p52
      %p54 = scmp.ne.s32.totalorder %s46, %s48
      %p55 = scmp.eq.s32.totalorder %s17, 1
      %p56 = por %p54, %p55
      %p57 = scmp.ne.s32.totalorder %s48, %s49
      %p58 = scmp.eq.s32.totalorder %s17, 0
      %p59 = por %p57, %p58
      %p60 = scmp.ne.s32.totalorder %s48, %s49
      %p61 = scmp.eq.s32.totalorder %s18, 1
      %p62 = por %p60, %p61
      %p64 = scmp.ne.s32.totalorder %s49, %s63
      %p65 = scmp.eq.s32.totalorder %s18, 0
      %p66 = por %p64, %p65
      %s68 = sadd.s32 %s67, 1
      %p71 = scmp.eq.s32.totalorder %s12, 1
      %p72 = scmp.ne.s32.totalorder %s67, %s69
      %p73 = scmp.eq.s32.totalorder %s12, 0
      %p74 = por %p72, %p73
      %p75 = scmp.ne.s32.totalorder %s67, %s69
      %p76 = scmp.eq.s32.totalorder %s17, 1
      %p77 = por %p75, %p76
      %p78 = scmp.ne.s32.totalorder %s69, %s70
      %p79 = scmp.eq.s32.totalorder %s17, 0
      %p80 = por %p78, %p79
      %p81 = scmp.ne.s32.totalorder %s69, %s70
      %p82 = scmp.eq.s32.totalorder %s18, 1
      %p83 = por %p81, %p82
      %p85 = scmp.ne.s32.totalorder %s70, %s84
      %p86 = scmp.eq.s32.totalorder %s18, 0
      %p87 = por %p85, %p86
      %s88 = ssub.s32 %s12, %s19
      %p89 = scmp.eq.s32.totalorder %s88, 0
      %s91 = sadd.s32 %s90, 1
      %s92 = scalar_select %p89, %s90, %s91
      %p95 = pneg %p89
      %p96 = scmp.eq.s32.totalorder %s12, 1
      %p97 = por %p95, %p96
      %p98 = scmp.ne.s32.totalorder %s90, %s93
      %p99 = scmp.eq.s32.totalorder %s12, 0
      %p100 = por %p98, %p99
      %p101 = scmp.ne.s32.totalorder %s90, %s93
      %p102 = scmp.eq.s32.totalorder %s17, 1
      %p103 = por %p101, %p102
      %p104 = scmp.ne.s32.totalorder %s93, %s94
      %p105 = scmp.eq.s32.totalorder %s17, 0
      %p106 = por %p104, %p105
      %p107 = scmp.ne.s32.totalorder %s93, %s94
      %p108 = scmp.eq.s32.totalorder %s18, 1
      %p109 = por %p107, %p108
      %p111 = scmp.ne.s32.totalorder %s94, %s110
      %p112 = scmp.eq.s32.totalorder %s18, 0
      %p113 = por %p111, %p112
      %p114 = scmp.le.s32.totalorder 1, %s12
      %p115 = scmp.lt.s32.totalorder %s12, 3
      %p116 = pnand %p114, %p115
      %p117 = pneg %p116
      // Predicated region
      $region9: #{tpu_custom_call.1} parent=5 // pred_check
        _
      $region10: #{tpu_custom_call.1} parent=5 // pred_check_branch
        %119 = sbr.rel (%p116) target = $region12
      $region11: #{tpu_custom_call.1} parent=5 // pred_region
        %s120 = ssub.s32 %s12, 1
        // Predicated region
        $region13: #{tpu_custom_call.1} parent=11 // pred_check
          %p121 = pneg %p59
        $region14: #{tpu_custom_call.1} parent=11 // pred_check_branch
          %123 = sbr.rel (%p121) target = $region16
        $region15: #{tpu_custom_call.1} parent=11 // pred_region
          _
        $region16: #{tpu_custom_call.1} parent=11 // pred_fallthru
          _
        // Predicated region
        $region17: #{tpu_custom_call.1} parent=11 // pred_check
          %p124 = pneg %p80
        $region18: #{tpu_custom_call.1} parent=11 // pred_check_branch
          %126 = sbr.rel (%p124) target = $region20
        $region19: #{tpu_custom_call.1} parent=11 // pred_region
          _
        $region20: #{tpu_custom_call.1} parent=11 // pred_fallthru
          _
      $region12: #{tpu_custom_call.1} parent=5 // pred_fallthru
        _
      %p127 = scmp.lt.s32.totalorder %s12, 2
      // Predicated region
      $region21: #{tpu_custom_call.1} parent=5 // pred_check
        %p128 = pneg %p127
      $region22: #{tpu_custom_call.1} parent=5 // pred_check_branch
        %130 = sbr.rel (%p128) target = $region24
      $region23: #{tpu_custom_call.1} parent=5 // pred_region
        // Predicated region
        $region25: #{tpu_custom_call.1} parent=23 // pred_check
          %p131 = pneg %p32
        $region26: #{tpu_custom_call.1} parent=23 // pred_check_branch
          %133 = sbr.rel (%p131) target = $region28
        $region27: #{tpu_custom_call.1} parent=23 // pred_region
          %p134 = scmp.lt.s32.totalorder %s12, 1
          %s135 = scalar_select %p134, %s12, 1
          %s136 = smul.addr %s135, 60
          %s137 = smul.addr %s136, 8
          %s138 = scalar_lea.vmem %s0, %s137
        $region28: #{tpu_custom_call.1} parent=23 // pred_fallthru
          _
      $region24: #{tpu_custom_call.1} parent=5 // pred_fallthru
        _
      %p139 = scmp.le.s32.totalorder 1, %s12
      %p140 = scmp.lt.s32.totalorder %s12, 3
      %p141 = pnand %p139, %p140
      %p142 = pneg %p141
      // Predicated region
      $region29: #{tpu_custom_call.1} parent=5 // pred_check
        _
      $region30: #{tpu_custom_call.1} parent=5 // pred_check_branch
        %144 = sbr.rel (%p141) target = $region32
      $region31: #{tpu_custom_call.1} parent=5 // pred_region
        %s145 = ssub.s32 %s12, 1
        %p146 = scmp.lt.s32.totalorder %s17, 1
        %s147 = scalar_select %p146, %s17, 1
        %s148 = smul.addr %s147, 60
        %s149 = smul.addr %s148, 8
        %s150 = scalar_lea.vmem %s0, %s149
        %p151 = pneg %p38
        %p152 = pneg %p35
        %p153 = pneg %p59
        %p154 = pneg %p56
        %p155 = pneg %p80
        %p156 = pneg %p77
        %p157 = pneg %p106
        %p158 = pneg %p103
        %s159 = sand.u32 %s93, 1
        %s160 = scalar_lea.sflag [#allocation3], %s159
        %s161 = sand.u32 %s93, 1
        %s162 = smul.addr %s161, 256
        %s163 = scalar_lea.vmem [#allocation2], %s162
        %p164 = scmp.lt.s32.totalorder %s17, 1
        %s165 = scalar_select %p164, %s17, 1
        %s166 = smul.addr %s165, 60
        %s167 = smul.addr %s166, 8
        %s168 = scalar_lea.vmem %s0, %s167
        %v169 = vld [vmem:[%s168] sm:$0xff]
        %v170 = vld [vmem:[%s168 + $0x8] sm:$0xff]
        %v171 = vld [vmem:[%s168 + $0x18] sm:$0xff]
        %v172 = vld [vmem:[%s168 + $0x20] sm:$0xff]
        %v173 = vld [vmem:[%s168 + $0x30] sm:$0xff]
        %v174 = vld [vmem:[%s168 + $0x38] sm:$0xff]
        %v175 = vld [vmem:[%s168 + $0x48] sm:$0xff]
        %v176 = vld [vmem:[%s168 + $0x50] sm:$0xff]
        %v177 = vld [vmem:[%s168 + $0x60] sm:$0xff]
        %v178 = vld [vmem:[%s168 + $0x68] sm:$0xff]
        %v179 = vld [vmem:[%s168 + $0x78] sm:$0xff]
        %v180 = vld [vmem:[%s168 + $0x80] sm:$0xff]
        %v181 = vld [vmem:[%s168 + $0x90] sm:$0xff]
        %v182 = vld [vmem:[%s168 + $0x98] sm:$0xff]
        %v183 = vld [vmem:[%s168 + $0xa8] sm:$0xff]
        %v184 = vld [vmem:[%s168 + $0xb0] sm:$0xff]
        %v185 = vld [vmem:[%s168 + $0xc0] sm:$0xff]
        %v186 = vld [vmem:[%s168 + $0xc8] sm:$0xff]
        %v187 = vld [vmem:[%s168 + $0xd8] sm:$0xff]
        %v188 = vld [vmem:[%s168 + $0xe0] sm:$0xff]
        %v189 = vld [vmem:[%s168 + $0xf0] sm:$0xff]
        %v190 = vld [vmem:[%s168 + $0xf8] sm:$0xff]
        %v191 = vld [vmem:[%s168 + $0x108] sm:$0xff]
        %v192 = vld [vmem:[%s168 + $0x110] sm:$0xff]
        %v193 = vld [vmem:[%s168 + $0x120] sm:$0xff]
        %v194 = vld [vmem:[%s168 + $0x128] sm:$0xff]
        %v195 = vld [vmem:[%s168 + $0x138] sm:$0xff]
        %v196 = vld [vmem:[%s168 + $0x140] sm:$0xff]
        %v197 = vld [vmem:[%s168 + $0x150] sm:$0xff]
        %v198 = vld [vmem:[%s168 + $0x158] sm:$0xff]
        %v199 = vld [vmem:[%s168 + $0x168] sm:$0xff]
        %v200 = vld [vmem:[%s168 + $0x170] sm:$0xff]
        %v201 = vld [vmem:[%s168 + $0x1] sm:$0xff]
        %v202 = vld [vmem:[%s168 + $0x9] sm:$0xff]
        %v203 = vld [vmem:[%s168 + $0x19] sm:$0xff]
        %v204 = vld [vmem:[%s168 + $0x21] sm:$0xff]
        %v205 = vld [vmem:[%s168 + $0x31] sm:$0xff]
        %v206 = vld [vmem:[%s168 + $0x39] sm:$0xff]
        %v207 = vld [vmem:[%s168 + $0x49] sm:$0xff]
        %v208 = vld [vmem:[%s168 + $0x51] sm:$0xff]
        %v209 = vld [vmem:[%s168 + $0x61] sm:$0xff]
        %v210 = vld [vmem:[%s168 + $0x69] sm:$0xff]
        %v211 = vld [vmem:[%s168 + $0x79] sm:$0xff]
        %v212 = vld [vmem:[%s168 + $0x81] sm:$0xff]
        %v213 = vld [vmem:[%s168 + $0x91] sm:$0xff]
        %v214 = vld [vmem:[%s168 + $0x99] sm:$0xff]
        %v215 = vld [vmem:[%s168 + $0xa9] sm:$0xff]
        %v216 = vld [vmem:[%s168 + $0xb1] sm:$0xff]
        %v217 = vld [vmem:[%s168 + $0xc1] sm:$0xff]
        %v218 = vld [vmem:[%s168 + $0xc9] sm:$0xff]
        %v219 = vld [vmem:[%s168 + $0xd9] sm:$0xff]
        %v220 = vld [vmem:[%s168 + $0xe1] sm:$0xff]
        %v221 = vld [vmem:[%s168 + $0xf1] sm:$0xff]
        %v222 = vld [vmem:[%s168 + $0xf9] sm:$0xff]
        %v223 = vld [vmem:[%s168 + $0x109] sm:$0xff]
        %v224 = vld [vmem:[%s168 + $0x111] sm:$0xff]
        %v225 = vld [vmem:[%s168 + $0x121] sm:$0xff]
        %v226 = vld [vmem:[%s168 + $0x129] sm:$0xff]
        %v227 = vld [vmem:[%s168 + $0x139] sm:$0xff]
        %v228 = vld [vmem:[%s168 + $0x141] sm:$0xff]
        %v229 = vld [vmem:[%s168 + $0x151] sm:$0xff]
        %v230 = vld [vmem:[%s168 + $0x159] sm:$0xff]
        %v231 = vld [vmem:[%s168 + $0x169] sm:$0xff]
        %v232 = vld [vmem:[%s168 + $0x171] sm:$0xff]
        %v233 = vld [vmem:[%s168 + $0x2] sm:$0xff]
        %v234 = vld [vmem:[%s168 + $0xa] sm:$0xff]
        %v235 = vld [vmem:[%s168 + $0x1a] sm:$0xff]
        %v236 = vld [vmem:[%s168 + $0x22] sm:$0xff]
        %v237 = vld [vmem:[%s168 + $0x32] sm:$0xff]
        %v238 = vld [vmem:[%s168 + $0x3a] sm:$0xff]
        %v239 = vld [vmem:[%s168 + $0x4a] sm:$0xff]
        %v240 = vld [vmem:[%s168 + $0x52] sm:$0xff]
        %v241 = vld [vmem:[%s168 + $0x62] sm:$0xff]
        %v242 = vld [vmem:[%s168 + $0x6a] sm:$0xff]
        %v243 = vld [vmem:[%s168 + $0x7a] sm:$0xff]
        %v244 = vld [vmem:[%s168 + $0x82] sm:$0xff]
        %v245 = vld [vmem:[%s168 + $0x92] sm:$0xff]
        %v246 = vld [vmem:[%s168 + $0x9a] sm:$0xff]
        %v247 = vld [vmem:[%s168 + $0xaa] sm:$0xff]
        %v248 = vld [vmem:[%s168 + $0xb2] sm:$0xff]
        %v249 = vld [vmem:[%s168 + $0xc2] sm:$0xff]
        %v250 = vld [vmem:[%s168 + $0xca] sm:$0xff]
        %v251 = vld [vmem:[%s168 + $0xda] sm:$0xff]
        %v252 = vld [vmem:[%s168 + $0xe2] sm:$0xff]
        %v253 = vld [vmem:[%s168 + $0xf2] sm:$0xff]
        %v254 = vld [vmem:[%s168 + $0xfa] sm:$0xff]
        %v255 = vld [vmem:[%s168 + $0x10a] sm:$0xff]
        %v256 = vld [vmem:[%s168 + $0x112] sm:$0xff]
        %v257 = vld [vmem:[%s168 + $0x122] sm:$0xff]
        %v258 = vld [vmem:[%s168 + $0x12a] sm:$0xff]
        %v259 = vld [vmem:[%s168 + $0x13a] sm:$0xff]
        %v260 = vld [vmem:[%s168 + $0x142] sm:$0xff]
        %v261 = vld [vmem:[%s168 + $0x152] sm:$0xff]
        %v262 = vld [vmem:[%s168 + $0x15a] sm:$0xff]
        %v263 = vld [vmem:[%s168 + $0x16a] sm:$0xff]
        %v264 = vld [vmem:[%s168 + $0x172] sm:$0xff]
        %v265 = vld [vmem:[%s168 + $0x3] sm:$0xff]
        %v266 = vld [vmem:[%s168 + $0xb] sm:$0xff]
        %v267 = vld [vmem:[%s168 + $0x1b] sm:$0xff]
        %v268 = vld [vmem:[%s168 + $0x23] sm:$0xff]
        %v269 = vld [vmem:[%s168 + $0x33] sm:$0xff]
        %v270 = vld [vmem:[%s168 + $0x3b] sm:$0xff]
        %v271 = vld [vmem:[%s168 + $0x4b] sm:$0xff]
        %v272 = vld [vmem:[%s168 + $0x53] sm:$0xff]
        %v273 = vld [vmem:[%s168 + $0x63] sm:$0xff]
        %v274 = vld [vmem:[%s168 + $0x6b] sm:$0xff]
        %v275 = vld [vmem:[%s168 + $0x7b] sm:$0xff]
        %v276 = vld [vmem:[%s168 + $0x83] sm:$0xff]
        %v277 = vld [vmem:[%s168 + $0x93] sm:$0xff]
        %v278 = vld [vmem:[%s168 + $0x9b] sm:$0xff]
        %v279 = vld [vmem:[%s168 + $0xab] sm:$0xff]
        %v280 = vld [vmem:[%s168 + $0xb3] sm:$0xff]
        %v281 = vld [vmem:[%s168 + $0xc3] sm:$0xff]
        %v282 = vld [vmem:[%s168 + $0xcb] sm:$0xff]
        %v283 = vld [vmem:[%s168 + $0xdb] sm:$0xff]
        %v284 = vld [vmem:[%s168 + $0xe3] sm:$0xff]
        %v285 = vld [vmem:[%s168 + $0xf3] sm:$0xff]
        %v286 = vld [vmem:[%s168 + $0xfb] sm:$0xff]
        %v287 = vld [vmem:[%s168 + $0x10b] sm:$0xff]
        %v288 = vld [vmem:[%s168 + $0x113] sm:$0xff]
        %v289 = vld [vmem:[%s168 + $0x123] sm:$0xff]
        %v290 = vld [vmem:[%s168 + $0x12b] sm:$0xff]
        %v291 = vld [vmem:[%s168 + $0x13b] sm:$0xff]
        %v292 = vld [vmem:[%s168 + $0x143] sm:$0xff]
        %v293 = vld [vmem:[%s168 + $0x153] sm:$0xff]
        %v294 = vld [vmem:[%s168 + $0x15b] sm:$0xff]
        %v295 = vld [vmem:[%s168 + $0x16b] sm:$0xff]
        %v296 = vld [vmem:[%s168 + $0x173] sm:$0xff]
        %v297 = vld [vmem:[%s168 + $0x4] sm:$0xff]
        %v298 = vld [vmem:[%s168 + $0xc] sm:$0xff]
        %v299 = vld [vmem:[%s168 + $0x1c] sm:$0xff]
        %v300 = vld [vmem:[%s168 + $0x24] sm:$0xff]
        %v301 = vld [vmem:[%s168 + $0x34] sm:$0xff]
        %v302 = vld [vmem:[%s168 + $0x3c] sm:$0xff]
        %v303 = vld [vmem:[%s168 + $0x4c] sm:$0xff]
        %v304 = vld [vmem:[%s168 + $0x54] sm:$0xff]
        %v305 = vld [vmem:[%s168 + $0x64] sm:$0xff]
        %v306 = vld [vmem:[%s168 + $0x6c] sm:$0xff]
        %v307 = vld [vmem:[%s168 + $0x7c] sm:$0xff]
        %v308 = vld [vmem:[%s168 + $0x84] sm:$0xff]
        %v309 = vld [vmem:[%s168 + $0x94] sm:$0xff]
        %v310 = vld [vmem:[%s168 + $0x9c] sm:$0xff]
        %v311 = vld [vmem:[%s168 + $0xac] sm:$0xff]
        %v312 = vld [vmem:[%s168 + $0xb4] sm:$0xff]
        %v313 = vld [vmem:[%s168 + $0xc4] sm:$0xff]
        %v314 = vld [vmem:[%s168 + $0xcc] sm:$0xff]
        %v315 = vld [vmem:[%s168 + $0xdc] sm:$0xff]
        %v316 = vld [vmem:[%s168 + $0xe4] sm:$0xff]
        %v317 = vld [vmem:[%s168 + $0xf4] sm:$0xff]
        %v318 = vld [vmem:[%s168 + $0xfc] sm:$0xff]
        %v319 = vld [vmem:[%s168 + $0x10c] sm:$0xff]
        %v320 = vld [vmem:[%s168 + $0x114] sm:$0xff]
        %v321 = vld [vmem:[%s168 + $0x124] sm:$0xff]
        %v322 = vld [vmem:[%s168 + $0x12c] sm:$0xff]
        %v323 = vld [vmem:[%s168 + $0x13c] sm:$0xff]
        %v324 = vld [vmem:[%s168 + $0x144] sm:$0xff]
        %v325 = vld [vmem:[%s168 + $0x154] sm:$0xff]
        %v326 = vld [vmem:[%s168 + $0x15c] sm:$0xff]
        %v327 = vld [vmem:[%s168 + $0x16c] sm:$0xff]
        %v328 = vld [vmem:[%s168 + $0x174] sm:$0xff]
        %s329 = scalar_lea.vmem %s168, 24
        %v330 = vld [vmem:[%s329] sm:$0xff]
        %v331 = vld [vmem:[%s329 + $0x8] sm:$0xff]
        %v332 = vld [vmem:[%s329 + $0x18] sm:$0xff]
        %v333 = vld [vmem:[%s329 + $0x20] sm:$0xff]
        %v334 = vld [vmem:[%s329 + $0x30] sm:$0xff]
        %v335 = vld [vmem:[%s329 + $0x38] sm:$0xff]
        %v336 = vld [vmem:[%s329 + $0x48] sm:$0xff]
        %v337 = vld [vmem:[%s329 + $0x50] sm:$0xff]
        %v338 = vld [vmem:[%s329 + $0x60] sm:$0xff]
        %v339 = vld [vmem:[%s329 + $0x68] sm:$0xff]
        %v340 = vld [vmem:[%s329 + $0x78] sm:$0xff]
        %v341 = vld [vmem:[%s329 + $0x80] sm:$0xff]
        %v342 = vld [vmem:[%s329 + $0x90] sm:$0xff]
        %v343 = vld [vmem:[%s329 + $0x98] sm:$0xff]
        %v344 = vld [vmem:[%s329 + $0xa8] sm:$0xff]
        %v345 = vld [vmem:[%s329 + $0xb0] sm:$0xff]
        %v346 = vld [vmem:[%s329 + $0xc0] sm:$0xff]
        %v347 = vld [vmem:[%s329 + $0xc8] sm:$0xff]
        %v348 = vld [vmem:[%s329 + $0xd8] sm:$0xff]
        %v349 = vld [vmem:[%s329 + $0xe0] sm:$0xff]
        %v350 = vld [vmem:[%s329 + $0xf0] sm:$0xff]
        %v351 = vld [vmem:[%s329 + $0xf8] sm:$0xff]
        %v352 = vld [vmem:[%s329 + $0x108] sm:$0xff]
        %v353 = vld [vmem:[%s329 + $0x110] sm:$0xff]
        %v354 = vld [vmem:[%s329 + $0x120] sm:$0xff]
        %v355 = vld [vmem:[%s329 + $0x128] sm:$0xff]
        %v356 = vld [vmem:[%s329 + $0x138] sm:$0xff]
        %v357 = vld [vmem:[%s329 + $0x140] sm:$0xff]
        %v358 = vld [vmem:[%s329 + $0x150] sm:$0xff]
        %v359 = vld [vmem:[%s329 + $0x158] sm:$0xff]
        %v360 = vld [vmem:[%s329 + $0x168] sm:$0xff]
        %v361 = vld [vmem:[%s329 + $0x170] sm:$0xff]
        %v362 = vld [vmem:[%s329 + $0x1] sm:$0xff]
        %v363 = vld [vmem:[%s329 + $0x9] sm:$0xff]
        %v364 = vld [vmem:[%s329 + $0x19] sm:$0xff]
        %v365 = vld [vmem:[%s329 + $0x21] sm:$0xff]
        %v366 = vld [vmem:[%s329 + $0x31] sm:$0xff]
        %v367 = vld [vmem:[%s329 + $0x39] sm:$0xff]
        %v368 = vld [vmem:[%s329 + $0x49] sm:$0xff]
        %v369 = vld [vmem:[%s329 + $0x51] sm:$0xff]
        %v370 = vld [vmem:[%s329 + $0x61] sm:$0xff]
        %v371 = vld [vmem:[%s329 + $0x69] sm:$0xff]
        %v372 = vld [vmem:[%s329 + $0x79] sm:$0xff]
        %v373 = vld [vmem:[%s329 + $0x81] sm:$0xff]
        %v374 = vld [vmem:[%s329 + $0x91] sm:$0xff]
        %v375 = vld [vmem:[%s329 + $0x99] sm:$0xff]
        %v376 = vld [vmem:[%s329 + $0xa9] sm:$0xff]
        %v377 = vld [vmem:[%s329 + $0xb1] sm:$0xff]
        %v378 = vld [vmem:[%s329 + $0xc1] sm:$0xff]
        %v379 = vld [vmem:[%s329 + $0xc9] sm:$0xff]
        %v380 = vld [vmem:[%s329 + $0xd9] sm:$0xff]
        %v381 = vld [vmem:[%s329 + $0xe1] sm:$0xff]
        %v382 = vld [vmem:[%s329 + $0xf1] sm:$0xff]
        %v383 = vld [vmem:[%s329 + $0xf9] sm:$0xff]
        %v384 = vld [vmem:[%s329 + $0x109] sm:$0xff]
        %v385 = vld [vmem:[%s329 + $0x111] sm:$0xff]
        %v386 = vld [vmem:[%s329 + $0x121] sm:$0xff]
        %v387 = vld [vmem:[%s329 + $0x129] sm:$0xff]
        %v388 = vld [vmem:[%s329 + $0x139] sm:$0xff]
        %v389 = vld [vmem:[%s329 + $0x141] sm:$0xff]
        %v390 = vld [vmem:[%s329 + $0x151] sm:$0xff]
        %v391 = vld [vmem:[%s329 + $0x159] sm:$0xff]
        %v392 = vld [vmem:[%s329 + $0x169] sm:$0xff]
        %v393 = vld [vmem:[%s329 + $0x171] sm:$0xff]
        %v394 = vld [vmem:[%s329 + $0x2] sm:$0xff]
        %v395 = vld [vmem:[%s329 + $0xa] sm:$0xff]
        %v396 = vld [vmem:[%s329 + $0x1a] sm:$0xff]
        %v397 = vld [vmem:[%s329 + $0x22] sm:$0xff]
        %v398 = vld [vmem:[%s329 + $0x32] sm:$0xff]
        %v399 = vld [vmem:[%s329 + $0x3a] sm:$0xff]
        %v400 = vld [vmem:[%s329 + $0x4a] sm:$0xff]
        %v401 = vld [vmem:[%s329 + $0x52] sm:$0xff]
        %v402 = vld [vmem:[%s329 + $0x62] sm:$0xff]
        %v403 = vld [vmem:[%s329 + $0x6a] sm:$0xff]
        %v404 = vld [vmem:[%s329 + $0x7a] sm:$0xff]
        %v405 = vld [vmem:[%s329 + $0x82] sm:$0xff]
        %v406 = vld [vmem:[%s329 + $0x92] sm:$0xff]
        %v407 = vld [vmem:[%s329 + $0x9a] sm:$0xff]
        %v408 = vld [vmem:[%s329 + $0xaa] sm:$0xff]
        %v409 = vld [vmem:[%s329 + $0xb2] sm:$0xff]
        %v410 = vld [vmem:[%s329 + $0xc2] sm:$0xff]
        %v411 = vld [vmem:[%s329 + $0xca] sm:$0xff]
        %v412 = vld [vmem:[%s329 + $0xda] sm:$0xff]
        %v413 = vld [vmem:[%s329 + $0xe2] sm:$0xff]
        %v414 = vld [vmem:[%s329 + $0xf2] sm:$0xff]
        %v415 = vld [vmem:[%s329 + $0xfa] sm:$0xff]
        %v416 = vld [vmem:[%s329 + $0x10a] sm:$0xff]
        %v417 = vld [vmem:[%s329 + $0x112] sm:$0xff]
        %v418 = vld [vmem:[%s329 + $0x122] sm:$0xff]
        %v419 = vld [vmem:[%s329 + $0x12a] sm:$0xff]
        %v420 = vld [vmem:[%s329 + $0x13a] sm:$0xff]
        %v421 = vld [vmem:[%s329 + $0x142] sm:$0xff]
        %v422 = vld [vmem:[%s329 + $0x152] sm:$0xff]
        %v423 = vld [vmem:[%s329 + $0x15a] sm:$0xff]
        %v424 = vld [vmem:[%s329 + $0x16a] sm:$0xff]
        %v425 = vld [vmem:[%s329 + $0x172] sm:$0xff]
        %v426 = vld [vmem:[%s329 + $0x3] sm:$0xff]
        %v427 = vld [vmem:[%s329 + $0xb] sm:$0xff]
        %v428 = vld [vmem:[%s329 + $0x1b] sm:$0xff]
        %v429 = vld [vmem:[%s329 + $0x23] sm:$0xff]
        %v430 = vld [vmem:[%s329 + $0x33] sm:$0xff]
        %v431 = vld [vmem:[%s329 + $0x3b] sm:$0xff]
        %v432 = vld [vmem:[%s329 + $0x4b] sm:$0xff]
        %v433 = vld [vmem:[%s329 + $0x53] sm:$0xff]
        %v434 = vld [vmem:[%s329 + $0x63] sm:$0xff]
        %v435 = vld [vmem:[%s329 + $0x6b] sm:$0xff]
        %v436 = vld [vmem:[%s329 + $0x7b] sm:$0xff]
        %v437 = vld [vmem:[%s329 + $0x83] sm:$0xff]
        %v438 = vld [vmem:[%s329 + $0x93] sm:$0xff]
        %v439 = vld [vmem:[%s329 + $0x9b] sm:$0xff]
        %v440 = vld [vmem:[%s329 + $0xab] sm:$0xff]
        %v441 = vld [vmem:[%s329 + $0xb3] sm:$0xff]
        %v442 = vld [vmem:[%s329 + $0xc3] sm:$0xff]
        %v443 = vld [vmem:[%s329 + $0xcb] sm:$0xff]
        %v444 = vld [vmem:[%s329 + $0xdb] sm:$0xff]
        %v445 = vld [vmem:[%s329 + $0xe3] sm:$0xff]
        %v446 = vld [vmem:[%s329 + $0xf3] sm:$0xff]
        %v447 = vld [vmem:[%s329 + $0xfb] sm:$0xff]
        %v448 = vld [vmem:[%s329 + $0x10b] sm:$0xff]
        %v449 = vld [vmem:[%s329 + $0x113] sm:$0xff]
        %v450 = vld [vmem:[%s329 + $0x123] sm:$0xff]
        %v451 = vld [vmem:[%s329 + $0x12b] sm:$0xff]
        %v452 = vld [vmem:[%s329 + $0x13b] sm:$0xff]
        %v453 = vld [vmem:[%s329 + $0x143] sm:$0xff]
        %v454 = vld [vmem:[%s329 + $0x153] sm:$0xff]
        %v455 = vld [vmem:[%s329 + $0x15b] sm:$0xff]
        %v456 = vld [vmem:[%s329 + $0x16b] sm:$0xff]
        %v457 = vld [vmem:[%s329 + $0x173] sm:$0xff]
        %v458 = vld [vmem:[%s329 + $0x4] sm:$0xff]
        %v459 = vld [vmem:[%s329 + $0xc] sm:$0xff]
        %v460 = vld [vmem:[%s329 + $0x1c] sm:$0xff]
        %v461 = vld [vmem:[%s329 + $0x24] sm:$0xff]
        %v462 = vld [vmem:[%s329 + $0x34] sm:$0xff]
        %v463 = vld [vmem:[%s329 + $0x3c] sm:$0xff]
        %v464 = vld [vmem:[%s329 + $0x4c] sm:$0xff]
        %v465 = vld [vmem:[%s329 + $0x54] sm:$0xff]
        %v466 = vld [vmem:[%s329 + $0x64] sm:$0xff]
        %v467 = vld [vmem:[%s329 + $0x6c] sm:$0xff]
        %v468 = vld [vmem:[%s329 + $0x7c] sm:$0xff]
        %v469 = vld [vmem:[%s329 + $0x84] sm:$0xff]
        %v470 = vld [vmem:[%s329 + $0x94] sm:$0xff]
        %v471 = vld [vmem:[%s329 + $0x9c] sm:$0xff]
        %v472 = vld [vmem:[%s329 + $0xac] sm:$0xff]
        %v473 = vld [vmem:[%s329 + $0xb4] sm:$0xff]
        %v474 = vld [vmem:[%s329 + $0xc4] sm:$0xff]
        %v475 = vld [vmem:[%s329 + $0xcc] sm:$0xff]
        %v476 = vld [vmem:[%s329 + $0xdc] sm:$0xff]
        %v477 = vld [vmem:[%s329 + $0xe4] sm:$0xff]
        %v478 = vld [vmem:[%s329 + $0xf4] sm:$0xff]
        %v479 = vld [vmem:[%s329 + $0xfc] sm:$0xff]
        %v480 = vld [vmem:[%s329 + $0x10c] sm:$0xff]
        %v481 = vld [vmem:[%s329 + $0x114] sm:$0xff]
        %v482 = vld [vmem:[%s329 + $0x124] sm:$0xff]
        %v483 = vld [vmem:[%s329 + $0x12c] sm:$0xff]
        %v484 = vld [vmem:[%s329 + $0x13c] sm:$0xff]
        %v485 = vld [vmem:[%s329 + $0x144] sm:$0xff]
        %v486 = vld [vmem:[%s329 + $0x154] sm:$0xff]
        %v487 = vld [vmem:[%s329 + $0x15c] sm:$0xff]
        %v488 = vld [vmem:[%s329 + $0x16c] sm:$0xff]
        %v489 = vld [vmem:[%s329 + $0x174] sm:$0xff]
        %s490 = scalar_lea.vmem %s168, 48
        %v491 = vld [vmem:[%s490] sm:$0xff]
        %v492 = vld [vmem:[%s490 + $0x8] sm:$0xff]
        %v493 = vld [vmem:[%s490 + $0x18] sm:$0xff]
        %v494 = vld [vmem:[%s490 + $0x20] sm:$0xff]
        %v495 = vld [vmem:[%s490 + $0x30] sm:$0xff]
        %v496 = vld [vmem:[%s490 + $0x38] sm:$0xff]
        %v497 = vld [vmem:[%s490 + $0x48] sm:$0xff]
        %v498 = vld [vmem:[%s490 + $0x50] sm:$0xff]
        %v499 = vld [vmem:[%s490 + $0x60] sm:$0xff]
        %v500 = vld [vmem:[%s490 + $0x68] sm:$0xff]
        %v501 = vld [vmem:[%s490 + $0x78] sm:$0xff]
        %v502 = vld [vmem:[%s490 + $0x80] sm:$0xff]
        %v503 = vld [vmem:[%s490 + $0x90] sm:$0xff]
        %v504 = vld [vmem:[%s490 + $0x98] sm:$0xff]
        %v505 = vld [vmem:[%s490 + $0xa8] sm:$0xff]
        %v506 = vld [vmem:[%s490 + $0xb0] sm:$0xff]
        %v507 = vld [vmem:[%s490 + $0xc0] sm:$0xff]
        %v508 = vld [vmem:[%s490 + $0xc8] sm:$0xff]
        %v509 = vld [vmem:[%s490 + $0xd8] sm:$0xff]
        %v510 = vld [vmem:[%s490 + $0xe0] sm:$0xff]
        %v511 = vld [vmem:[%s490 + $0xf0] sm:$0xff]
        %v512 = vld [vmem:[%s490 + $0xf8] sm:$0xff]
        %v513 = vld [vmem:[%s490 + $0x108] sm:$0xff]
        %v514 = vld [vmem:[%s490 + $0x110] sm:$0xff]
        %v515 = vld [vmem:[%s490 + $0x120] sm:$0xff]
        %v516 = vld [vmem:[%s490 + $0x128] sm:$0xff]
        %v517 = vld [vmem:[%s490 + $0x138] sm:$0xff]
        %v518 = vld [vmem:[%s490 + $0x140] sm:$0xff]
        %v519 = vld [vmem:[%s490 + $0x150] sm:$0xff]
        %v520 = vld [vmem:[%s490 + $0x158] sm:$0xff]
        %v521 = vld [vmem:[%s490 + $0x168] sm:$0xff]
        %v522 = vld [vmem:[%s490 + $0x170] sm:$0xff]
        %v523 = vld [vmem:[%s490 + $0x1] sm:$0xff]
        %v524 = vld [vmem:[%s490 + $0x9] sm:$0xff]
        %v525 = vld [vmem:[%s490 + $0x19] sm:$0xff]
        %v526 = vld [vmem:[%s490 + $0x21] sm:$0xff]
        %v527 = vld [vmem:[%s490 + $0x31] sm:$0xff]
        %v528 = vld [vmem:[%s490 + $0x39] sm:$0xff]
        %v529 = vld [vmem:[%s490 + $0x49] sm:$0xff]
        %v530 = vld [vmem:[%s490 + $0x51] sm:$0xff]
        %v531 = vld [vmem:[%s490 + $0x61] sm:$0xff]
        %v532 = vld [vmem:[%s490 + $0x69] sm:$0xff]
        %v533 = vld [vmem:[%s490 + $0x79] sm:$0xff]
        %v534 = vld [vmem:[%s490 + $0x81] sm:$0xff]
        %v535 = vld [vmem:[%s490 + $0x91] sm:$0xff]
        %v536 = vld [vmem:[%s490 + $0x99] sm:$0xff]
        %v537 = vld [vmem:[%s490 + $0xa9] sm:$0xff]
        %v538 = vld [vmem:[%s490 + $0xb1] sm:$0xff]
        %v539 = vld [vmem:[%s490 + $0xc1] sm:$0xff]
        %v540 = vld [vmem:[%s490 + $0xc9] sm:$0xff]
        %v541 = vld [vmem:[%s490 + $0xd9] sm:$0xff]
        %v542 = vld [vmem:[%s490 + $0xe1] sm:$0xff]
        %v543 = vld [vmem:[%s490 + $0xf1] sm:$0xff]
        %v544 = vld [vmem:[%s490 + $0xf9] sm:$0xff]
        %v545 = vld [vmem:[%s490 + $0x109] sm:$0xff]
        %v546 = vld [vmem:[%s490 + $0x111] sm:$0xff]
        %v547 = vld [vmem:[%s490 + $0x121] sm:$0xff]
        %v548 = vld [vmem:[%s490 + $0x129] sm:$0xff]
        %v549 = vld [vmem:[%s490 + $0x139] sm:$0xff]
        %v550 = vld [vmem:[%s490 + $0x141] sm:$0xff]
        %v551 = vld [vmem:[%s490 + $0x151] sm:$0xff]
        %v552 = vld [vmem:[%s490 + $0x159] sm:$0xff]
        %v553 = vld [vmem:[%s490 + $0x169] sm:$0xff]
        %v554 = vld [vmem:[%s490 + $0x171] sm:$0xff]
        %v555 = vld [vmem:[%s490 + $0x2] sm:$0xff]
        %v556 = vld [vmem:[%s490 + $0xa] sm:$0xff]
        %v557 = vld [vmem:[%s490 + $0x1a] sm:$0xff]
        %v558 = vld [vmem:[%s490 + $0x22] sm:$0xff]
        %v559 = vld [vmem:[%s490 + $0x32] sm:$0xff]
        %v560 = vld [vmem:[%s490 + $0x3a] sm:$0xff]
        %v561 = vld [vmem:[%s490 + $0x4a] sm:$0xff]
        %v562 = vld [vmem:[%s490 + $0x52] sm:$0xff]
        %v563 = vld [vmem:[%s490 + $0x62] sm:$0xff]
        %v564 = vld [vmem:[%s490 + $0x6a] sm:$0xff]
        %v565 = vld [vmem:[%s490 + $0x7a] sm:$0xff]
        %v566 = vld [vmem:[%s490 + $0x82] sm:$0xff]
        %v567 = vld [vmem:[%s490 + $0x92] sm:$0xff]
        %v568 = vld [vmem:[%s490 + $0x9a] sm:$0xff]
        %v569 = vld [vmem:[%s490 + $0xaa] sm:$0xff]
        %v570 = vld [vmem:[%s490 + $0xb2] sm:$0xff]
        %v571 = vld [vmem:[%s490 + $0xc2] sm:$0xff]
        %v572 = vld [vmem:[%s490 + $0xca] sm:$0xff]
        %v573 = vld [vmem:[%s490 + $0xda] sm:$0xff]
        %v574 = vld [vmem:[%s490 + $0xe2] sm:$0xff]
        %v575 = vld [vmem:[%s490 + $0xf2] sm:$0xff]
        %v576 = vld [vmem:[%s490 + $0xfa] sm:$0xff]
        %v577 = vld [vmem:[%s490 + $0x10a] sm:$0xff]
        %v578 = vld [vmem:[%s490 + $0x112] sm:$0xff]
        %v579 = vld [vmem:[%s490 + $0x122] sm:$0xff]
        %v580 = vld [vmem:[%s490 + $0x12a] sm:$0xff]
        %v581 = vld [vmem:[%s490 + $0x13a] sm:$0xff]
        %v582 = vld [vmem:[%s490 + $0x142] sm:$0xff]
        %v583 = vld [vmem:[%s490 + $0x152] sm:$0xff]
        %v584 = vld [vmem:[%s490 + $0x15a] sm:$0xff]
        %v585 = vld [vmem:[%s490 + $0x16a] sm:$0xff]
        %v586 = vld [vmem:[%s490 + $0x172] sm:$0xff]
        %v587 = vld [vmem:[%s490 + $0x3] sm:$0xff]
        %v588 = vld [vmem:[%s490 + $0xb] sm:$0xff]
        %v589 = vld [vmem:[%s490 + $0x1b] sm:$0xff]
        %v590 = vld [vmem:[%s490 + $0x23] sm:$0xff]
        %v591 = vld [vmem:[%s490 + $0x33] sm:$0xff]
        %v592 = vld [vmem:[%s490 + $0x3b] sm:$0xff]
        %v593 = vld [vmem:[%s490 + $0x4b] sm:$0xff]
        %v594 = vld [vmem:[%s490 + $0x53] sm:$0xff]
        %v595 = vld [vmem:[%s490 + $0x63] sm:$0xff]
        %v596 = vld [vmem:[%s490 + $0x6b] sm:$0xff]
        %v597 = vld [vmem:[%s490 + $0x7b] sm:$0xff]
        %v598 = vld [vmem:[%s490 + $0x83] sm:$0xff]
        %v599 = vld [vmem:[%s490 + $0x93] sm:$0xff]
        %v600 = vld [vmem:[%s490 + $0x9b] sm:$0xff]
        %v601 = vld [vmem:[%s490 + $0xab] sm:$0xff]
        %v602 = vld [vmem:[%s490 + $0xb3] sm:$0xff]
        %v603 = vld [vmem:[%s490 + $0xc3] sm:$0xff]
        %v604 = vld [vmem:[%s490 + $0xcb] sm:$0xff]
        %v605 = vld [vmem:[%s490 + $0xdb] sm:$0xff]
        %v606 = vld [vmem:[%s490 + $0xe3] sm:$0xff]
        %v607 = vld [vmem:[%s490 + $0xf3] sm:$0xff]
        %v608 = vld [vmem:[%s490 + $0xfb] sm:$0xff]
        %v609 = vld [vmem:[%s490 + $0x10b] sm:$0xff]
        %v610 = vld [vmem:[%s490 + $0x113] sm:$0xff]
        %v611 = vld [vmem:[%s490 + $0x123] sm:$0xff]
        %v612 = vld [vmem:[%s490 + $0x12b] sm:$0xff]
        %v613 = vld [vmem:[%s490 + $0x13b] sm:$0xff]
        %v614 = vld [vmem:[%s490 + $0x143] sm:$0xff]
        %v615 = vld [vmem:[%s490 + $0x153] sm:$0xff]
        %v616 = vld [vmem:[%s490 + $0x15b] sm:$0xff]
        %v617 = vld [vmem:[%s490 + $0x16b] sm:$0xff]
        %v618 = vld [vmem:[%s490 + $0x173] sm:$0xff]
        %v619 = vld [vmem:[%s490 + $0x4] sm:$0xff]
        %v620 = vld [vmem:[%s490 + $0xc] sm:$0xff]
        %v621 = vld [vmem:[%s490 + $0x1c] sm:$0xff]
        %v622 = vld [vmem:[%s490 + $0x24] sm:$0xff]
        %v623 = vld [vmem:[%s490 + $0x34] sm:$0xff]
        %v624 = vld [vmem:[%s490 + $0x3c] sm:$0xff]
        %v625 = vld [vmem:[%s490 + $0x4c] sm:$0xff]
        %v626 = vld [vmem:[%s490 + $0x54] sm:$0xff]
        %v627 = vld [vmem:[%s490 + $0x64] sm:$0xff]
        %v628 = vld [vmem:[%s490 + $0x6c] sm:$0xff]
        %v629 = vld [vmem:[%s490 + $0x7c] sm:$0xff]
        %v630 = vld [vmem:[%s490 + $0x84] sm:$0xff]
        %v631 = vld [vmem:[%s490 + $0x94] sm:$0xff]
        %v632 = vld [vmem:[%s490 + $0x9c] sm:$0xff]
        %v633 = vld [vmem:[%s490 + $0xac] sm:$0xff]
        %v634 = vld [vmem:[%s490 + $0xb4] sm:$0xff]
        %v635 = vld [vmem:[%s490 + $0xc4] sm:$0xff]
        %v636 = vld [vmem:[%s490 + $0xcc] sm:$0xff]
        %v637 = vld [vmem:[%s490 + $0xdc] sm:$0xff]
        %v638 = vld [vmem:[%s490 + $0xe4] sm:$0xff]
        %v639 = vld [vmem:[%s490 + $0xf4] sm:$0xff]
        %v640 = vld [vmem:[%s490 + $0xfc] sm:$0xff]
        %v641 = vld [vmem:[%s490 + $0x10c] sm:$0xff]
        %v642 = vld [vmem:[%s490 + $0x114] sm:$0xff]
        %v643 = vld [vmem:[%s490 + $0x124] sm:$0xff]
        %v644 = vld [vmem:[%s490 + $0x12c] sm:$0xff]
        %v645 = vld [vmem:[%s490 + $0x13c] sm:$0xff]
        %v646 = vld [vmem:[%s490 + $0x144] sm:$0xff]
        %v647 = vld [vmem:[%s490 + $0x154] sm:$0xff]
        %v648 = vld [vmem:[%s490 + $0x15c] sm:$0xff]
        %v649 = vld [vmem:[%s490 + $0x16c] sm:$0xff]
        %v650 = vld [vmem:[%s490 + $0x174] sm:$0xff]
        %s651 = scalar_lea.vmem %s168, 72
        %v652 = vld [vmem:[%s651] sm:$0xff]
        %v653 = vld [vmem:[%s651 + $0x8] sm:$0xff]
        %v654 = vld [vmem:[%s651 + $0x18] sm:$0xff]
        %v655 = vld [vmem:[%s651 + $0x20] sm:$0xff]
        %v656 = vld [vmem:[%s651 + $0x30] sm:$0xff]
        %v657 = vld [vmem:[%s651 + $0x38] sm:$0xff]
        %v658 = vld [vmem:[%s651 + $0x48] sm:$0xff]
        %v659 = vld [vmem:[%s651 + $0x50] sm:$0xff]
        %v660 = vld [vmem:[%s651 + $0x60] sm:$0xff]
        %v661 = vld [vmem:[%s651 + $0x68] sm:$0xff]
        %v662 = vld [vmem:[%s651 + $0x78] sm:$0xff]
        %v663 = vld [vmem:[%s651 + $0x80] sm:$0xff]
        %v664 = vld [vmem:[%s651 + $0x90] sm:$0xff]
        %v665 = vld [vmem:[%s651 + $0x98] sm:$0xff]
        %v666 = vld [vmem:[%s651 + $0xa8] sm:$0xff]
        %v667 = vld [vmem:[%s651 + $0xb0] sm:$0xff]
        %v668 = vld [vmem:[%s651 + $0xc0] sm:$0xff]
        %v669 = vld [vmem:[%s651 + $0xc8] sm:$0xff]
        %v670 = vld [vmem:[%s651 + $0xd8] sm:$0xff]
        %v671 = vld [vmem:[%s651 + $0xe0] sm:$0xff]
        %v672 = vld [vmem:[%s651 + $0xf0] sm:$0xff]
        %v673 = vld [vmem:[%s651 + $0xf8] sm:$0xff]
        %v674 = vld [vmem:[%s651 + $0x108] sm:$0xff]
        %v675 = vld [vmem:[%s651 + $0x110] sm:$0xff]
        %v676 = vld [vmem:[%s651 + $0x120] sm:$0xff]
        %v677 = vld [vmem:[%s651 + $0x128] sm:$0xff]
        %v678 = vld [vmem:[%s651 + $0x138] sm:$0xff]
        %v679 = vld [vmem:[%s651 + $0x140] sm:$0xff]
        %v680 = vld [vmem:[%s651 + $0x150] sm:$0xff]
        %v681 = vld [vmem:[%s651 + $0x158] sm:$0xff]
        %v682 = vld [vmem:[%s651 + $0x168] sm:$0xff]
        %v683 = vld [vmem:[%s651 + $0x170] sm:$0xff]
        %v684 = vld [vmem:[%s651 + $0x1] sm:$0xff]
        %v685 = vld [vmem:[%s651 + $0x9] sm:$0xff]
        %v686 = vld [vmem:[%s651 + $0x19] sm:$0xff]
        %v687 = vld [vmem:[%s651 + $0x21] sm:$0xff]
        %v688 = vld [vmem:[%s651 + $0x31] sm:$0xff]
        %v689 = vld [vmem:[%s651 + $0x39] sm:$0xff]
        %v690 = vld [vmem:[%s651 + $0x49] sm:$0xff]
        %v691 = vld [vmem:[%s651 + $0x51] sm:$0xff]
        %v692 = vld [vmem:[%s651 + $0x61] sm:$0xff]
        %v693 = vld [vmem:[%s651 + $0x69] sm:$0xff]
        %v694 = vld [vmem:[%s651 + $0x79] sm:$0xff]
        %v695 = vld [vmem:[%s651 + $0x81] sm:$0xff]
        %v696 = vld [vmem:[%s651 + $0x91] sm:$0xff]
        %v697 = vld [vmem:[%s651 + $0x99] sm:$0xff]
        %v698 = vld [vmem:[%s651 + $0xa9] sm:$0xff]
        %v699 = vld [vmem:[%s651 + $0xb1] sm:$0xff]
        %v700 = vld [vmem:[%s651 + $0xc1] sm:$0xff]
        %v701 = vld [vmem:[%s651 + $0xc9] sm:$0xff]
        %v702 = vld [vmem:[%s651 + $0xd9] sm:$0xff]
        %v703 = vld [vmem:[%s651 + $0xe1] sm:$0xff]
        %v704 = vld [vmem:[%s651 + $0xf1] sm:$0xff]
        %v705 = vld [vmem:[%s651 + $0xf9] sm:$0xff]
        %v706 = vld [vmem:[%s651 + $0x109] sm:$0xff]
        %v707 = vld [vmem:[%s651 + $0x111] sm:$0xff]
        %v708 = vld [vmem:[%s651 + $0x121] sm:$0xff]
        %v709 = vld [vmem:[%s651 + $0x129] sm:$0xff]
        %v710 = vld [vmem:[%s651 + $0x139] sm:$0xff]
        %v711 = vld [vmem:[%s651 + $0x141] sm:$0xff]
        %v712 = vld [vmem:[%s651 + $0x151] sm:$0xff]
        %v713 = vld [vmem:[%s651 + $0x159] sm:$0xff]
        %v714 = vld [vmem:[%s651 + $0x169] sm:$0xff]
        %v715 = vld [vmem:[%s651 + $0x171] sm:$0xff]
        %v716 = vld [vmem:[%s651 + $0x2] sm:$0xff]
        %v717 = vld [vmem:[%s651 + $0xa] sm:$0xff]
        %v718 = vld [vmem:[%s651 + $0x1a] sm:$0xff]
        %v719 = vld [vmem:[%s651 + $0x22] sm:$0xff]
        %v720 = vld [vmem:[%s651 + $0x32] sm:$0xff]
        %v721 = vld [vmem:[%s651 + $0x3a] sm:$0xff]
        %v722 = vld [vmem:[%s651 + $0x4a] sm:$0xff]
        %v723 = vld [vmem:[%s651 + $0x52] sm:$0xff]
        %v724 = vld [vmem:[%s651 + $0x62] sm:$0xff]
        %v725 = vld [vmem:[%s651 + $0x6a] sm:$0xff]
        %v726 = vld [vmem:[%s651 + $0x7a] sm:$0xff]
        %v727 = vld [vmem:[%s651 + $0x82] sm:$0xff]
        %v728 = vld [vmem:[%s651 + $0x92] sm:$0xff]
        %v729 = vld [vmem:[%s651 + $0x9a] sm:$0xff]
        %v730 = vld [vmem:[%s651 + $0xaa] sm:$0xff]
        %v731 = vld [vmem:[%s651 + $0xb2] sm:$0xff]
        %v732 = vld [vmem:[%s651 + $0xc2] sm:$0xff]
        %v733 = vld [vmem:[%s651 + $0xca] sm:$0xff]
        %v734 = vld [vmem:[%s651 + $0xda] sm:$0xff]
        %v735 = vld [vmem:[%s651 + $0xe2] sm:$0xff]
        %v736 = vld [vmem:[%s651 + $0xf2] sm:$0xff]
        %v737 = vld [vmem:[%s651 + $0xfa] sm:$0xff]
        %v738 = vld [vmem:[%s651 + $0x10a] sm:$0xff]
        %v739 = vld [vmem:[%s651 + $0x112] sm:$0xff]
        %v740 = vld [vmem:[%s651 + $0x122] sm:$0xff]
        %v741 = vld [vmem:[%s651 + $0x12a] sm:$0xff]
        %v742 = vld [vmem:[%s651 + $0x13a] sm:$0xff]
        %v743 = vld [vmem:[%s651 + $0x142] sm:$0xff]
        %v744 = vld [vmem:[%s651 + $0x152] sm:$0xff]
        %v745 = vld [vmem:[%s651 + $0x15a] sm:$0xff]
        %v746 = vld [vmem:[%s651 + $0x16a] sm:$0xff]
        %v747 = vld [vmem:[%s651 + $0x172] sm:$0xff]
        %v748 = vld [vmem:[%s651 + $0x3] sm:$0xff]
        %v749 = vld [vmem:[%s651 + $0xb] sm:$0xff]
        %v750 = vld [vmem:[%s651 + $0x1b] sm:$0xff]
        %v751 = vld [vmem:[%s651 + $0x23] sm:$0xff]
        %v752 = vld [vmem:[%s651 + $0x33] sm:$0xff]
        %v753 = vld [vmem:[%s651 + $0x3b] sm:$0xff]
        %v754 = vld [vmem:[%s651 + $0x4b] sm:$0xff]
        %v755 = vld [vmem:[%s651 + $0x53] sm:$0xff]
        %v756 = vld [vmem:[%s651 + $0x63] sm:$0xff]
        %v757 = vld [vmem:[%s651 + $0x6b] sm:$0xff]
        %v758 = vld [vmem:[%s651 + $0x7b] sm:$0xff]
        %v759 = vld [vmem:[%s651 + $0x83] sm:$0xff]
        %v760 = vld [vmem:[%s651 + $0x93] sm:$0xff]
        %v761 = vld [vmem:[%s651 + $0x9b] sm:$0xff]
        %v762 = vld [vmem:[%s651 + $0xab] sm:$0xff]
        %v763 = vld [vmem:[%s651 + $0xb3] sm:$0xff]
        %v764 = vld [vmem:[%s651 + $0xc3] sm:$0xff]
        %v765 = vld [vmem:[%s651 + $0xcb] sm:$0xff]
        %v766 = vld [vmem:[%s651 + $0xdb] sm:$0xff]
        %v767 = vld [vmem:[%s651 + $0xe3] sm:$0xff]
        %v768 = vld [vmem:[%s651 + $0xf3] sm:$0xff]
        %v769 = vld [vmem:[%s651 + $0xfb] sm:$0xff]
        %v770 = vld [vmem:[%s651 + $0x10b] sm:$0xff]
        %v771 = vld [vmem:[%s651 + $0x113] sm:$0xff]
        %v772 = vld [vmem:[%s651 + $0x123] sm:$0xff]
        %v773 = vld [vmem:[%s651 + $0x12b] sm:$0xff]
        %v774 = vld [vmem:[%s651 + $0x13b] sm:$0xff]
        %v775 = vld [vmem:[%s651 + $0x143] sm:$0xff]
        %v776 = vld [vmem:[%s651 + $0x153] sm:$0xff]
        %v777 = vld [vmem:[%s651 + $0x15b] sm:$0xff]
        %v778 = vld [vmem:[%s651 + $0x16b] sm:$0xff]
        %v779 = vld [vmem:[%s651 + $0x173] sm:$0xff]
        %v780 = vld [vmem:[%s651 + $0x4] sm:$0xff]
        %v781 = vld [vmem:[%s651 + $0xc] sm:$0xff]
        %v782 = vld [vmem:[%s651 + $0x1c] sm:$0xff]
        %v783 = vld [vmem:[%s651 + $0x24] sm:$0xff]
        %v784 = vld [vmem:[%s651 + $0x34] sm:$0xff]
        %v785 = vld [vmem:[%s651 + $0x3c] sm:$0xff]
        %v786 = vld [vmem:[%s651 + $0x4c] sm:$0xff]
        %v787 = vld [vmem:[%s651 + $0x54] sm:$0xff]
        %v788 = vld [vmem:[%s651 + $0x64] sm:$0xff]
        %v789 = vld [vmem:[%s651 + $0x6c] sm:$0xff]
        %v790 = vld [vmem:[%s651 + $0x7c] sm:$0xff]
        %v791 = vld [vmem:[%s651 + $0x84] sm:$0xff]
        %v792 = vld [vmem:[%s651 + $0x94] sm:$0xff]
        %v793 = vld [vmem:[%s651 + $0x9c] sm:$0xff]
        %v794 = vld [vmem:[%s651 + $0xac] sm:$0xff]
        %v795 = vld [vmem:[%s651 + $0xb4] sm:$0xff]
        %v796 = vld [vmem:[%s651 + $0xc4] sm:$0xff]
        %v797 = vld [vmem:[%s651 + $0xcc] sm:$0xff]
        %v798 = vld [vmem:[%s651 + $0xdc] sm:$0xff]
        %v799 = vld [vmem:[%s651 + $0xe4] sm:$0xff]
        %v800 = vld [vmem:[%s651 + $0xf4] sm:$0xff]
        %v801 = vld [vmem:[%s651 + $0xfc] sm:$0xff]
        %v802 = vld [vmem:[%s651 + $0x10c] sm:$0xff]
        %v803 = vld [vmem:[%s651 + $0x114] sm:$0xff]
        %v804 = vld [vmem:[%s651 + $0x124] sm:$0xff]
        %v805 = vld [vmem:[%s651 + $0x12c] sm:$0xff]
        %v806 = vld [vmem:[%s651 + $0x13c] sm:$0xff]
        %v807 = vld [vmem:[%s651 + $0x144] sm:$0xff]
        %v808 = vld [vmem:[%s651 + $0x154] sm:$0xff]
        %v809 = vld [vmem:[%s651 + $0x15c] sm:$0xff]
        %v810 = vld [vmem:[%s651 + $0x16c] sm:$0xff]
        %v811 = vld [vmem:[%s651 + $0x174] sm:$0xff]
        %s812 = scalar_lea.vmem %s168, 96
        %v813 = vld [vmem:[%s812] sm:$0xff]
        %v814 = vld [vmem:[%s812 + $0x8] sm:$0xff]
        %v815 = vld [vmem:[%s812 + $0x18] sm:$0xff]
        %v816 = vld [vmem:[%s812 + $0x20] sm:$0xff]
        %v817 = vld [vmem:[%s812 + $0x30] sm:$0xff]
        %v818 = vld [vmem:[%s812 + $0x38] sm:$0xff]
        %v819 = vld [vmem:[%s812 + $0x48] sm:$0xff]
        %v820 = vld [vmem:[%s812 + $0x50] sm:$0xff]
        %v821 = vld [vmem:[%s812 + $0x60] sm:$0xff]
        %v822 = vld [vmem:[%s812 + $0x68] sm:$0xff]
        %v823 = vld [vmem:[%s812 + $0x78] sm:$0xff]
        %v824 = vld [vmem:[%s812 + $0x80] sm:$0xff]
        %v825 = vld [vmem:[%s812 + $0x90] sm:$0xff]
        %v826 = vld [vmem:[%s812 + $0x98] sm:$0xff]
        %v827 = vld [vmem:[%s812 + $0xa8] sm:$0xff]
        %v828 = vld [vmem:[%s812 + $0xb0] sm:$0xff]
        %v829 = vld [vmem:[%s812 + $0xc0] sm:$0xff]
        %v830 = vld [vmem:[%s812 + $0xc8] sm:$0xff]
        %v831 = vld [vmem:[%s812 + $0xd8] sm:$0xff]
        %v832 = vld [vmem:[%s812 + $0xe0] sm:$0xff]
        %v833 = vld [vmem:[%s812 + $0xf0] sm:$0xff]
        %v834 = vld [vmem:[%s812 + $0xf8] sm:$0xff]
        %v835 = vld [vmem:[%s812 + $0x108] sm:$0xff]
        %v836 = vld [vmem:[%s812 + $0x110] sm:$0xff]
        %v837 = vld [vmem:[%s812 + $0x120] sm:$0xff]
        %v838 = vld [vmem:[%s812 + $0x128] sm:$0xff]
        %v839 = vld [vmem:[%s812 + $0x138] sm:$0xff]
        %v840 = vld [vmem:[%s812 + $0x140] sm:$0xff]
        %v841 = vld [vmem:[%s812 + $0x150] sm:$0xff]
        %v842 = vld [vmem:[%s812 + $0x158] sm:$0xff]
        %v843 = vld [vmem:[%s812 + $0x168] sm:$0xff]
        %v844 = vld [vmem:[%s812 + $0x170] sm:$0xff]
        %v845 = vld [vmem:[%s812 + $0x1] sm:$0xff]
        %v846 = vld [vmem:[%s812 + $0x9] sm:$0xff]
        %v847 = vld [vmem:[%s812 + $0x19] sm:$0xff]
        %v848 = vld [vmem:[%s812 + $0x21] sm:$0xff]
        %v849 = vld [vmem:[%s812 + $0x31] sm:$0xff]
        %v850 = vld [vmem:[%s812 + $0x39] sm:$0xff]
        %v851 = vld [vmem:[%s812 + $0x49] sm:$0xff]
        %v852 = vld [vmem:[%s812 + $0x51] sm:$0xff]
        %v853 = vld [vmem:[%s812 + $0x61] sm:$0xff]
        %v854 = vld [vmem:[%s812 + $0x69] sm:$0xff]
        %v855 = vld [vmem:[%s812 + $0x79] sm:$0xff]
        %v856 = vld [vmem:[%s812 + $0x81] sm:$0xff]
        %v857 = vld [vmem:[%s812 + $0x91] sm:$0xff]
        %v858 = vld [vmem:[%s812 + $0x99] sm:$0xff]
        %v859 = vld [vmem:[%s812 + $0xa9] sm:$0xff]
        %v860 = vld [vmem:[%s812 + $0xb1] sm:$0xff]
        %v861 = vld [vmem:[%s812 + $0xc1] sm:$0xff]
        %v862 = vld [vmem:[%s812 + $0xc9] sm:$0xff]
        %v863 = vld [vmem:[%s812 + $0xd9] sm:$0xff]
        %v864 = vld [vmem:[%s812 + $0xe1] sm:$0xff]
        %v865 = vld [vmem:[%s812 + $0xf1] sm:$0xff]
        %v866 = vld [vmem:[%s812 + $0xf9] sm:$0xff]
        %v867 = vld [vmem:[%s812 + $0x109] sm:$0xff]
        %v868 = vld [vmem:[%s812 + $0x111] sm:$0xff]
        %v869 = vld [vmem:[%s812 + $0x121] sm:$0xff]
        %v870 = vld [vmem:[%s812 + $0x129] sm:$0xff]
        %v871 = vld [vmem:[%s812 + $0x139] sm:$0xff]
        %v872 = vld [vmem:[%s812 + $0x141] sm:$0xff]
        %v873 = vld [vmem:[%s812 + $0x151] sm:$0xff]
        %v874 = vld [vmem:[%s812 + $0x159] sm:$0xff]
        %v875 = vld [vmem:[%s812 + $0x169] sm:$0xff]
        %v876 = vld [vmem:[%s812 + $0x171] sm:$0xff]
        %v877 = vld [vmem:[%s812 + $0x2] sm:$0xff]
        %v878 = vld [vmem:[%s812 + $0xa] sm:$0xff]
        %v879 = vld [vmem:[%s812 + $0x1a] sm:$0xff]
        %v880 = vld [vmem:[%s812 + $0x22] sm:$0xff]
        %v881 = vld [vmem:[%s812 + $0x32] sm:$0xff]
        %v882 = vld [vmem:[%s812 + $0x3a] sm:$0xff]
        %v883 = vld [vmem:[%s812 + $0x4a] sm:$0xff]
        %v884 = vld [vmem:[%s812 + $0x52] sm:$0xff]
        %v885 = vld [vmem:[%s812 + $0x62] sm:$0xff]
        %v886 = vld [vmem:[%s812 + $0x6a] sm:$0xff]
        %v887 = vld [vmem:[%s812 + $0x7a] sm:$0xff]
        %v888 = vld [vmem:[%s812 + $0x82] sm:$0xff]
        %v889 = vld [vmem:[%s812 + $0x92] sm:$0xff]
        %v890 = vld [vmem:[%s812 + $0x9a] sm:$0xff]
        %v891 = vld [vmem:[%s812 + $0xaa] sm:$0xff]
        %v892 = vld [vmem:[%s812 + $0xb2] sm:$0xff]
        %v893 = vld [vmem:[%s812 + $0xc2] sm:$0xff]
        %v894 = vld [vmem:[%s812 + $0xca] sm:$0xff]
        %v895 = vld [vmem:[%s812 + $0xda] sm:$0xff]
        %v896 = vld [vmem:[%s812 + $0xe2] sm:$0xff]
        %v897 = vld [vmem:[%s812 + $0xf2] sm:$0xff]
        %v898 = vld [vmem:[%s812 + $0xfa] sm:$0xff]
        %v899 = vld [vmem:[%s812 + $0x10a] sm:$0xff]
        %v900 = vld [vmem:[%s812 + $0x112] sm:$0xff]
        %v901 = vld [vmem:[%s812 + $0x122] sm:$0xff]
        %v902 = vld [vmem:[%s812 + $0x12a] sm:$0xff]
        %v903 = vld [vmem:[%s812 + $0x13a] sm:$0xff]
        %v904 = vld [vmem:[%s812 + $0x142] sm:$0xff]
        %v905 = vld [vmem:[%s812 + $0x152] sm:$0xff]
        %v906 = vld [vmem:[%s812 + $0x15a] sm:$0xff]
        %v907 = vld [vmem:[%s812 + $0x16a] sm:$0xff]
        %v908 = vld [vmem:[%s812 + $0x172] sm:$0xff]
        %v909 = vld [vmem:[%s812 + $0x3] sm:$0xff]
        %v910 = vld [vmem:[%s812 + $0xb] sm:$0xff]
        %v911 = vld [vmem:[%s812 + $0x1b] sm:$0xff]
        %v912 = vld [vmem:[%s812 + $0x23] sm:$0xff]
        %v913 = vld [vmem:[%s812 + $0x33] sm:$0xff]
        %v914 = vld [vmem:[%s812 + $0x3b] sm:$0xff]
        %v915 = vld [vmem:[%s812 + $0x4b] sm:$0xff]
        %v916 = vld [vmem:[%s812 + $0x53] sm:$0xff]
        %v917 = vld [vmem:[%s812 + $0x63] sm:$0xff]
        %v918 = vld [vmem:[%s812 + $0x6b] sm:$0xff]
        %v919 = vld [vmem:[%s812 + $0x7b] sm:$0xff]
        %v920 = vld [vmem:[%s812 + $0x83] sm:$0xff]
        %v921 = vld [vmem:[%s812 + $0x93] sm:$0xff]
        %v922 = vld [vmem:[%s812 + $0x9b] sm:$0xff]
        %v923 = vld [vmem:[%s812 + $0xab] sm:$0xff]
        %v924 = vld [vmem:[%s812 + $0xb3] sm:$0xff]
        %v925 = vld [vmem:[%s812 + $0xc3] sm:$0xff]
        %v926 = vld [vmem:[%s812 + $0xcb] sm:$0xff]
        %v927 = vld [vmem:[%s812 + $0xdb] sm:$0xff]
        %v928 = vld [vmem:[%s812 + $0xe3] sm:$0xff]
        %v929 = vld [vmem:[%s812 + $0xf3] sm:$0xff]
        %v930 = vld [vmem:[%s812 + $0xfb] sm:$0xff]
        %v931 = vld [vmem:[%s812 + $0x10b] sm:$0xff]
        %v932 = vld [vmem:[%s812 + $0x113] sm:$0xff]
        %v933 = vld [vmem:[%s812 + $0x123] sm:$0xff]
        %v934 = vld [vmem:[%s812 + $0x12b] sm:$0xff]
        %v935 = vld [vmem:[%s812 + $0x13b] sm:$0xff]
        %v936 = vld [vmem:[%s812 + $0x143] sm:$0xff]
        %v937 = vld [vmem:[%s812 + $0x153] sm:$0xff]
        %v938 = vld [vmem:[%s812 + $0x15b] sm:$0xff]
        %v939 = vld [vmem:[%s812 + $0x16b] sm:$0xff]
        %v940 = vld [vmem:[%s812 + $0x173] sm:$0xff]
        %v941 = vld [vmem:[%s812 + $0x4] sm:$0xff]
        %v942 = vld [vmem:[%s812 + $0xc] sm:$0xff]
        %v943 = vld [vmem:[%s812 + $0x1c] sm:$0xff]
        %v944 = vld [vmem:[%s812 + $0x24] sm:$0xff]
        %v945 = vld [vmem:[%s812 + $0x34] sm:$0xff]
        %v946 = vld [vmem:[%s812 + $0x3c] sm:$0xff]
        %v947 = vld [vmem:[%s812 + $0x4c] sm:$0xff]
        %v948 = vld [vmem:[%s812 + $0x54] sm:$0xff]
        %v949 = vld [vmem:[%s812 + $0x64] sm:$0xff]
        %v950 = vld [vmem:[%s812 + $0x6c] sm:$0xff]
        %v951 = vld [vmem:[%s812 + $0x7c] sm:$0xff]
        %v952 = vld [vmem:[%s812 + $0x84] sm:$0xff]
        %v953 = vld [vmem:[%s812 + $0x94] sm:$0xff]
        %v954 = vld [vmem:[%s812 + $0x9c] sm:$0xff]
        %v955 = vld [vmem:[%s812 + $0xac] sm:$0xff]
        %v956 = vld [vmem:[%s812 + $0xb4] sm:$0xff]
        %v957 = vld [vmem:[%s812 + $0xc4] sm:$0xff]
        %v958 = vld [vmem:[%s812 + $0xcc] sm:$0xff]
        %v959 = vld [vmem:[%s812 + $0xdc] sm:$0xff]
        %v960 = vld [vmem:[%s812 + $0xe4] sm:$0xff]
        %v961 = vld [vmem:[%s812 + $0xf4] sm:$0xff]
        %v962 = vld [vmem:[%s812 + $0xfc] sm:$0xff]
        %v963 = vld [vmem:[%s812 + $0x10c] sm:$0xff]
        %v964 = vld [vmem:[%s812 + $0x114] sm:$0xff]
        %v965 = vld [vmem:[%s812 + $0x124] sm:$0xff]
        %v966 = vld [vmem:[%s812 + $0x12c] sm:$0xff]
        %v967 = vld [vmem:[%s812 + $0x13c] sm:$0xff]
        %v968 = vld [vmem:[%s812 + $0x144] sm:$0xff]
        %v969 = vld [vmem:[%s812 + $0x154] sm:$0xff]
        %v970 = vld [vmem:[%s812 + $0x15c] sm:$0xff]
        %v971 = vld [vmem:[%s812 + $0x16c] sm:$0xff]
        %v972 = vld [vmem:[%s812 + $0x174] sm:$0xff]
        %1005 = vrot.lane.b32.xlu0 %v201, 4
        %v1006 = vpop.permute.xlu0 %1005
        %1007 = vrot.lane.b32.xlu0 %v202, 4
        %v1008 = vpop.permute.xlu0 %1007
        %1009 = vrot.lane.b32.xlu0 %v203, 4
        %v1010 = vpop.permute.xlu0 %1009
        %1011 = vrot.lane.b32.xlu0 %v204, 4
        %v1012 = vpop.permute.xlu0 %1011
        %1013 = vrot.lane.b32.xlu0 %v205, 4
        %v1014 = vpop.permute.xlu0 %1013
        %1015 = vrot.lane.b32.xlu0 %v206, 4
        %v1016 = vpop.permute.xlu0 %1015
        %1017 = vrot.lane.b32.xlu0 %v207, 4
        %v1018 = vpop.permute.xlu0 %1017
        %1019 = vrot.lane.b32.xlu0 %v208, 4
        %v1020 = vpop.permute.xlu0 %1019
        %1021 = vrot.lane.b32.xlu0 %v209, 4
        %v1022 = vpop.permute.xlu0 %1021
        %1023 = vrot.lane.b32.xlu0 %v210, 4
        %v1024 = vpop.permute.xlu0 %1023
        %1025 = vrot.lane.b32.xlu0 %v211, 4
        %v1026 = vpop.permute.xlu0 %1025
        %1027 = vrot.lane.b32.xlu0 %v212, 4
        %v1028 = vpop.permute.xlu0 %1027
        %1029 = vrot.lane.b32.xlu0 %v213, 4
        %v1030 = vpop.permute.xlu0 %1029
        %1031 = vrot.lane.b32.xlu0 %v214, 4
        %v1032 = vpop.permute.xlu0 %1031
        %1033 = vrot.lane.b32.xlu0 %v215, 4
        %v1034 = vpop.permute.xlu0 %1033
        %1035 = vrot.lane.b32.xlu0 %v216, 4
        %v1036 = vpop.permute.xlu0 %1035
        %1037 = vrot.lane.b32.xlu0 %v217, 4
        %v1038 = vpop.permute.xlu0 %1037
        %1039 = vrot.lane.b32.xlu0 %v218, 4
        %v1040 = vpop.permute.xlu0 %1039
        %1041 = vrot.lane.b32.xlu0 %v219, 4
        %v1042 = vpop.permute.xlu0 %1041
        %1043 = vrot.lane.b32.xlu0 %v220, 4
        %v1044 = vpop.permute.xlu0 %1043
        %1045 = vrot.lane.b32.xlu0 %v221, 4
        %v1046 = vpop.permute.xlu0 %1045
        %1047 = vrot.lane.b32.xlu0 %v222, 4
        %v1048 = vpop.permute.xlu0 %1047
        %1049 = vrot.lane.b32.xlu0 %v223, 4
        %v1050 = vpop.permute.xlu0 %1049
        %1051 = vrot.lane.b32.xlu0 %v224, 4
        %v1052 = vpop.permute.xlu0 %1051
        %1053 = vrot.lane.b32.xlu0 %v225, 4
        %v1054 = vpop.permute.xlu0 %1053
        %1055 = vrot.lane.b32.xlu0 %v226, 4
        %v1056 = vpop.permute.xlu0 %1055
        %1057 = vrot.lane.b32.xlu0 %v227, 4
        %v1058 = vpop.permute.xlu0 %1057
        %1059 = vrot.lane.b32.xlu0 %v228, 4
        %v1060 = vpop.permute.xlu0 %1059
        %1061 = vrot.lane.b32.xlu0 %v229, 4
        %v1062 = vpop.permute.xlu0 %1061
        %1063 = vrot.lane.b32.xlu0 %v230, 4
        %v1064 = vpop.permute.xlu0 %1063
        %1065 = vrot.lane.b32.xlu0 %v231, 4
        %v1066 = vpop.permute.xlu0 %1065
        %1067 = vrot.lane.b32.xlu0 %v232, 4
        %v1068 = vpop.permute.xlu0 %1067
        %1133 = vrot.lane.b32.xlu0 %v233, 8
        %v1134 = vpop.permute.xlu0 %1133
        %1135 = vrot.lane.b32.xlu0 %v234, 8
        %v1136 = vpop.permute.xlu0 %1135
        %1137 = vrot.lane.b32.xlu0 %v235, 8
        %v1138 = vpop.permute.xlu0 %1137
        %1139 = vrot.lane.b32.xlu0 %v236, 8
        %v1140 = vpop.permute.xlu0 %1139
        %1141 = vrot.lane.b32.xlu0 %v237, 8
        %v1142 = vpop.permute.xlu0 %1141
        %1143 = vrot.lane.b32.xlu0 %v238, 8
        %v1144 = vpop.permute.xlu0 %1143
        %1145 = vrot.lane.b32.xlu0 %v239, 8
        %v1146 = vpop.permute.xlu0 %1145
        %1147 = vrot.lane.b32.xlu0 %v240, 8
        %v1148 = vpop.permute.xlu0 %1147
        %1149 = vrot.lane.b32.xlu0 %v241, 8
        %v1150 = vpop.permute.xlu0 %1149
        %1151 = vrot.lane.b32.xlu0 %v242, 8
        %v1152 = vpop.permute.xlu0 %1151
        %1153 = vrot.lane.b32.xlu0 %v243, 8
        %v1154 = vpop.permute.xlu0 %1153
        %1155 = vrot.lane.b32.xlu0 %v244, 8
        %v1156 = vpop.permute.xlu0 %1155
        %1157 = vrot.lane.b32.xlu0 %v245, 8
        %v1158 = vpop.permute.xlu0 %1157
        %1159 = vrot.lane.b32.xlu0 %v246, 8
        %v1160 = vpop.permute.xlu0 %1159
        %1161 = vrot.lane.b32.xlu0 %v247, 8
        %v1162 = vpop.permute.xlu0 %1161
        %1163 = vrot.lane.b32.xlu0 %v248, 8
        %v1164 = vpop.permute.xlu0 %1163
        %1165 = vrot.lane.b32.xlu0 %v249, 8
        %v1166 = vpop.permute.xlu0 %1165
        %1167 = vrot.lane.b32.xlu0 %v250, 8
        %v1168 = vpop.permute.xlu0 %1167
        %1169 = vrot.lane.b32.xlu0 %v251, 8
        %v1170 = vpop.permute.xlu0 %1169
        %1171 = vrot.lane.b32.xlu0 %v252, 8
        %v1172 = vpop.permute.xlu0 %1171
        %1173 = vrot.lane.b32.xlu0 %v253, 8
        %v1174 = vpop.permute.xlu0 %1173
        %1175 = vrot.lane.b32.xlu0 %v254, 8
        %v1176 = vpop.permute.xlu0 %1175
        %1177 = vrot.lane.b32.xlu0 %v255, 8
        %v1178 = vpop.permute.xlu0 %1177
        %1179 = vrot.lane.b32.xlu0 %v256, 8
        %v1180 = vpop.permute.xlu0 %1179
        %1181 = vrot.lane.b32.xlu0 %v257, 8
        %v1182 = vpop.permute.xlu0 %1181
        %1183 = vrot.lane.b32.xlu0 %v258, 8
        %v1184 = vpop.permute.xlu0 %1183
        %1185 = vrot.lane.b32.xlu0 %v259, 8
        %v1186 = vpop.permute.xlu0 %1185
        %1187 = vrot.lane.b32.xlu0 %v260, 8
        %v1188 = vpop.permute.xlu0 %1187
        %1189 = vrot.lane.b32.xlu0 %v261, 8
        %v1190 = vpop.permute.xlu0 %1189
        %1191 = vrot.lane.b32.xlu0 %v262, 8
        %v1192 = vpop.permute.xlu0 %1191
        %1193 = vrot.lane.b32.xlu0 %v263, 8
        %v1194 = vpop.permute.xlu0 %1193
        %1195 = vrot.lane.b32.xlu0 %v264, 8
        %v1196 = vpop.permute.xlu0 %1195
        %1261 = vrot.lane.b32.xlu0 %v265, 12
        %v1262 = vpop.permute.xlu0 %1261
        %1263 = vrot.lane.b32.xlu0 %v266, 12
        %v1264 = vpop.permute.xlu0 %1263
        %1265 = vrot.lane.b32.xlu0 %v267, 12
        %v1266 = vpop.permute.xlu0 %1265
        %1267 = vrot.lane.b32.xlu0 %v268, 12
        %v1268 = vpop.permute.xlu0 %1267
        %1269 = vrot.lane.b32.xlu0 %v269, 12
        %v1270 = vpop.permute.xlu0 %1269
        %1271 = vrot.lane.b32.xlu0 %v270, 12
        %v1272 = vpop.permute.xlu0 %1271
        %1273 = vrot.lane.b32.xlu0 %v271, 12
        %v1274 = vpop.permute.xlu0 %1273
        %1275 = vrot.lane.b32.xlu0 %v272, 12
        %v1276 = vpop.permute.xlu0 %1275
        %1277 = vrot.lane.b32.xlu0 %v273, 12
        %v1278 = vpop.permute.xlu0 %1277
        %1279 = vrot.lane.b32.xlu0 %v274, 12
        %v1280 = vpop.permute.xlu0 %1279
        %1281 = vrot.lane.b32.xlu0 %v275, 12
        %v1282 = vpop.permute.xlu0 %1281
        %1283 = vrot.lane.b32.xlu0 %v276, 12
        %v1284 = vpop.permute.xlu0 %1283
        %1285 = vrot.lane.b32.xlu0 %v277, 12
        %v1286 = vpop.permute.xlu0 %1285
        %1287 = vrot.lane.b32.xlu0 %v278, 12
        %v1288 = vpop.permute.xlu0 %1287
        %1289 = vrot.lane.b32.xlu0 %v279, 12
        %v1290 = vpop.permute.xlu0 %1289
        %1291 = vrot.lane.b32.xlu0 %v280, 12
        %v1292 = vpop.permute.xlu0 %1291
        %1293 = vrot.lane.b32.xlu0 %v281, 12
        %v1294 = vpop.permute.xlu0 %1293
        %1295 = vrot.lane.b32.xlu0 %v282, 12
        %v1296 = vpop.permute.xlu0 %1295
        %1297 = vrot.lane.b32.xlu0 %v283, 12
        %v1298 = vpop.permute.xlu0 %1297
        %1299 = vrot.lane.b32.xlu0 %v284, 12
        %v1300 = vpop.permute.xlu0 %1299
        %1301 = vrot.lane.b32.xlu0 %v285, 12
        %v1302 = vpop.permute.xlu0 %1301
        %1303 = vrot.lane.b32.xlu0 %v286, 12
        %v1304 = vpop.permute.xlu0 %1303
        %1305 = vrot.lane.b32.xlu0 %v287, 12
        %v1306 = vpop.permute.xlu0 %1305
        %1307 = vrot.lane.b32.xlu0 %v288, 12
        %v1308 = vpop.permute.xlu0 %1307
        %1309 = vrot.lane.b32.xlu0 %v289, 12
        %v1310 = vpop.permute.xlu0 %1309
        %1311 = vrot.lane.b32.xlu0 %v290, 12
        %v1312 = vpop.permute.xlu0 %1311
        %1313 = vrot.lane.b32.xlu0 %v291, 12
        %v1314 = vpop.permute.xlu0 %1313
        %1315 = vrot.lane.b32.xlu0 %v292, 12
        %v1316 = vpop.permute.xlu0 %1315
        %1317 = vrot.lane.b32.xlu0 %v293, 12
        %v1318 = vpop.permute.xlu0 %1317
        %1319 = vrot.lane.b32.xlu0 %v294, 12
        %v1320 = vpop.permute.xlu0 %1319
        %1321 = vrot.lane.b32.xlu0 %v295, 12
        %v1322 = vpop.permute.xlu0 %1321
        %1323 = vrot.lane.b32.xlu0 %v296, 12
        %v1324 = vpop.permute.xlu0 %1323
        %1389 = vrot.lane.b32.xlu0 %v297, 16
        %v1390 = vpop.permute.xlu0 %1389
        %1391 = vrot.lane.b32.xlu0 %v298, 16
        %v1392 = vpop.permute.xlu0 %1391
        %1393 = vrot.lane.b32.xlu0 %v299, 16
        %v1394 = vpop.permute.xlu0 %1393
        %1395 = vrot.lane.b32.xlu0 %v300, 16
        %v1396 = vpop.permute.xlu0 %1395
        %1397 = vrot.lane.b32.xlu0 %v301, 16
        %v1398 = vpop.permute.xlu0 %1397
        %1399 = vrot.lane.b32.xlu0 %v302, 16
        %v1400 = vpop.permute.xlu0 %1399
        %1401 = vrot.lane.b32.xlu0 %v303, 16
        %v1402 = vpop.permute.xlu0 %1401
        %1403 = vrot.lane.b32.xlu0 %v304, 16
        %v1404 = vpop.permute.xlu0 %1403
        %1405 = vrot.lane.b32.xlu0 %v305, 16
        %v1406 = vpop.permute.xlu0 %1405
        %1407 = vrot.lane.b32.xlu0 %v306, 16
        %v1408 = vpop.permute.xlu0 %1407
        %1409 = vrot.lane.b32.xlu0 %v307, 16
        %v1410 = vpop.permute.xlu0 %1409
        %1411 = vrot.lane.b32.xlu0 %v308, 16
        %v1412 = vpop.permute.xlu0 %1411
        %1413 = vrot.lane.b32.xlu0 %v309, 16
        %v1414 = vpop.permute.xlu0 %1413
        %1415 = vrot.lane.b32.xlu0 %v310, 16
        %v1416 = vpop.permute.xlu0 %1415
        %1417 = vrot.lane.b32.xlu0 %v311, 16
        %v1418 = vpop.permute.xlu0 %1417
        %1419 = vrot.lane.b32.xlu0 %v312, 16
        %v1420 = vpop.permute.xlu0 %1419
        %1421 = vrot.lane.b32.xlu0 %v313, 16
        %v1422 = vpop.permute.xlu0 %1421
        %1423 = vrot.lane.b32.xlu0 %v314, 16
        %v1424 = vpop.permute.xlu0 %1423
        %1425 = vrot.lane.b32.xlu0 %v315, 16
        %v1426 = vpop.permute.xlu0 %1425
        %1427 = vrot.lane.b32.xlu0 %v316, 16
        %v1428 = vpop.permute.xlu0 %1427
        %1429 = vrot.lane.b32.xlu0 %v317, 16
        %v1430 = vpop.permute.xlu0 %1429
        %1431 = vrot.lane.b32.xlu0 %v318, 16
        %v1432 = vpop.permute.xlu0 %1431
        %1433 = vrot.lane.b32.xlu0 %v319, 16
        %v1434 = vpop.permute.xlu0 %1433
        %1435 = vrot.lane.b32.xlu0 %v320, 16
        %v1436 = vpop.permute.xlu0 %1435
        %1437 = vrot.lane.b32.xlu0 %v321, 16
        %v1438 = vpop.permute.xlu0 %1437
        %1439 = vrot.lane.b32.xlu0 %v322, 16
        %v1440 = vpop.permute.xlu0 %1439
        %1441 = vrot.lane.b32.xlu0 %v323, 16
        %v1442 = vpop.permute.xlu0 %1441
        %1443 = vrot.lane.b32.xlu0 %v324, 16
        %v1444 = vpop.permute.xlu0 %1443
        %1445 = vrot.lane.b32.xlu0 %v325, 16
        %v1446 = vpop.permute.xlu0 %1445
        %1447 = vrot.lane.b32.xlu0 %v326, 16
        %v1448 = vpop.permute.xlu0 %1447
        %1449 = vrot.lane.b32.xlu0 %v327, 16
        %v1450 = vpop.permute.xlu0 %1449
        %1451 = vrot.lane.b32.xlu0 %v328, 16
        %v1452 = vpop.permute.xlu0 %1451
        %1517 = vrot.lane.b32.xlu0 %v330, 20
        %v1518 = vpop.permute.xlu0 %1517
        %1519 = vrot.lane.b32.xlu0 %v331, 20
        %v1520 = vpop.permute.xlu0 %1519
        %1521 = vrot.lane.b32.xlu0 %v332, 20
        %v1522 = vpop.permute.xlu0 %1521
        %1523 = vrot.lane.b32.xlu0 %v333, 20
        %v1524 = vpop.permute.xlu0 %1523
        %1525 = vrot.lane.b32.xlu0 %v334, 20
        %v1526 = vpop.permute.xlu0 %1525
        %1527 = vrot.lane.b32.xlu0 %v335, 20
        %v1528 = vpop.permute.xlu0 %1527
        %1529 = vrot.lane.b32.xlu0 %v336, 20
        %v1530 = vpop.permute.xlu0 %1529
        %1531 = vrot.lane.b32.xlu0 %v337, 20
        %v1532 = vpop.permute.xlu0 %1531
        %1533 = vrot.lane.b32.xlu0 %v338, 20
        %v1534 = vpop.permute.xlu0 %1533
        %1535 = vrot.lane.b32.xlu0 %v339, 20
        %v1536 = vpop.permute.xlu0 %1535
        %1537 = vrot.lane.b32.xlu0 %v340, 20
        %v1538 = vpop.permute.xlu0 %1537
        %1539 = vrot.lane.b32.xlu0 %v341, 20
        %v1540 = vpop.permute.xlu0 %1539
        %1541 = vrot.lane.b32.xlu0 %v342, 20
        %v1542 = vpop.permute.xlu0 %1541
        %1543 = vrot.lane.b32.xlu0 %v343, 20
        %v1544 = vpop.permute.xlu0 %1543
        %1545 = vrot.lane.b32.xlu0 %v344, 20
        %v1546 = vpop.permute.xlu0 %1545
        %1547 = vrot.lane.b32.xlu0 %v345, 20
        %v1548 = vpop.permute.xlu0 %1547
        %1549 = vrot.lane.b32.xlu0 %v346, 20
        %v1550 = vpop.permute.xlu0 %1549
        %1551 = vrot.lane.b32.xlu0 %v347, 20
        %v1552 = vpop.permute.xlu0 %1551
        %1553 = vrot.lane.b32.xlu0 %v348, 20
        %v1554 = vpop.permute.xlu0 %1553
        %1555 = vrot.lane.b32.xlu0 %v349, 20
        %v1556 = vpop.permute.xlu0 %1555
        %1557 = vrot.lane.b32.xlu0 %v350, 20
        %v1558 = vpop.permute.xlu0 %1557
        %1559 = vrot.lane.b32.xlu0 %v351, 20
        %v1560 = vpop.permute.xlu0 %1559
        %1561 = vrot.lane.b32.xlu0 %v352, 20
        %v1562 = vpop.permute.xlu0 %1561
        %1563 = vrot.lane.b32.xlu0 %v353, 20
        %v1564 = vpop.permute.xlu0 %1563
        %1565 = vrot.lane.b32.xlu0 %v354, 20
        %v1566 = vpop.permute.xlu0 %1565
        %1567 = vrot.lane.b32.xlu0 %v355, 20
        %v1568 = vpop.permute.xlu0 %1567
        %1569 = vrot.lane.b32.xlu0 %v356, 20
        %v1570 = vpop.permute.xlu0 %1569
        %1571 = vrot.lane.b32.xlu0 %v357, 20
        %v1572 = vpop.permute.xlu0 %1571
        %1573 = vrot.lane.b32.xlu0 %v358, 20
        %v1574 = vpop.permute.xlu0 %1573
        %1575 = vrot.lane.b32.xlu0 %v359, 20
        %v1576 = vpop.permute.xlu0 %1575
        %1577 = vrot.lane.b32.xlu0 %v360, 20
        %v1578 = vpop.permute.xlu0 %1577
        %1579 = vrot.lane.b32.xlu0 %v361, 20
        %v1580 = vpop.permute.xlu0 %1579
        %1645 = vrot.lane.b32.xlu0 %v362, 24
        %v1646 = vpop.permute.xlu0 %1645
        %1647 = vrot.lane.b32.xlu0 %v363, 24
        %v1648 = vpop.permute.xlu0 %1647
        %1649 = vrot.lane.b32.xlu0 %v364, 24
        %v1650 = vpop.permute.xlu0 %1649
        %1651 = vrot.lane.b32.xlu0 %v365, 24
        %v1652 = vpop.permute.xlu0 %1651
        %1653 = vrot.lane.b32.xlu0 %v366, 24
        %v1654 = vpop.permute.xlu0 %1653
        %1655 = vrot.lane.b32.xlu0 %v367, 24
        %v1656 = vpop.permute.xlu0 %1655
        %1657 = vrot.lane.b32.xlu0 %v368, 24
        %v1658 = vpop.permute.xlu0 %1657
        %1659 = vrot.lane.b32.xlu0 %v369, 24
        %v1660 = vpop.permute.xlu0 %1659
        %1661 = vrot.lane.b32.xlu0 %v370, 24
        %v1662 = vpop.permute.xlu0 %1661
        %1663 = vrot.lane.b32.xlu0 %v371, 24
        %v1664 = vpop.permute.xlu0 %1663
        %1665 = vrot.lane.b32.xlu0 %v372, 24
        %v1666 = vpop.permute.xlu0 %1665
        %1667 = vrot.lane.b32.xlu0 %v373, 24
        %v1668 = vpop.permute.xlu0 %1667
        %1669 = vrot.lane.b32.xlu0 %v374, 24
        %v1670 = vpop.permute.xlu0 %1669
        %1671 = vrot.lane.b32.xlu0 %v375, 24
        %v1672 = vpop.permute.xlu0 %1671
        %1673 = vrot.lane.b32.xlu0 %v376, 24
        %v1674 = vpop.permute.xlu0 %1673
        %1675 = vrot.lane.b32.xlu0 %v377, 24
        %v1676 = vpop.permute.xlu0 %1675
        %1677 = vrot.lane.b32.xlu0 %v378, 24
        %v1678 = vpop.permute.xlu0 %1677
        %1679 = vrot.lane.b32.xlu0 %v379, 24
        %v1680 = vpop.permute.xlu0 %1679
        %1681 = vrot.lane.b32.xlu0 %v380, 24
        %v1682 = vpop.permute.xlu0 %1681
        %1683 = vrot.lane.b32.xlu0 %v381, 24
        %v1684 = vpop.permute.xlu0 %1683
        %1685 = vrot.lane.b32.xlu0 %v382, 24
        %v1686 = vpop.permute.xlu0 %1685
        %1687 = vrot.lane.b32.xlu0 %v383, 24
        %v1688 = vpop.permute.xlu0 %1687
        %1689 = vrot.lane.b32.xlu0 %v384, 24
        %v1690 = vpop.permute.xlu0 %1689
        %1691 = vrot.lane.b32.xlu0 %v385, 24
        %v1692 = vpop.permute.xlu0 %1691
        %1693 = vrot.lane.b32.xlu0 %v386, 24
        %v1694 = vpop.permute.xlu0 %1693
        %1695 = vrot.lane.b32.xlu0 %v387, 24
        %v1696 = vpop.permute.xlu0 %1695
        %1697 = vrot.lane.b32.xlu0 %v388, 24
        %v1698 = vpop.permute.xlu0 %1697
        %1699 = vrot.lane.b32.xlu0 %v389, 24
        %v1700 = vpop.permute.xlu0 %1699
        %1701 = vrot.lane.b32.xlu0 %v390, 24
        %v1702 = vpop.permute.xlu0 %1701
        %1703 = vrot.lane.b32.xlu0 %v391, 24
        %v1704 = vpop.permute.xlu0 %1703
        %1705 = vrot.lane.b32.xlu0 %v392, 24
        %v1706 = vpop.permute.xlu0 %1705
        %1707 = vrot.lane.b32.xlu0 %v393, 24
        %v1708 = vpop.permute.xlu0 %1707
        %1773 = vrot.lane.b32.xlu0 %v394, 28
        %v1774 = vpop.permute.xlu0 %1773
        %1775 = vrot.lane.b32.xlu0 %v395, 28
        %v1776 = vpop.permute.xlu0 %1775
        %1777 = vrot.lane.b32.xlu0 %v396, 28
        %v1778 = vpop.permute.xlu0 %1777
        %1779 = vrot.lane.b32.xlu0 %v397, 28
        %v1780 = vpop.permute.xlu0 %1779
        %1781 = vrot.lane.b32.xlu0 %v398, 28
        %v1782 = vpop.permute.xlu0 %1781
        %1783 = vrot.lane.b32.xlu0 %v399, 28
        %v1784 = vpop.permute.xlu0 %1783
        %1785 = vrot.lane.b32.xlu0 %v400, 28
        %v1786 = vpop.permute.xlu0 %1785
        %1787 = vrot.lane.b32.xlu0 %v401, 28
        %v1788 = vpop.permute.xlu0 %1787
        %1789 = vrot.lane.b32.xlu0 %v402, 28
        %v1790 = vpop.permute.xlu0 %1789
        %1791 = vrot.lane.b32.xlu0 %v403, 28
        %v1792 = vpop.permute.xlu0 %1791
        %1793 = vrot.lane.b32.xlu0 %v404, 28
        %v1794 = vpop.permute.xlu0 %1793
        %1795 = vrot.lane.b32.xlu0 %v405, 28
        %v1796 = vpop.permute.xlu0 %1795
        %1797 = vrot.lane.b32.xlu0 %v406, 28
        %v1798 = vpop.permute.xlu0 %1797
        %1799 = vrot.lane.b32.xlu0 %v407, 28
        %v1800 = vpop.permute.xlu0 %1799
        %1801 = vrot.lane.b32.xlu0 %v408, 28
        %v1802 = vpop.permute.xlu0 %1801
        %1803 = vrot.lane.b32.xlu0 %v409, 28
        %v1804 = vpop.permute.xlu0 %1803
        %1805 = vrot.lane.b32.xlu0 %v410, 28
        %v1806 = vpop.permute.xlu0 %1805
        %1807 = vrot.lane.b32.xlu0 %v411, 28
        %v1808 = vpop.permute.xlu0 %1807
        %1809 = vrot.lane.b32.xlu0 %v412, 28
        %v1810 = vpop.permute.xlu0 %1809
        %1811 = vrot.lane.b32.xlu0 %v413, 28
        %v1812 = vpop.permute.xlu0 %1811
        %1813 = vrot.lane.b32.xlu0 %v414, 28
        %v1814 = vpop.permute.xlu0 %1813
        %1815 = vrot.lane.b32.xlu0 %v415, 28
        %v1816 = vpop.permute.xlu0 %1815
        %1817 = vrot.lane.b32.xlu0 %v416, 28
        %v1818 = vpop.permute.xlu0 %1817
        %1819 = vrot.lane.b32.xlu0 %v417, 28
        %v1820 = vpop.permute.xlu0 %1819
        %1821 = vrot.lane.b32.xlu0 %v418, 28
        %v1822 = vpop.permute.xlu0 %1821
        %1823 = vrot.lane.b32.xlu0 %v419, 28
        %v1824 = vpop.permute.xlu0 %1823
        %1825 = vrot.lane.b32.xlu0 %v420, 28
        %v1826 = vpop.permute.xlu0 %1825
        %1827 = vrot.lane.b32.xlu0 %v421, 28
        %v1828 = vpop.permute.xlu0 %1827
        %1829 = vrot.lane.b32.xlu0 %v422, 28
        %v1830 = vpop.permute.xlu0 %1829
        %1831 = vrot.lane.b32.xlu0 %v423, 28
        %v1832 = vpop.permute.xlu0 %1831
        %1833 = vrot.lane.b32.xlu0 %v424, 28
        %v1834 = vpop.permute.xlu0 %1833
        %1835 = vrot.lane.b32.xlu0 %v425, 28
        %v1836 = vpop.permute.xlu0 %1835
        %1901 = vrot.lane.b32.xlu0 %v426, 32
        %v1902 = vpop.permute.xlu0 %1901
        %1903 = vrot.lane.b32.xlu0 %v427, 32
        %v1904 = vpop.permute.xlu0 %1903
        %1905 = vrot.lane.b32.xlu0 %v428, 32
        %v1906 = vpop.permute.xlu0 %1905
        %1907 = vrot.lane.b32.xlu0 %v429, 32
        %v1908 = vpop.permute.xlu0 %1907
        %1909 = vrot.lane.b32.xlu0 %v430, 32
        %v1910 = vpop.permute.xlu0 %1909
        %1911 = vrot.lane.b32.xlu0 %v431, 32
        %v1912 = vpop.permute.xlu0 %1911
        %1913 = vrot.lane.b32.xlu0 %v432, 32
        %v1914 = vpop.permute.xlu0 %1913
        %1915 = vrot.lane.b32.xlu0 %v433, 32
        %v1916 = vpop.permute.xlu0 %1915
        %1917 = vrot.lane.b32.xlu0 %v434, 32
        %v1918 = vpop.permute.xlu0 %1917
        %1919 = vrot.lane.b32.xlu0 %v435, 32
        %v1920 = vpop.permute.xlu0 %1919
        %1921 = vrot.lane.b32.xlu0 %v436, 32
        %v1922 = vpop.permute.xlu0 %1921
        %1923 = vrot.lane.b32.xlu0 %v437, 32
        %v1924 = vpop.permute.xlu0 %1923
        %1925 = vrot.lane.b32.xlu0 %v438, 32
        %v1926 = vpop.permute.xlu0 %1925
        %1927 = vrot.lane.b32.xlu0 %v439, 32
        %v1928 = vpop.permute.xlu0 %1927
        %1929 = vrot.lane.b32.xlu0 %v440, 32
        %v1930 = vpop.permute.xlu0 %1929
        %1931 = vrot.lane.b32.xlu0 %v441, 32
        %v1932 = vpop.permute.xlu0 %1931
        %1933 = vrot.lane.b32.xlu0 %v442, 32
        %v1934 = vpop.permute.xlu0 %1933
        %1935 = vrot.lane.b32.xlu0 %v443, 32
        %v1936 = vpop.permute.xlu0 %1935
        %1937 = vrot.lane.b32.xlu0 %v444, 32
        %v1938 = vpop.permute.xlu0 %1937
        %1939 = vrot.lane.b32.xlu0 %v445, 32
        %v1940 = vpop.permute.xlu0 %1939
        %1941 = vrot.lane.b32.xlu0 %v446, 32
        %v1942 = vpop.permute.xlu0 %1941
        %1943 = vrot.lane.b32.xlu0 %v447, 32
        %v1944 = vpop.permute.xlu0 %1943
        %1945 = vrot.lane.b32.xlu0 %v448, 32
        %v1946 = vpop.permute.xlu0 %1945
        %1947 = vrot.lane.b32.xlu0 %v449, 32
        %v1948 = vpop.permute.xlu0 %1947
        %1949 = vrot.lane.b32.xlu0 %v450, 32
        %v1950 = vpop.permute.xlu0 %1949
        %1951 = vrot.lane.b32.xlu0 %v451, 32
        %v1952 = vpop.permute.xlu0 %1951
        %1953 = vrot.lane.b32.xlu0 %v452, 32
        %v1954 = vpop.permute.xlu0 %1953
        %1955 = vrot.lane.b32.xlu0 %v453, 32
        %v1956 = vpop.permute.xlu0 %1955
        %1957 = vrot.lane.b32.xlu0 %v454, 32
        %v1958 = vpop.permute.xlu0 %1957
        %1959 = vrot.lane.b32.xlu0 %v455, 32
        %v1960 = vpop.permute.xlu0 %1959
        %1961 = vrot.lane.b32.xlu0 %v456, 32
        %v1962 = vpop.permute.xlu0 %1961
        %1963 = vrot.lane.b32.xlu0 %v457, 32
        %v1964 = vpop.permute.xlu0 %1963
        %2029 = vrot.lane.b32.xlu0 %v458, 36
        %v2030 = vpop.permute.xlu0 %2029
        %2031 = vrot.lane.b32.xlu0 %v459, 36
        %v2032 = vpop.permute.xlu0 %2031
        %2033 = vrot.lane.b32.xlu0 %v460, 36
        %v2034 = vpop.permute.xlu0 %2033
        %2035 = vrot.lane.b32.xlu0 %v461, 36
        %v2036 = vpop.permute.xlu0 %2035
        %2037 = vrot.lane.b32.xlu0 %v462, 36
        %v2038 = vpop.permute.xlu0 %2037
        %2039 = vrot.lane.b32.xlu0 %v463, 36
        %v2040 = vpop.permute.xlu0 %2039
        %2041 = vrot.lane.b32.xlu0 %v464, 36
        %v2042 = vpop.permute.xlu0 %2041
        %2043 = vrot.lane.b32.xlu0 %v465, 36
        %v2044 = vpop.permute.xlu0 %2043
        %2045 = vrot.lane.b32.xlu0 %v466, 36
        %v2046 = vpop.permute.xlu0 %2045
        %2047 = vrot.lane.b32.xlu0 %v467, 36
        %v2048 = vpop.permute.xlu0 %2047
        %2049 = vrot.lane.b32.xlu0 %v468, 36
        %v2050 = vpop.permute.xlu0 %2049
        %2051 = vrot.lane.b32.xlu0 %v469, 36
        %v2052 = vpop.permute.xlu0 %2051
        %2053 = vrot.lane.b32.xlu0 %v470, 36
        %v2054 = vpop.permute.xlu0 %2053
        %2055 = vrot.lane.b32.xlu0 %v471, 36
        %v2056 = vpop.permute.xlu0 %2055
        %2057 = vrot.lane.b32.xlu0 %v472, 36
        %v2058 = vpop.permute.xlu0 %2057
        %2059 = vrot.lane.b32.xlu0 %v473, 36
        %v2060 = vpop.permute.xlu0 %2059
        %2061 = vrot.lane.b32.xlu0 %v474, 36
        %v2062 = vpop.permute.xlu0 %2061
        %2063 = vrot.lane.b32.xlu0 %v475, 36
        %v2064 = vpop.permute.xlu0 %2063
        %2065 = vrot.lane.b32.xlu0 %v476, 36
        %v2066 = vpop.permute.xlu0 %2065
        %2067 = vrot.lane.b32.xlu0 %v477, 36
        %v2068 = vpop.permute.xlu0 %2067
        %2069 = vrot.lane.b32.xlu0 %v478, 36
        %v2070 = vpop.permute.xlu0 %2069
        %2071 = vrot.lane.b32.xlu0 %v479, 36
        %v2072 = vpop.permute.xlu0 %2071
        %2073 = vrot.lane.b32.xlu0 %v480, 36
        %v2074 = vpop.permute.xlu0 %2073
        %2075 = vrot.lane.b32.xlu0 %v481, 36
        %v2076 = vpop.permute.xlu0 %2075
        %2077 = vrot.lane.b32.xlu0 %v482, 36
        %v2078 = vpop.permute.xlu0 %2077
        %2079 = vrot.lane.b32.xlu0 %v483, 36
        %v2080 = vpop.permute.xlu0 %2079
        %2081 = vrot.lane.b32.xlu0 %v484, 36
        %v2082 = vpop.permute.xlu0 %2081
        %2083 = vrot.lane.b32.xlu0 %v485, 36
        %v2084 = vpop.permute.xlu0 %2083
        %2085 = vrot.lane.b32.xlu0 %v486, 36
        %v2086 = vpop.permute.xlu0 %2085
        %2087 = vrot.lane.b32.xlu0 %v487, 36
        %v2088 = vpop.permute.xlu0 %2087
        %2089 = vrot.lane.b32.xlu0 %v488, 36
        %v2090 = vpop.permute.xlu0 %2089
        %2091 = vrot.lane.b32.xlu0 %v489, 36
        %v2092 = vpop.permute.xlu0 %2091
        %2157 = vrot.lane.b32.xlu0 %v491, 40
        %v2158 = vpop.permute.xlu0 %2157
        %2159 = vrot.lane.b32.xlu0 %v492, 40
        %v2160 = vpop.permute.xlu0 %2159
        %2161 = vrot.lane.b32.xlu0 %v493, 40
        %v2162 = vpop.permute.xlu0 %2161
        %2163 = vrot.lane.b32.xlu0 %v494, 40
        %v2164 = vpop.permute.xlu0 %2163
        %2165 = vrot.lane.b32.xlu0 %v495, 40
        %v2166 = vpop.permute.xlu0 %2165
        %2167 = vrot.lane.b32.xlu0 %v496, 40
        %v2168 = vpop.permute.xlu0 %2167
        %2169 = vrot.lane.b32.xlu0 %v497, 40
        %v2170 = vpop.permute.xlu0 %2169
        %2171 = vrot.lane.b32.xlu0 %v498, 40
        %v2172 = vpop.permute.xlu0 %2171
        %2173 = vrot.lane.b32.xlu0 %v499, 40
        %v2174 = vpop.permute.xlu0 %2173
        %2175 = vrot.lane.b32.xlu0 %v500, 40
        %v2176 = vpop.permute.xlu0 %2175
        %2177 = vrot.lane.b32.xlu0 %v501, 40
        %v2178 = vpop.permute.xlu0 %2177
        %2179 = vrot.lane.b32.xlu0 %v502, 40
        %v2180 = vpop.permute.xlu0 %2179
        %2181 = vrot.lane.b32.xlu0 %v503, 40
        %v2182 = vpop.permute.xlu0 %2181
        %2183 = vrot.lane.b32.xlu0 %v504, 40
        %v2184 = vpop.permute.xlu0 %2183
        %2185 = vrot.lane.b32.xlu0 %v505, 40
        %v2186 = vpop.permute.xlu0 %2185
        %2187 = vrot.lane.b32.xlu0 %v506, 40
        %v2188 = vpop.permute.xlu0 %2187
        %2189 = vrot.lane.b32.xlu0 %v507, 40
        %v2190 = vpop.permute.xlu0 %2189
        %2191 = vrot.lane.b32.xlu0 %v508, 40
        %v2192 = vpop.permute.xlu0 %2191
        %2193 = vrot.lane.b32.xlu0 %v509, 40
        %v2194 = vpop.permute.xlu0 %2193
        %2195 = vrot.lane.b32.xlu0 %v510, 40
        %v2196 = vpop.permute.xlu0 %2195
        %2197 = vrot.lane.b32.xlu0 %v511, 40
        %v2198 = vpop.permute.xlu0 %2197
        %2199 = vrot.lane.b32.xlu0 %v512, 40
        %v2200 = vpop.permute.xlu0 %2199
        %2201 = vrot.lane.b32.xlu0 %v513, 40
        %v2202 = vpop.permute.xlu0 %2201
        %2203 = vrot.lane.b32.xlu0 %v514, 40
        %v2204 = vpop.permute.xlu0 %2203
        %2205 = vrot.lane.b32.xlu0 %v515, 40
        %v2206 = vpop.permute.xlu0 %2205
        %2207 = vrot.lane.b32.xlu0 %v516, 40
        %v2208 = vpop.permute.xlu0 %2207
        %2209 = vrot.lane.b32.xlu0 %v517, 40
        %v2210 = vpop.permute.xlu0 %2209
        %2211 = vrot.lane.b32.xlu0 %v518, 40
        %v2212 = vpop.permute.xlu0 %2211
        %2213 = vrot.lane.b32.xlu0 %v519, 40
        %v2214 = vpop.permute.xlu0 %2213
        %2215 = vrot.lane.b32.xlu0 %v520, 40
        %v2216 = vpop.permute.xlu0 %2215
        %2217 = vrot.lane.b32.xlu0 %v521, 40
        %v2218 = vpop.permute.xlu0 %2217
        %2219 = vrot.lane.b32.xlu0 %v522, 40
        %v2220 = vpop.permute.xlu0 %2219
        %2285 = vrot.lane.b32.xlu0 %v523, 44
        %v2286 = vpop.permute.xlu0 %2285
        %2287 = vrot.lane.b32.xlu0 %v524, 44
        %v2288 = vpop.permute.xlu0 %2287
        %2289 = vrot.lane.b32.xlu0 %v525, 44
        %v2290 = vpop.permute.xlu0 %2289
        %2291 = vrot.lane.b32.xlu0 %v526, 44
        %v2292 = vpop.permute.xlu0 %2291
        %2293 = vrot.lane.b32.xlu0 %v527, 44
        %v2294 = vpop.permute.xlu0 %2293
        %2295 = vrot.lane.b32.xlu0 %v528, 44
        %v2296 = vpop.permute.xlu0 %2295
        %2297 = vrot.lane.b32.xlu0 %v529, 44
        %v2298 = vpop.permute.xlu0 %2297
        %2299 = vrot.lane.b32.xlu0 %v530, 44
        %v2300 = vpop.permute.xlu0 %2299
        %2301 = vrot.lane.b32.xlu0 %v531, 44
        %v2302 = vpop.permute.xlu0 %2301
        %2303 = vrot.lane.b32.xlu0 %v532, 44
        %v2304 = vpop.permute.xlu0 %2303
        %2305 = vrot.lane.b32.xlu0 %v533, 44
        %v2306 = vpop.permute.xlu0 %2305
        %2307 = vrot.lane.b32.xlu0 %v534, 44
        %v2308 = vpop.permute.xlu0 %2307
        %2309 = vrot.lane.b32.xlu0 %v535, 44
        %v2310 = vpop.permute.xlu0 %2309
        %2311 = vrot.lane.b32.xlu0 %v536, 44
        %v2312 = vpop.permute.xlu0 %2311
        %2313 = vrot.lane.b32.xlu0 %v537, 44
        %v2314 = vpop.permute.xlu0 %2313
        %2315 = vrot.lane.b32.xlu0 %v538, 44
        %v2316 = vpop.permute.xlu0 %2315
        %2317 = vrot.lane.b32.xlu0 %v539, 44
        %v2318 = vpop.permute.xlu0 %2317
        %2319 = vrot.lane.b32.xlu0 %v540, 44
        %v2320 = vpop.permute.xlu0 %2319
        %2321 = vrot.lane.b32.xlu0 %v541, 44
        %v2322 = vpop.permute.xlu0 %2321
        %2323 = vrot.lane.b32.xlu0 %v542, 44
        %v2324 = vpop.permute.xlu0 %2323
        %2325 = vrot.lane.b32.xlu0 %v543, 44
        %v2326 = vpop.permute.xlu0 %2325
        %2327 = vrot.lane.b32.xlu0 %v544, 44
        %v2328 = vpop.permute.xlu0 %2327
        %2329 = vrot.lane.b32.xlu0 %v545, 44
        %v2330 = vpop.permute.xlu0 %2329
        %2331 = vrot.lane.b32.xlu0 %v546, 44
        %v2332 = vpop.permute.xlu0 %2331
        %2333 = vrot.lane.b32.xlu0 %v547, 44
        %v2334 = vpop.permute.xlu0 %2333
        %2335 = vrot.lane.b32.xlu0 %v548, 44
        %v2336 = vpop.permute.xlu0 %2335
        %2337 = vrot.lane.b32.xlu0 %v549, 44
        %v2338 = vpop.permute.xlu0 %2337
        %2339 = vrot.lane.b32.xlu0 %v550, 44
        %v2340 = vpop.permute.xlu0 %2339
        %2341 = vrot.lane.b32.xlu0 %v551, 44
        %v2342 = vpop.permute.xlu0 %2341
        %2343 = vrot.lane.b32.xlu0 %v552, 44
        %v2344 = vpop.permute.xlu0 %2343
        %2345 = vrot.lane.b32.xlu0 %v553, 44
        %v2346 = vpop.permute.xlu0 %2345
        %2347 = vrot.lane.b32.xlu0 %v554, 44
        %v2348 = vpop.permute.xlu0 %2347
        %2413 = vrot.lane.b32.xlu0 %v555, 48
        %v2414 = vpop.permute.xlu0 %2413
        %2415 = vrot.lane.b32.xlu0 %v556, 48
        %v2416 = vpop.permute.xlu0 %2415
        %2417 = vrot.lane.b32.xlu0 %v557, 48
        %v2418 = vpop.permute.xlu0 %2417
        %2419 = vrot.lane.b32.xlu0 %v558, 48
        %v2420 = vpop.permute.xlu0 %2419
        %2421 = vrot.lane.b32.xlu0 %v559, 48
        %v2422 = vpop.permute.xlu0 %2421
        %2423 = vrot.lane.b32.xlu0 %v560, 48
        %v2424 = vpop.permute.xlu0 %2423
        %2425 = vrot.lane.b32.xlu0 %v561, 48
        %v2426 = vpop.permute.xlu0 %2425
        %2427 = vrot.lane.b32.xlu0 %v562, 48
        %v2428 = vpop.permute.xlu0 %2427
        %2429 = vrot.lane.b32.xlu0 %v563, 48
        %v2430 = vpop.permute.xlu0 %2429
        %2431 = vrot.lane.b32.xlu0 %v564, 48
        %v2432 = vpop.permute.xlu0 %2431
        %2433 = vrot.lane.b32.xlu0 %v565, 48
        %v2434 = vpop.permute.xlu0 %2433
        %2435 = vrot.lane.b32.xlu0 %v566, 48
        %v2436 = vpop.permute.xlu0 %2435
        %2437 = vrot.lane.b32.xlu0 %v567, 48
        %v2438 = vpop.permute.xlu0 %2437
        %2439 = vrot.lane.b32.xlu0 %v568, 48
        %v2440 = vpop.permute.xlu0 %2439
        %2441 = vrot.lane.b32.xlu0 %v569, 48
        %v2442 = vpop.permute.xlu0 %2441
        %2443 = vrot.lane.b32.xlu0 %v570, 48
        %v2444 = vpop.permute.xlu0 %2443
        %2445 = vrot.lane.b32.xlu0 %v571, 48
        %v2446 = vpop.permute.xlu0 %2445
        %2447 = vrot.lane.b32.xlu0 %v572, 48
        %v2448 = vpop.permute.xlu0 %2447
        %2449 = vrot.lane.b32.xlu0 %v573, 48
        %v2450 = vpop.permute.xlu0 %2449
        %2451 = vrot.lane.b32.xlu0 %v574, 48
        %v2452 = vpop.permute.xlu0 %2451
        %2453 = vrot.lane.b32.xlu0 %v575, 48
        %v2454 = vpop.permute.xlu0 %2453
        %2455 = vrot.lane.b32.xlu0 %v576, 48
        %v2456 = vpop.permute.xlu0 %2455
        %2457 = vrot.lane.b32.xlu0 %v577, 48
        %v2458 = vpop.permute.xlu0 %2457
        %2459 = vrot.lane.b32.xlu0 %v578, 48
        %v2460 = vpop.permute.xlu0 %2459
        %2461 = vrot.lane.b32.xlu0 %v579, 48
        %v2462 = vpop.permute.xlu0 %2461
        %2463 = vrot.lane.b32.xlu0 %v580, 48
        %v2464 = vpop.permute.xlu0 %2463
        %2465 = vrot.lane.b32.xlu0 %v581, 48
        %v2466 = vpop.permute.xlu0 %2465
        %2467 = vrot.lane.b32.xlu0 %v582, 48
        %v2468 = vpop.permute.xlu0 %2467
        %2469 = vrot.lane.b32.xlu0 %v583, 48
        %v2470 = vpop.permute.xlu0 %2469
        %2471 = vrot.lane.b32.xlu0 %v584, 48
        %v2472 = vpop.permute.xlu0 %2471
        %2473 = vrot.lane.b32.xlu0 %v585, 48
        %v2474 = vpop.permute.xlu0 %2473
        %2475 = vrot.lane.b32.xlu0 %v586, 48
        %v2476 = vpop.permute.xlu0 %2475
        %2541 = vrot.lane.b32.xlu0 %v587, 52
        %v2542 = vpop.permute.xlu0 %2541
        %2543 = vrot.lane.b32.xlu0 %v588, 52
        %v2544 = vpop.permute.xlu0 %2543
        %2545 = vrot.lane.b32.xlu0 %v589, 52
        %v2546 = vpop.permute.xlu0 %2545
        %2547 = vrot.lane.b32.xlu0 %v590, 52
        %v2548 = vpop.permute.xlu0 %2547
        %2549 = vrot.lane.b32.xlu0 %v591, 52
        %v2550 = vpop.permute.xlu0 %2549
        %2551 = vrot.lane.b32.xlu0 %v592, 52
        %v2552 = vpop.permute.xlu0 %2551
        %2553 = vrot.lane.b32.xlu0 %v593, 52
        %v2554 = vpop.permute.xlu0 %2553
        %2555 = vrot.lane.b32.xlu0 %v594, 52
        %v2556 = vpop.permute.xlu0 %2555
        %2557 = vrot.lane.b32.xlu0 %v595, 52
        %v2558 = vpop.permute.xlu0 %2557
        %2559 = vrot.lane.b32.xlu0 %v596, 52
        %v2560 = vpop.permute.xlu0 %2559
        %2561 = vrot.lane.b32.xlu0 %v597, 52
        %v2562 = vpop.permute.xlu0 %2561
        %2563 = vrot.lane.b32.xlu0 %v598, 52
        %v2564 = vpop.permute.xlu0 %2563
        %2565 = vrot.lane.b32.xlu0 %v599, 52
        %v2566 = vpop.permute.xlu0 %2565
        %2567 = vrot.lane.b32.xlu0 %v600, 52
        %v2568 = vpop.permute.xlu0 %2567
        %2569 = vrot.lane.b32.xlu0 %v601, 52
        %v2570 = vpop.permute.xlu0 %2569
        %2571 = vrot.lane.b32.xlu0 %v602, 52
        %v2572 = vpop.permute.xlu0 %2571
        %2573 = vrot.lane.b32.xlu0 %v603, 52
        %v2574 = vpop.permute.xlu0 %2573
        %2575 = vrot.lane.b32.xlu0 %v604, 52
        %v2576 = vpop.permute.xlu0 %2575
        %2577 = vrot.lane.b32.xlu0 %v605, 52
        %v2578 = vpop.permute.xlu0 %2577
        %2579 = vrot.lane.b32.xlu0 %v606, 52
        %v2580 = vpop.permute.xlu0 %2579
        %2581 = vrot.lane.b32.xlu0 %v607, 52
        %v2582 = vpop.permute.xlu0 %2581
        %2583 = vrot.lane.b32.xlu0 %v608, 52
        %v2584 = vpop.permute.xlu0 %2583
        %2585 = vrot.lane.b32.xlu0 %v609, 52
        %v2586 = vpop.permute.xlu0 %2585
        %2587 = vrot.lane.b32.xlu0 %v610, 52
        %v2588 = vpop.permute.xlu0 %2587
        %2589 = vrot.lane.b32.xlu0 %v611, 52
        %v2590 = vpop.permute.xlu0 %2589
        %2591 = vrot.lane.b32.xlu0 %v612, 52
        %v2592 = vpop.permute.xlu0 %2591
        %2593 = vrot.lane.b32.xlu0 %v613, 52
        %v2594 = vpop.permute.xlu0 %2593
        %2595 = vrot.lane.b32.xlu0 %v614, 52
        %v2596 = vpop.permute.xlu0 %2595
        %2597 = vrot.lane.b32.xlu0 %v615, 52
        %v2598 = vpop.permute.xlu0 %2597
        %2599 = vrot.lane.b32.xlu0 %v616, 52
        %v2600 = vpop.permute.xlu0 %2599
        %2601 = vrot.lane.b32.xlu0 %v617, 52
        %v2602 = vpop.permute.xlu0 %2601
        %2603 = vrot.lane.b32.xlu0 %v618, 52
        %v2604 = vpop.permute.xlu0 %2603
        %2669 = vrot.lane.b32.xlu0 %v619, 56
        %v2670 = vpop.permute.xlu0 %2669
        %2671 = vrot.lane.b32.xlu0 %v620, 56
        %v2672 = vpop.permute.xlu0 %2671
        %2673 = vrot.lane.b32.xlu0 %v621, 56
        %v2674 = vpop.permute.xlu0 %2673
        %2675 = vrot.lane.b32.xlu0 %v622, 56
        %v2676 = vpop.permute.xlu0 %2675
        %2677 = vrot.lane.b32.xlu0 %v623, 56
        %v2678 = vpop.permute.xlu0 %2677
        %2679 = vrot.lane.b32.xlu0 %v624, 56
        %v2680 = vpop.permute.xlu0 %2679
        %2681 = vrot.lane.b32.xlu0 %v625, 56
        %v2682 = vpop.permute.xlu0 %2681
        %2683 = vrot.lane.b32.xlu0 %v626, 56
        %v2684 = vpop.permute.xlu0 %2683
        %2685 = vrot.lane.b32.xlu0 %v627, 56
        %v2686 = vpop.permute.xlu0 %2685
        %2687 = vrot.lane.b32.xlu0 %v628, 56
        %v2688 = vpop.permute.xlu0 %2687
        %2689 = vrot.lane.b32.xlu0 %v629, 56
        %v2690 = vpop.permute.xlu0 %2689
        %2691 = vrot.lane.b32.xlu0 %v630, 56
        %v2692 = vpop.permute.xlu0 %2691
        %2693 = vrot.lane.b32.xlu0 %v631, 56
        %v2694 = vpop.permute.xlu0 %2693
        %2695 = vrot.lane.b32.xlu0 %v632, 56
        %v2696 = vpop.permute.xlu0 %2695
        %2697 = vrot.lane.b32.xlu0 %v633, 56
        %v2698 = vpop.permute.xlu0 %2697
        %2699 = vrot.lane.b32.xlu0 %v634, 56
        %v2700 = vpop.permute.xlu0 %2699
        %2701 = vrot.lane.b32.xlu0 %v635, 56
        %v2702 = vpop.permute.xlu0 %2701
        %2703 = vrot.lane.b32.xlu0 %v636, 56
        %v2704 = vpop.permute.xlu0 %2703
        %2705 = vrot.lane.b32.xlu0 %v637, 56
        %v2706 = vpop.permute.xlu0 %2705
        %2707 = vrot.lane.b32.xlu0 %v638, 56
        %v2708 = vpop.permute.xlu0 %2707
        %2709 = vrot.lane.b32.xlu0 %v639, 56
        %v2710 = vpop.permute.xlu0 %2709
        %2711 = vrot.lane.b32.xlu0 %v640, 56
        %v2712 = vpop.permute.xlu0 %2711
        %2713 = vrot.lane.b32.xlu0 %v641, 56
        %v2714 = vpop.permute.xlu0 %2713
        %2715 = vrot.lane.b32.xlu0 %v642, 56
        %v2716 = vpop.permute.xlu0 %2715
        %2717 = vrot.lane.b32.xlu0 %v643, 56
        %v2718 = vpop.permute.xlu0 %2717
        %2719 = vrot.lane.b32.xlu0 %v644, 56
        %v2720 = vpop.permute.xlu0 %2719
        %2721 = vrot.lane.b32.xlu0 %v645, 56
        %v2722 = vpop.permute.xlu0 %2721
        %2723 = vrot.lane.b32.xlu0 %v646, 56
        %v2724 = vpop.permute.xlu0 %2723
        %2725 = vrot.lane.b32.xlu0 %v647, 56
        %v2726 = vpop.permute.xlu0 %2725
        %2727 = vrot.lane.b32.xlu0 %v648, 56
        %v2728 = vpop.permute.xlu0 %2727
        %2729 = vrot.lane.b32.xlu0 %v649, 56
        %v2730 = vpop.permute.xlu0 %2729
        %2731 = vrot.lane.b32.xlu0 %v650, 56
        %v2732 = vpop.permute.xlu0 %2731
        %2797 = vrot.lane.b32.xlu0 %v652, 60
        %v2798 = vpop.permute.xlu0 %2797
        %2799 = vrot.lane.b32.xlu0 %v653, 60
        %v2800 = vpop.permute.xlu0 %2799
        %2801 = vrot.lane.b32.xlu0 %v654, 60
        %v2802 = vpop.permute.xlu0 %2801
        %2803 = vrot.lane.b32.xlu0 %v655, 60
        %v2804 = vpop.permute.xlu0 %2803
        %2805 = vrot.lane.b32.xlu0 %v656, 60
        %v2806 = vpop.permute.xlu0 %2805
        %2807 = vrot.lane.b32.xlu0 %v657, 60
        %v2808 = vpop.permute.xlu0 %2807
        %2809 = vrot.lane.b32.xlu0 %v658, 60
        %v2810 = vpop.permute.xlu0 %2809
        %2811 = vrot.lane.b32.xlu0 %v659, 60
        %v2812 = vpop.permute.xlu0 %2811
        %2813 = vrot.lane.b32.xlu0 %v660, 60
        %v2814 = vpop.permute.xlu0 %2813
        %2815 = vrot.lane.b32.xlu0 %v661, 60
        %v2816 = vpop.permute.xlu0 %2815
        %2817 = vrot.lane.b32.xlu0 %v662, 60
        %v2818 = vpop.permute.xlu0 %2817
        %2819 = vrot.lane.b32.xlu0 %v663, 60
        %v2820 = vpop.permute.xlu0 %2819
        %2821 = vrot.lane.b32.xlu0 %v664, 60
        %v2822 = vpop.permute.xlu0 %2821
        %2823 = vrot.lane.b32.xlu0 %v665, 60
        %v2824 = vpop.permute.xlu0 %2823
        %2825 = vrot.lane.b32.xlu0 %v666, 60
        %v2826 = vpop.permute.xlu0 %2825
        %2827 = vrot.lane.b32.xlu0 %v667, 60
        %v2828 = vpop.permute.xlu0 %2827
        %2829 = vrot.lane.b32.xlu0 %v668, 60
        %v2830 = vpop.permute.xlu0 %2829
        %2831 = vrot.lane.b32.xlu0 %v669, 60
        %v2832 = vpop.permute.xlu0 %2831
        %2833 = vrot.lane.b32.xlu0 %v670, 60
        %v2834 = vpop.permute.xlu0 %2833
        %2835 = vrot.lane.b32.xlu0 %v671, 60
        %v2836 = vpop.permute.xlu0 %2835
        %2837 = vrot.lane.b32.xlu0 %v672, 60
        %v2838 = vpop.permute.xlu0 %2837
        %2839 = vrot.lane.b32.xlu0 %v673, 60
        %v2840 = vpop.permute.xlu0 %2839
        %2841 = vrot.lane.b32.xlu0 %v674, 60
        %v2842 = vpop.permute.xlu0 %2841
        %2843 = vrot.lane.b32.xlu0 %v675, 60
        %v2844 = vpop.permute.xlu0 %2843
        %2845 = vrot.lane.b32.xlu0 %v676, 60
        %v2846 = vpop.permute.xlu0 %2845
        %2847 = vrot.lane.b32.xlu0 %v677, 60
        %v2848 = vpop.permute.xlu0 %2847
        %2849 = vrot.lane.b32.xlu0 %v678, 60
        %v2850 = vpop.permute.xlu0 %2849
        %2851 = vrot.lane.b32.xlu0 %v679, 60
        %v2852 = vpop.permute.xlu0 %2851
        %2853 = vrot.lane.b32.xlu0 %v680, 60
        %v2854 = vpop.permute.xlu0 %2853
        %2855 = vrot.lane.b32.xlu0 %v681, 60
        %v2856 = vpop.permute.xlu0 %2855
        %2857 = vrot.lane.b32.xlu0 %v682, 60
        %v2858 = vpop.permute.xlu0 %2857
        %2859 = vrot.lane.b32.xlu0 %v683, 60
        %v2860 = vpop.permute.xlu0 %2859
        %vm2893 = vcmask 31744
        %v2894 = vsel %vm2893, %v169, %v1006
        %v2895 = vsel %vm2893, %v170, %v1008
        %v2896 = vsel %vm2893, %v171, %v1010
        %v2897 = vsel %vm2893, %v172, %v1012
        %v2898 = vsel %vm2893, %v173, %v1014
        %v2899 = vsel %vm2893, %v174, %v1016
        %v2900 = vsel %vm2893, %v175, %v1018
        %v2901 = vsel %vm2893, %v176, %v1020
        %v2902 = vsel %vm2893, %v177, %v1022
        %v2903 = vsel %vm2893, %v178, %v1024
        %v2904 = vsel %vm2893, %v179, %v1026
        %v2905 = vsel %vm2893, %v180, %v1028
        %v2906 = vsel %vm2893, %v181, %v1030
        %v2907 = vsel %vm2893, %v182, %v1032
        %v2908 = vsel %vm2893, %v183, %v1034
        %v2909 = vsel %vm2893, %v184, %v1036
        %v2910 = vsel %vm2893, %v185, %v1038
        %v2911 = vsel %vm2893, %v186, %v1040
        %v2912 = vsel %vm2893, %v187, %v1042
        %v2913 = vsel %vm2893, %v188, %v1044
        %v2914 = vsel %vm2893, %v189, %v1046
        %v2915 = vsel %vm2893, %v190, %v1048
        %v2916 = vsel %vm2893, %v191, %v1050
        %v2917 = vsel %vm2893, %v192, %v1052
        %v2918 = vsel %vm2893, %v193, %v1054
        %v2919 = vsel %vm2893, %v194, %v1056
        %v2920 = vsel %vm2893, %v195, %v1058
        %v2921 = vsel %vm2893, %v196, %v1060
        %v2922 = vsel %vm2893, %v197, %v1062
        %v2923 = vsel %vm2893, %v198, %v1064
        %v2924 = vsel %vm2893, %v199, %v1066
        %v2925 = vsel %vm2893, %v200, %v1068
        %vm2926 = vcmask 64512
        %v2927 = vsel %vm2926, %v2894, %v1134
        %v2928 = vsel %vm2926, %v2895, %v1136
        %v2929 = vsel %vm2926, %v2896, %v1138
        %v2930 = vsel %vm2926, %v2897, %v1140
        %v2931 = vsel %vm2926, %v2898, %v1142
        %v2932 = vsel %vm2926, %v2899, %v1144
        %v2933 = vsel %vm2926, %v2900, %v1146
        %v2934 = vsel %vm2926, %v2901, %v1148
        %v2935 = vsel %vm2926, %v2902, %v1150
        %v2936 = vsel %vm2926, %v2903, %v1152
        %v2937 = vsel %vm2926, %v2904, %v1154
        %v2938 = vsel %vm2926, %v2905, %v1156
        %v2939 = vsel %vm2926, %v2906, %v1158
        %v2940 = vsel %vm2926, %v2907, %v1160
        %v2941 = vsel %vm2926, %v2908, %v1162
        %v2942 = vsel %vm2926, %v2909, %v1164
        %v2943 = vsel %vm2926, %v2910, %v1166
        %v2944 = vsel %vm2926, %v2911, %v1168
        %v2945 = vsel %vm2926, %v2912, %v1170
        %v2946 = vsel %vm2926, %v2913, %v1172
        %v2947 = vsel %vm2926, %v2914, %v1174
        %v2948 = vsel %vm2926, %v2915, %v1176
        %v2949 = vsel %vm2926, %v2916, %v1178
        %v2950 = vsel %vm2926, %v2917, %v1180
        %v2951 = vsel %vm2926, %v2918, %v1182
        %v2952 = vsel %vm2926, %v2919, %v1184
        %v2953 = vsel %vm2926, %v2920, %v1186
        %v2954 = vsel %vm2926, %v2921, %v1188
        %v2955 = vsel %vm2926, %v2922, %v1190
        %v2956 = vsel %vm2926, %v2923, %v1192
        %v2957 = vsel %vm2926, %v2924, %v1194
        %v2958 = vsel %vm2926, %v2925, %v1196
        %vm2959 = vcmask 97280
        %v2960 = vsel %vm2959, %v2927, %v1262
        %v2961 = vsel %vm2959, %v2928, %v1264
        %v2962 = vsel %vm2959, %v2929, %v1266
        %v2963 = vsel %vm2959, %v2930, %v1268
        %v2964 = vsel %vm2959, %v2931, %v1270
        %v2965 = vsel %vm2959, %v2932, %v1272
        %v2966 = vsel %vm2959, %v2933, %v1274
        %v2967 = vsel %vm2959, %v2934, %v1276
        %v2968 = vsel %vm2959, %v2935, %v1278
        %v2969 = vsel %vm2959, %v2936, %v1280
        %v2970 = vsel %vm2959, %v2937, %v1282
        %v2971 = vsel %vm2959, %v2938, %v1284
        %v2972 = vsel %vm2959, %v2939, %v1286
        %v2973 = vsel %vm2959, %v2940, %v1288
        %v2974 = vsel %vm2959, %v2941, %v1290
        %v2975 = vsel %vm2959, %v2942, %v1292
        %v2976 = vsel %vm2959, %v2943, %v1294
        %v2977 = vsel %vm2959, %v2944, %v1296
        %v2978 = vsel %vm2959, %v2945, %v1298
        %v2979 = vsel %vm2959, %v2946, %v1300
        %v2980 = vsel %vm2959, %v2947, %v1302
        %v2981 = vsel %vm2959, %v2948, %v1304
        %v2982 = vsel %vm2959, %v2949, %v1306
        %v2983 = vsel %vm2959, %v2950, %v1308
        %v2984 = vsel %vm2959, %v2951, %v1310
        %v2985 = vsel %vm2959, %v2952, %v1312
        %v2986 = vsel %vm2959, %v2953, %v1314
        %v2987 = vsel %vm2959, %v2954, %v1316
        %v2988 = vsel %vm2959, %v2955, %v1318
        %v2989 = vsel %vm2959, %v2956, %v1320
        %v2990 = vsel %vm2959, %v2957, %v1322
        %v2991 = vsel %vm2959, %v2958, %v1324
        %vm2992 = vcmask 130048
        %v2993 = vsel %vm2992, %v2960, %v1390
        %v2994 = vsel %vm2992, %v2961, %v1392
        %v2995 = vsel %vm2992, %v2962, %v1394
        %v2996 = vsel %vm2992, %v2963, %v1396
        %v2997 = vsel %vm2992, %v2964, %v1398
        %v2998 = vsel %vm2992, %v2965, %v1400
        %v2999 = vsel %vm2992, %v2966, %v1402
        %v3000 = vsel %vm2992, %v2967, %v1404
        %v3001 = vsel %vm2992, %v2968, %v1406
        %v3002 = vsel %vm2992, %v2969, %v1408
        %v3003 = vsel %vm2992, %v2970, %v1410
        %v3004 = vsel %vm2992, %v2971, %v1412
        %v3005 = vsel %vm2992, %v2972, %v1414
        %v3006 = vsel %vm2992, %v2973, %v1416
        %v3007 = vsel %vm2992, %v2974, %v1418
        %v3008 = vsel %vm2992, %v2975, %v1420
        %v3009 = vsel %vm2992, %v2976, %v1422
        %v3010 = vsel %vm2992, %v2977, %v1424
        %v3011 = vsel %vm2992, %v2978, %v1426
        %v3012 = vsel %vm2992, %v2979, %v1428
        %v3013 = vsel %vm2992, %v2980, %v1430
        %v3014 = vsel %vm2992, %v2981, %v1432
        %v3015 = vsel %vm2992, %v2982, %v1434
        %v3016 = vsel %vm2992, %v2983, %v1436
        %v3017 = vsel %vm2992, %v2984, %v1438
        %v3018 = vsel %vm2992, %v2985, %v1440
        %v3019 = vsel %vm2992, %v2986, %v1442
        %v3020 = vsel %vm2992, %v2987, %v1444
        %v3021 = vsel %vm2992, %v2988, %v1446
        %v3022 = vsel %vm2992, %v2989, %v1448
        %v3023 = vsel %vm2992, %v2990, %v1450
        %v3024 = vsel %vm2992, %v2991, %v1452
        %vm3025 = vcmask 162816
        %v3026 = vsel %vm3025, %v2993, %v1518
        %v3027 = vsel %vm3025, %v2994, %v1520
        %v3028 = vsel %vm3025, %v2995, %v1522
        %v3029 = vsel %vm3025, %v2996, %v1524
        %v3030 = vsel %vm3025, %v2997, %v1526
        %v3031 = vsel %vm3025, %v2998, %v1528
        %v3032 = vsel %vm3025, %v2999, %v1530
        %v3033 = vsel %vm3025, %v3000, %v1532
        %v3034 = vsel %vm3025, %v3001, %v1534
        %v3035 = vsel %vm3025, %v3002, %v1536
        %v3036 = vsel %vm3025, %v3003, %v1538
        %v3037 = vsel %vm3025, %v3004, %v1540
        %v3038 = vsel %vm3025, %v3005, %v1542
        %v3039 = vsel %vm3025, %v3006, %v1544
        %v3040 = vsel %vm3025, %v3007, %v1546
        %v3041 = vsel %vm3025, %v3008, %v1548
        %v3042 = vsel %vm3025, %v3009, %v1550
        %v3043 = vsel %vm3025, %v3010, %v1552
        %v3044 = vsel %vm3025, %v3011, %v1554
        %v3045 = vsel %vm3025, %v3012, %v1556
        %v3046 = vsel %vm3025, %v3013, %v1558
        %v3047 = vsel %vm3025, %v3014, %v1560
        %v3048 = vsel %vm3025, %v3015, %v1562
        %v3049 = vsel %vm3025, %v3016, %v1564
        %v3050 = vsel %vm3025, %v3017, %v1566
        %v3051 = vsel %vm3025, %v3018, %v1568
        %v3052 = vsel %vm3025, %v3019, %v1570
        %v3053 = vsel %vm3025, %v3020, %v1572
        %v3054 = vsel %vm3025, %v3021, %v1574
        %v3055 = vsel %vm3025, %v3022, %v1576
        %v3056 = vsel %vm3025, %v3023, %v1578
        %v3057 = vsel %vm3025, %v3024, %v1580
        %vm3058 = vcmask 195584
        %v3059 = vsel %vm3058, %v3026, %v1646
        %v3060 = vsel %vm3058, %v3027, %v1648
        %v3061 = vsel %vm3058, %v3028, %v1650
        %v3062 = vsel %vm3058, %v3029, %v1652
        %v3063 = vsel %vm3058, %v3030, %v1654
        %v3064 = vsel %vm3058, %v3031, %v1656
        %v3065 = vsel %vm3058, %v3032, %v1658
        %v3066 = vsel %vm3058, %v3033, %v1660
        %v3067 = vsel %vm3058, %v3034, %v1662
        %v3068 = vsel %vm3058, %v3035, %v1664
        %v3069 = vsel %vm3058, %v3036, %v1666
        %v3070 = vsel %vm3058, %v3037, %v1668
        %v3071 = vsel %vm3058, %v3038, %v1670
        %v3072 = vsel %vm3058, %v3039, %v1672
        %v3073 = vsel %vm3058, %v3040, %v1674
        %v3074 = vsel %vm3058, %v3041, %v1676
        %v3075 = vsel %vm3058, %v3042, %v1678
        %v3076 = vsel %vm3058, %v3043, %v1680
        %v3077 = vsel %vm3058, %v3044, %v1682
        %v3078 = vsel %vm3058, %v3045, %v1684
        %v3079 = vsel %vm3058, %v3046, %v1686
        %v3080 = vsel %vm3058, %v3047, %v1688
        %v3081 = vsel %vm3058, %v3048, %v1690
        %v3082 = vsel %vm3058, %v3049, %v1692
        %v3083 = vsel %vm3058, %v3050, %v1694
        %v3084 = vsel %vm3058, %v3051, %v1696
        %v3085 = vsel %vm3058, %v3052, %v1698
        %v3086 = vsel %vm3058, %v3053, %v1700
        %v3087 = vsel %vm3058, %v3054, %v1702
        %v3088 = vsel %vm3058, %v3055, %v1704
        %v3089 = vsel %vm3058, %v3056, %v1706
        %v3090 = vsel %vm3058, %v3057, %v1708
        %vm3091 = vcmask 228352
        %v3092 = vsel %vm3091, %v3059, %v1774
        %v3093 = vsel %vm3091, %v3060, %v1776
        %v3094 = vsel %vm3091, %v3061, %v1778
        %v3095 = vsel %vm3091, %v3062, %v1780
        %v3096 = vsel %vm3091, %v3063, %v1782
        %v3097 = vsel %vm3091, %v3064, %v1784
        %v3098 = vsel %vm3091, %v3065, %v1786
        %v3099 = vsel %vm3091, %v3066, %v1788
        %v3100 = vsel %vm3091, %v3067, %v1790
        %v3101 = vsel %vm3091, %v3068, %v1792
        %v3102 = vsel %vm3091, %v3069, %v1794
        %v3103 = vsel %vm3091, %v3070, %v1796
        %v3104 = vsel %vm3091, %v3071, %v1798
        %v3105 = vsel %vm3091, %v3072, %v1800
        %v3106 = vsel %vm3091, %v3073, %v1802
        %v3107 = vsel %vm3091, %v3074, %v1804
        %v3108 = vsel %vm3091, %v3075, %v1806
        %v3109 = vsel %vm3091, %v3076, %v1808
        %v3110 = vsel %vm3091, %v3077, %v1810
        %v3111 = vsel %vm3091, %v3078, %v1812
        %v3112 = vsel %vm3091, %v3079, %v1814
        %v3113 = vsel %vm3091, %v3080, %v1816
        %v3114 = vsel %vm3091, %v3081, %v1818
        %v3115 = vsel %vm3091, %v3082, %v1820
        %v3116 = vsel %vm3091, %v3083, %v1822
        %v3117 = vsel %vm3091, %v3084, %v1824
        %v3118 = vsel %vm3091, %v3085, %v1826
        %v3119 = vsel %vm3091, %v3086, %v1828
        %v3120 = vsel %vm3091, %v3087, %v1830
        %v3121 = vsel %vm3091, %v3088, %v1832
        %v3122 = vsel %vm3091, %v3089, %v1834
        %v3123 = vsel %vm3091, %v3090, %v1836
        %vm3124 = vcmask 261120
        %v3125 = vsel %vm3124, %v3092, %v1902
        %v3126 = vsel %vm3124, %v3093, %v1904
        %v3127 = vsel %vm3124, %v3094, %v1906
        %v3128 = vsel %vm3124, %v3095, %v1908
        %v3129 = vsel %vm3124, %v3096, %v1910
        %v3130 = vsel %vm3124, %v3097, %v1912
        %v3131 = vsel %vm3124, %v3098, %v1914
        %v3132 = vsel %vm3124, %v3099, %v1916
        %v3133 = vsel %vm3124, %v3100, %v1918
        %v3134 = vsel %vm3124, %v3101, %v1920
        %v3135 = vsel %vm3124, %v3102, %v1922
        %v3136 = vsel %vm3124, %v3103, %v1924
        %v3137 = vsel %vm3124, %v3104, %v1926
        %v3138 = vsel %vm3124, %v3105, %v1928
        %v3139 = vsel %vm3124, %v3106, %v1930
        %v3140 = vsel %vm3124, %v3107, %v1932
        %v3141 = vsel %vm3124, %v3108, %v1934
        %v3142 = vsel %vm3124, %v3109, %v1936
        %v3143 = vsel %vm3124, %v3110, %v1938
        %v3144 = vsel %vm3124, %v3111, %v1940
        %v3145 = vsel %vm3124, %v3112, %v1942
        %v3146 = vsel %vm3124, %v3113, %v1944
        %v3147 = vsel %vm3124, %v3114, %v1946
        %v3148 = vsel %vm3124, %v3115, %v1948
        %v3149 = vsel %vm3124, %v3116, %v1950
        %v3150 = vsel %vm3124, %v3117, %v1952
        %v3151 = vsel %vm3124, %v3118, %v1954
        %v3152 = vsel %vm3124, %v3119, %v1956
        %v3153 = vsel %vm3124, %v3120, %v1958
        %v3154 = vsel %vm3124, %v3121, %v1960
        %v3155 = vsel %vm3124, %v3122, %v1962
        %v3156 = vsel %vm3124, %v3123, %v1964
        %vm3157 = vcmask 293888
        %v3158 = vsel %vm3157, %v3125, %v2030
        %v3159 = vsel %vm3157, %v3126, %v2032
        %v3160 = vsel %vm3157, %v3127, %v2034
        %v3161 = vsel %vm3157, %v3128, %v2036
        %v3162 = vsel %vm3157, %v3129, %v2038
        %v3163 = vsel %vm3157, %v3130, %v2040
        %v3164 = vsel %vm3157, %v3131, %v2042
        %v3165 = vsel %vm3157, %v3132, %v2044
        %v3166 = vsel %vm3157, %v3133, %v2046
        %v3167 = vsel %vm3157, %v3134, %v2048
        %v3168 = vsel %vm3157, %v3135, %v2050
        %v3169 = vsel %vm3157, %v3136, %v2052
        %v3170 = vsel %vm3157, %v3137, %v2054
        %v3171 = vsel %vm3157, %v3138, %v2056
        %v3172 = vsel %vm3157, %v3139, %v2058
        %v3173 = vsel %vm3157, %v3140, %v2060
        %v3174 = vsel %vm3157, %v3141, %v2062
        %v3175 = vsel %vm3157, %v3142, %v2064
        %v3176 = vsel %vm3157, %v3143, %v2066
        %v3177 = vsel %vm3157, %v3144, %v2068
        %v3178 = vsel %vm3157, %v3145, %v2070
        %v3179 = vsel %vm3157, %v3146, %v2072
        %v3180 = vsel %vm3157, %v3147, %v2074
        %v3181 = vsel %vm3157, %v3148, %v2076
        %v3182 = vsel %vm3157, %v3149, %v2078
        %v3183 = vsel %vm3157, %v3150, %v2080
        %v3184 = vsel %vm3157, %v3151, %v2082
        %v3185 = vsel %vm3157, %v3152, %v2084
        %v3186 = vsel %vm3157, %v3153, %v2086
        %v3187 = vsel %vm3157, %v3154, %v2088
        %v3188 = vsel %vm3157, %v3155, %v2090
        %v3189 = vsel %vm3157, %v3156, %v2092
        %vm3190 = vcmask 326656
        %v3191 = vsel %vm3190, %v3158, %v2158
        %v3192 = vsel %vm3190, %v3159, %v2160
        %v3193 = vsel %vm3190, %v3160, %v2162
        %v3194 = vsel %vm3190, %v3161, %v2164
        %v3195 = vsel %vm3190, %v3162, %v2166
        %v3196 = vsel %vm3190, %v3163, %v2168
        %v3197 = vsel %vm3190, %v3164, %v2170
        %v3198 = vsel %vm3190, %v3165, %v2172
        %v3199 = vsel %vm3190, %v3166, %v2174
        %v3200 = vsel %vm3190, %v3167, %v2176
        %v3201 = vsel %vm3190, %v3168, %v2178
        %v3202 = vsel %vm3190, %v3169, %v2180
        %v3203 = vsel %vm3190, %v3170, %v2182
        %v3204 = vsel %vm3190, %v3171, %v2184
        %v3205 = vsel %vm3190, %v3172, %v2186
        %v3206 = vsel %vm3190, %v3173, %v2188
        %v3207 = vsel %vm3190, %v3174, %v2190
        %v3208 = vsel %vm3190, %v3175, %v2192
        %v3209 = vsel %vm3190, %v3176, %v2194
        %v3210 = vsel %vm3190, %v3177, %v2196
        %v3211 = vsel %vm3190, %v3178, %v2198
        %v3212 = vsel %vm3190, %v3179, %v2200
        %v3213 = vsel %vm3190, %v3180, %v2202
        %v3214 = vsel %vm3190, %v3181, %v2204
        %v3215 = vsel %vm3190, %v3182, %v2206
        %v3216 = vsel %vm3190, %v3183, %v2208
        %v3217 = vsel %vm3190, %v3184, %v2210
        %v3218 = vsel %vm3190, %v3185, %v2212
        %v3219 = vsel %vm3190, %v3186, %v2214
        %v3220 = vsel %vm3190, %v3187, %v2216
        %v3221 = vsel %vm3190, %v3188, %v2218
        %v3222 = vsel %vm3190, %v3189, %v2220
        %vm3223 = vcmask 359424
        %v3224 = vsel %vm3223, %v3191, %v2286
        %v3225 = vsel %vm3223, %v3192, %v2288
        %v3226 = vsel %vm3223, %v3193, %v2290
        %v3227 = vsel %vm3223, %v3194, %v2292
        %v3228 = vsel %vm3223, %v3195, %v2294
        %v3229 = vsel %vm3223, %v3196, %v2296
        %v3230 = vsel %vm3223, %v3197, %v2298
        %v3231 = vsel %vm3223, %v3198, %v2300
        %v3232 = vsel %vm3223, %v3199, %v2302
        %v3233 = vsel %vm3223, %v3200, %v2304
        %v3234 = vsel %vm3223, %v3201, %v2306
        %v3235 = vsel %vm3223, %v3202, %v2308
        %v3236 = vsel %vm3223, %v3203, %v2310
        %v3237 = vsel %vm3223, %v3204, %v2312
        %v3238 = vsel %vm3223, %v3205, %v2314
        %v3239 = vsel %vm3223, %v3206, %v2316
        %v3240 = vsel %vm3223, %v3207, %v2318
        %v3241 = vsel %vm3223, %v3208, %v2320
        %v3242 = vsel %vm3223, %v3209, %v2322
        %v3243 = vsel %vm3223, %v3210, %v2324
        %v3244 = vsel %vm3223, %v3211, %v2326
        %v3245 = vsel %vm3223, %v3212, %v2328
        %v3246 = vsel %vm3223, %v3213, %v2330
        %v3247 = vsel %vm3223, %v3214, %v2332
        %v3248 = vsel %vm3223, %v3215, %v2334
        %v3249 = vsel %vm3223, %v3216, %v2336
        %v3250 = vsel %vm3223, %v3217, %v2338
        %v3251 = vsel %vm3223, %v3218, %v2340
        %v3252 = vsel %vm3223, %v3219, %v2342
        %v3253 = vsel %vm3223, %v3220, %v2344
        %v3254 = vsel %vm3223, %v3221, %v2346
        %v3255 = vsel %vm3223, %v3222, %v2348
        %vm3256 = vcmask 392192
        %v3257 = vsel %vm3256, %v3224, %v2414
        %v3258 = vsel %vm3256, %v3225, %v2416
        %v3259 = vsel %vm3256, %v3226, %v2418
        %v3260 = vsel %vm3256, %v3227, %v2420
        %v3261 = vsel %vm3256, %v3228, %v2422
        %v3262 = vsel %vm3256, %v3229, %v2424
        %v3263 = vsel %vm3256, %v3230, %v2426
        %v3264 = vsel %vm3256, %v3231, %v2428
        %v3265 = vsel %vm3256, %v3232, %v2430
        %v3266 = vsel %vm3256, %v3233, %v2432
        %v3267 = vsel %vm3256, %v3234, %v2434
        %v3268 = vsel %vm3256, %v3235, %v2436
        %v3269 = vsel %vm3256, %v3236, %v2438
        %v3270 = vsel %vm3256, %v3237, %v2440
        %v3271 = vsel %vm3256, %v3238, %v2442
        %v3272 = vsel %vm3256, %v3239, %v2444
        %v3273 = vsel %vm3256, %v3240, %v2446
        %v3274 = vsel %vm3256, %v3241, %v2448
        %v3275 = vsel %vm3256, %v3242, %v2450
        %v3276 = vsel %vm3256, %v3243, %v2452
        %v3277 = vsel %vm3256, %v3244, %v2454
        %v3278 = vsel %vm3256, %v3245, %v2456
        %v3279 = vsel %vm3256, %v3246, %v2458
        %v3280 = vsel %vm3256, %v3247, %v2460
        %v3281 = vsel %vm3256, %v3248, %v2462
        %v3282 = vsel %vm3256, %v3249, %v2464
        %v3283 = vsel %vm3256, %v3250, %v2466
        %v3284 = vsel %vm3256, %v3251, %v2468
        %v3285 = vsel %vm3256, %v3252, %v2470
        %v3286 = vsel %vm3256, %v3253, %v2472
        %v3287 = vsel %vm3256, %v3254, %v2474
        %v3288 = vsel %vm3256, %v3255, %v2476
        %vm3289 = vcmask 424960
        %v3290 = vsel %vm3289, %v3257, %v2542
        %v3291 = vsel %vm3289, %v3258, %v2544
        %v3292 = vsel %vm3289, %v3259, %v2546
        %v3293 = vsel %vm3289, %v3260, %v2548
        %v3294 = vsel %vm3289, %v3261, %v2550
        %v3295 = vsel %vm3289, %v3262, %v2552
        %v3296 = vsel %vm3289, %v3263, %v2554
        %v3297 = vsel %vm3289, %v3264, %v2556
        %v3298 = vsel %vm3289, %v3265, %v2558
        %v3299 = vsel %vm3289, %v3266, %v2560
        %v3300 = vsel %vm3289, %v3267, %v2562
        %v3301 = vsel %vm3289, %v3268, %v2564
        %v3302 = vsel %vm3289, %v3269, %v2566
        %v3303 = vsel %vm3289, %v3270, %v2568
        %v3304 = vsel %vm3289, %v3271, %v2570
        %v3305 = vsel %vm3289, %v3272, %v2572
        %v3306 = vsel %vm3289, %v3273, %v2574
        %v3307 = vsel %vm3289, %v3274, %v2576
        %v3308 = vsel %vm3289, %v3275, %v2578
        %v3309 = vsel %vm3289, %v3276, %v2580
        %v3310 = vsel %vm3289, %v3277, %v2582
        %v3311 = vsel %vm3289, %v3278, %v2584
        %v3312 = vsel %vm3289, %v3279, %v2586
        %v3313 = vsel %vm3289, %v3280, %v2588
        %v3314 = vsel %vm3289, %v3281, %v2590
        %v3315 = vsel %vm3289, %v3282, %v2592
        %v3316 = vsel %vm3289, %v3283, %v2594
        %v3317 = vsel %vm3289, %v3284, %v2596
        %v3318 = vsel %vm3289, %v3285, %v2598
        %v3319 = vsel %vm3289, %v3286, %v2600
        %v3320 = vsel %vm3289, %v3287, %v2602
        %v3321 = vsel %vm3289, %v3288, %v2604
        %vm3322 = vcmask 457728
        %v3323 = vsel %vm3322, %v3290, %v2670
        %v3324 = vsel %vm3322, %v3291, %v2672
        %v3325 = vsel %vm3322, %v3292, %v2674
        %v3326 = vsel %vm3322, %v3293, %v2676
        %v3327 = vsel %vm3322, %v3294, %v2678
        %v3328 = vsel %vm3322, %v3295, %v2680
        %v3329 = vsel %vm3322, %v3296, %v2682
        %v3330 = vsel %vm3322, %v3297, %v2684
        %v3331 = vsel %vm3322, %v3298, %v2686
        %v3332 = vsel %vm3322, %v3299, %v2688
        %v3333 = vsel %vm3322, %v3300, %v2690
        %v3334 = vsel %vm3322, %v3301, %v2692
        %v3335 = vsel %vm3322, %v3302, %v2694
        %v3336 = vsel %vm3322, %v3303, %v2696
        %v3337 = vsel %vm3322, %v3304, %v2698
        %v3338 = vsel %vm3322, %v3305, %v2700
        %v3339 = vsel %vm3322, %v3306, %v2702
        %v3340 = vsel %vm3322, %v3307, %v2704
        %v3341 = vsel %vm3322, %v3308, %v2706
        %v3342 = vsel %vm3322, %v3309, %v2708
        %v3343 = vsel %vm3322, %v3310, %v2710
        %v3344 = vsel %vm3322, %v3311, %v2712
        %v3345 = vsel %vm3322, %v3312, %v2714
        %v3346 = vsel %vm3322, %v3313, %v2716
        %v3347 = vsel %vm3322, %v3314, %v2718
        %v3348 = vsel %vm3322, %v3315, %v2720
        %v3349 = vsel %vm3322, %v3316, %v2722
        %v3350 = vsel %vm3322, %v3317, %v2724
        %v3351 = vsel %vm3322, %v3318, %v2726
        %v3352 = vsel %vm3322, %v3319, %v2728
        %v3353 = vsel %vm3322, %v3320, %v2730
        %v3354 = vsel %vm3322, %v3321, %v2732
        %vm3355 = vcmask 490496
        %v3356 = vsel %vm3355, %v3323, %v2798
        %v3357 = vsel %vm3355, %v3324, %v2800
        %v3358 = vsel %vm3355, %v3325, %v2802
        %v3359 = vsel %vm3355, %v3326, %v2804
        %v3360 = vsel %vm3355, %v3327, %v2806
        %v3361 = vsel %vm3355, %v3328, %v2808
        %v3362 = vsel %vm3355, %v3329, %v2810
        %v3363 = vsel %vm3355, %v3330, %v2812
        %v3364 = vsel %vm3355, %v3331, %v2814
        %v3365 = vsel %vm3355, %v3332, %v2816
        %v3366 = vsel %vm3355, %v3333, %v2818
        %v3367 = vsel %vm3355, %v3334, %v2820
        %v3368 = vsel %vm3355, %v3335, %v2822
        %v3369 = vsel %vm3355, %v3336, %v2824
        %v3370 = vsel %vm3355, %v3337, %v2826
        %v3371 = vsel %vm3355, %v3338, %v2828
        %v3372 = vsel %vm3355, %v3339, %v2830
        %v3373 = vsel %vm3355, %v3340, %v2832
        %v3374 = vsel %vm3355, %v3341, %v2834
        %v3375 = vsel %vm3355, %v3342, %v2836
        %v3376 = vsel %vm3355, %v3343, %v2838
        %v3377 = vsel %vm3355, %v3344, %v2840
        %v3378 = vsel %vm3355, %v3345, %v2842
        %v3379 = vsel %vm3355, %v3346, %v2844
        %v3380 = vsel %vm3355, %v3347, %v2846
        %v3381 = vsel %vm3355, %v3348, %v2848
        %v3382 = vsel %vm3355, %v3349, %v2850
        %v3383 = vsel %vm3355, %v3350, %v2852
        %v3384 = vsel %vm3355, %v3351, %v2854
        %v3385 = vsel %vm3355, %v3352, %v2856
        %v3386 = vsel %vm3355, %v3353, %v2858
        %v3387 = vsel %vm3355, %v3354, %v2860
        %3420 = vrot.lane.b32.xlu0 %v716, 4
        %v3421 = vpop.permute.xlu0 %3420
        %3422 = vrot.lane.b32.xlu0 %v717, 4
        %v3423 = vpop.permute.xlu0 %3422
        %3424 = vrot.lane.b32.xlu0 %v718, 4
        %v3425 = vpop.permute.xlu0 %3424
        %3426 = vrot.lane.b32.xlu0 %v719, 4
        %v3427 = vpop.permute.xlu0 %3426
        %3428 = vrot.lane.b32.xlu0 %v720, 4
        %v3429 = vpop.permute.xlu0 %3428
        %3430 = vrot.lane.b32.xlu0 %v721, 4
        %v3431 = vpop.permute.xlu0 %3430
        %3432 = vrot.lane.b32.xlu0 %v722, 4
        %v3433 = vpop.permute.xlu0 %3432
        %3434 = vrot.lane.b32.xlu0 %v723, 4
        %v3435 = vpop.permute.xlu0 %3434
        %3436 = vrot.lane.b32.xlu0 %v724, 4
        %v3437 = vpop.permute.xlu0 %3436
        %3438 = vrot.lane.b32.xlu0 %v725, 4
        %v3439 = vpop.permute.xlu0 %3438
        %3440 = vrot.lane.b32.xlu0 %v726, 4
        %v3441 = vpop.permute.xlu0 %3440
        %3442 = vrot.lane.b32.xlu0 %v727, 4
        %v3443 = vpop.permute.xlu0 %3442
        %3444 = vrot.lane.b32.xlu0 %v728, 4
        %v3445 = vpop.permute.xlu0 %3444
        %3446 = vrot.lane.b32.xlu0 %v729, 4
        %v3447 = vpop.permute.xlu0 %3446
        %3448 = vrot.lane.b32.xlu0 %v730, 4
        %v3449 = vpop.permute.xlu0 %3448
        %3450 = vrot.lane.b32.xlu0 %v731, 4
        %v3451 = vpop.permute.xlu0 %3450
        %3452 = vrot.lane.b32.xlu0 %v732, 4
        %v3453 = vpop.permute.xlu0 %3452
        %3454 = vrot.lane.b32.xlu0 %v733, 4
        %v3455 = vpop.permute.xlu0 %3454
        %3456 = vrot.lane.b32.xlu0 %v734, 4
        %v3457 = vpop.permute.xlu0 %3456
        %3458 = vrot.lane.b32.xlu0 %v735, 4
        %v3459 = vpop.permute.xlu0 %3458
        %3460 = vrot.lane.b32.xlu0 %v736, 4
        %v3461 = vpop.permute.xlu0 %3460
        %3462 = vrot.lane.b32.xlu0 %v737, 4
        %v3463 = vpop.permute.xlu0 %3462
        %3464 = vrot.lane.b32.xlu0 %v738, 4
        %v3465 = vpop.permute.xlu0 %3464
        %3466 = vrot.lane.b32.xlu0 %v739, 4
        %v3467 = vpop.permute.xlu0 %3466
        %3468 = vrot.lane.b32.xlu0 %v740, 4
        %v3469 = vpop.permute.xlu0 %3468
        %3470 = vrot.lane.b32.xlu0 %v741, 4
        %v3471 = vpop.permute.xlu0 %3470
        %3472 = vrot.lane.b32.xlu0 %v742, 4
        %v3473 = vpop.permute.xlu0 %3472
        %3474 = vrot.lane.b32.xlu0 %v743, 4
        %v3475 = vpop.permute.xlu0 %3474
        %3476 = vrot.lane.b32.xlu0 %v744, 4
        %v3477 = vpop.permute.xlu0 %3476
        %3478 = vrot.lane.b32.xlu0 %v745, 4
        %v3479 = vpop.permute.xlu0 %3478
        %3480 = vrot.lane.b32.xlu0 %v746, 4
        %v3481 = vpop.permute.xlu0 %3480
        %3482 = vrot.lane.b32.xlu0 %v747, 4
        %v3483 = vpop.permute.xlu0 %3482
        %3548 = vrot.lane.b32.xlu0 %v748, 8
        %v3549 = vpop.permute.xlu0 %3548
        %3550 = vrot.lane.b32.xlu0 %v749, 8
        %v3551 = vpop.permute.xlu0 %3550
        %3552 = vrot.lane.b32.xlu0 %v750, 8
        %v3553 = vpop.permute.xlu0 %3552
        %3554 = vrot.lane.b32.xlu0 %v751, 8
        %v3555 = vpop.permute.xlu0 %3554
        %3556 = vrot.lane.b32.xlu0 %v752, 8
        %v3557 = vpop.permute.xlu0 %3556
        %3558 = vrot.lane.b32.xlu0 %v753, 8
        %v3559 = vpop.permute.xlu0 %3558
        %3560 = vrot.lane.b32.xlu0 %v754, 8
        %v3561 = vpop.permute.xlu0 %3560
        %3562 = vrot.lane.b32.xlu0 %v755, 8
        %v3563 = vpop.permute.xlu0 %3562
        %3564 = vrot.lane.b32.xlu0 %v756, 8
        %v3565 = vpop.permute.xlu0 %3564
        %3566 = vrot.lane.b32.xlu0 %v757, 8
        %v3567 = vpop.permute.xlu0 %3566
        %3568 = vrot.lane.b32.xlu0 %v758, 8
        %v3569 = vpop.permute.xlu0 %3568
        %3570 = vrot.lane.b32.xlu0 %v759, 8
        %v3571 = vpop.permute.xlu0 %3570
        %3572 = vrot.lane.b32.xlu0 %v760, 8
        %v3573 = vpop.permute.xlu0 %3572
        %3574 = vrot.lane.b32.xlu0 %v761, 8
        %v3575 = vpop.permute.xlu0 %3574
        %3576 = vrot.lane.b32.xlu0 %v762, 8
        %v3577 = vpop.permute.xlu0 %3576
        %3578 = vrot.lane.b32.xlu0 %v763, 8
        %v3579 = vpop.permute.xlu0 %3578
        %3580 = vrot.lane.b32.xlu0 %v764, 8
        %v3581 = vpop.permute.xlu0 %3580
        %3582 = vrot.lane.b32.xlu0 %v765, 8
        %v3583 = vpop.permute.xlu0 %3582
        %3584 = vrot.lane.b32.xlu0 %v766, 8
        %v3585 = vpop.permute.xlu0 %3584
        %3586 = vrot.lane.b32.xlu0 %v767, 8
        %v3587 = vpop.permute.xlu0 %3586
        %3588 = vrot.lane.b32.xlu0 %v768, 8
        %v3589 = vpop.permute.xlu0 %3588
        %3590 = vrot.lane.b32.xlu0 %v769, 8
        %v3591 = vpop.permute.xlu0 %3590
        %3592 = vrot.lane.b32.xlu0 %v770, 8
        %v3593 = vpop.permute.xlu0 %3592
        %3594 = vrot.lane.b32.xlu0 %v771, 8
        %v3595 = vpop.permute.xlu0 %3594
        %3596 = vrot.lane.b32.xlu0 %v772, 8
        %v3597 = vpop.permute.xlu0 %3596
        %3598 = vrot.lane.b32.xlu0 %v773, 8
        %v3599 = vpop.permute.xlu0 %3598
        %3600 = vrot.lane.b32.xlu0 %v774, 8
        %v3601 = vpop.permute.xlu0 %3600
        %3602 = vrot.lane.b32.xlu0 %v775, 8
        %v3603 = vpop.permute.xlu0 %3602
        %3604 = vrot.lane.b32.xlu0 %v776, 8
        %v3605 = vpop.permute.xlu0 %3604
        %3606 = vrot.lane.b32.xlu0 %v777, 8
        %v3607 = vpop.permute.xlu0 %3606
        %3608 = vrot.lane.b32.xlu0 %v778, 8
        %v3609 = vpop.permute.xlu0 %3608
        %3610 = vrot.lane.b32.xlu0 %v779, 8
        %v3611 = vpop.permute.xlu0 %3610
        %3676 = vrot.lane.b32.xlu0 %v780, 12
        %v3677 = vpop.permute.xlu0 %3676
        %3678 = vrot.lane.b32.xlu0 %v781, 12
        %v3679 = vpop.permute.xlu0 %3678
        %3680 = vrot.lane.b32.xlu0 %v782, 12
        %v3681 = vpop.permute.xlu0 %3680
        %3682 = vrot.lane.b32.xlu0 %v783, 12
        %v3683 = vpop.permute.xlu0 %3682
        %3684 = vrot.lane.b32.xlu0 %v784, 12
        %v3685 = vpop.permute.xlu0 %3684
        %3686 = vrot.lane.b32.xlu0 %v785, 12
        %v3687 = vpop.permute.xlu0 %3686
        %3688 = vrot.lane.b32.xlu0 %v786, 12
        %v3689 = vpop.permute.xlu0 %3688
        %3690 = vrot.lane.b32.xlu0 %v787, 12
        %v3691 = vpop.permute.xlu0 %3690
        %3692 = vrot.lane.b32.xlu0 %v788, 12
        %v3693 = vpop.permute.xlu0 %3692
        %3694 = vrot.lane.b32.xlu0 %v789, 12
        %v3695 = vpop.permute.xlu0 %3694
        %3696 = vrot.lane.b32.xlu0 %v790, 12
        %v3697 = vpop.permute.xlu0 %3696
        %3698 = vrot.lane.b32.xlu0 %v791, 12
        %v3699 = vpop.permute.xlu0 %3698
        %3700 = vrot.lane.b32.xlu0 %v792, 12
        %v3701 = vpop.permute.xlu0 %3700
        %3702 = vrot.lane.b32.xlu0 %v793, 12
        %v3703 = vpop.permute.xlu0 %3702
        %3704 = vrot.lane.b32.xlu0 %v794, 12
        %v3705 = vpop.permute.xlu0 %3704
        %3706 = vrot.lane.b32.xlu0 %v795, 12
        %v3707 = vpop.permute.xlu0 %3706
        %3708 = vrot.lane.b32.xlu0 %v796, 12
        %v3709 = vpop.permute.xlu0 %3708
        %3710 = vrot.lane.b32.xlu0 %v797, 12
        %v3711 = vpop.permute.xlu0 %3710
        %3712 = vrot.lane.b32.xlu0 %v798, 12
        %v3713 = vpop.permute.xlu0 %3712
        %3714 = vrot.lane.b32.xlu0 %v799, 12
        %v3715 = vpop.permute.xlu0 %3714
        %3716 = vrot.lane.b32.xlu0 %v800, 12
        %v3717 = vpop.permute.xlu0 %3716
        %3718 = vrot.lane.b32.xlu0 %v801, 12
        %v3719 = vpop.permute.xlu0 %3718
        %3720 = vrot.lane.b32.xlu0 %v802, 12
        %v3721 = vpop.permute.xlu0 %3720
        %3722 = vrot.lane.b32.xlu0 %v803, 12
        %v3723 = vpop.permute.xlu0 %3722
        %3724 = vrot.lane.b32.xlu0 %v804, 12
        %v3725 = vpop.permute.xlu0 %3724
        %3726 = vrot.lane.b32.xlu0 %v805, 12
        %v3727 = vpop.permute.xlu0 %3726
        %3728 = vrot.lane.b32.xlu0 %v806, 12
        %v3729 = vpop.permute.xlu0 %3728
        %3730 = vrot.lane.b32.xlu0 %v807, 12
        %v3731 = vpop.permute.xlu0 %3730
        %3732 = vrot.lane.b32.xlu0 %v808, 12
        %v3733 = vpop.permute.xlu0 %3732
        %3734 = vrot.lane.b32.xlu0 %v809, 12
        %v3735 = vpop.permute.xlu0 %3734
        %3736 = vrot.lane.b32.xlu0 %v810, 12
        %v3737 = vpop.permute.xlu0 %3736
        %3738 = vrot.lane.b32.xlu0 %v811, 12
        %v3739 = vpop.permute.xlu0 %3738
        %3804 = vrot.lane.b32.xlu0 %v813, 16
        %v3805 = vpop.permute.xlu0 %3804
        %3806 = vrot.lane.b32.xlu0 %v814, 16
        %v3807 = vpop.permute.xlu0 %3806
        %3808 = vrot.lane.b32.xlu0 %v815, 16
        %v3809 = vpop.permute.xlu0 %3808
        %3810 = vrot.lane.b32.xlu0 %v816, 16
        %v3811 = vpop.permute.xlu0 %3810
        %3812 = vrot.lane.b32.xlu0 %v817, 16
        %v3813 = vpop.permute.xlu0 %3812
        %3814 = vrot.lane.b32.xlu0 %v818, 16
        %v3815 = vpop.permute.xlu0 %3814
        %3816 = vrot.lane.b32.xlu0 %v819, 16
        %v3817 = vpop.permute.xlu0 %3816
        %3818 = vrot.lane.b32.xlu0 %v820, 16
        %v3819 = vpop.permute.xlu0 %3818
        %3820 = vrot.lane.b32.xlu0 %v821, 16
        %v3821 = vpop.permute.xlu0 %3820
        %3822 = vrot.lane.b32.xlu0 %v822, 16
        %v3823 = vpop.permute.xlu0 %3822
        %3824 = vrot.lane.b32.xlu0 %v823, 16
        %v3825 = vpop.permute.xlu0 %3824
        %3826 = vrot.lane.b32.xlu0 %v824, 16
        %v3827 = vpop.permute.xlu0 %3826
        %3828 = vrot.lane.b32.xlu0 %v825, 16
        %v3829 = vpop.permute.xlu0 %3828
        %3830 = vrot.lane.b32.xlu0 %v826, 16
        %v3831 = vpop.permute.xlu0 %3830
        %3832 = vrot.lane.b32.xlu0 %v827, 16
        %v3833 = vpop.permute.xlu0 %3832
        %3834 = vrot.lane.b32.xlu0 %v828, 16
        %v3835 = vpop.permute.xlu0 %3834
        %3836 = vrot.lane.b32.xlu0 %v829, 16
        %v3837 = vpop.permute.xlu0 %3836
        %3838 = vrot.lane.b32.xlu0 %v830, 16
        %v3839 = vpop.permute.xlu0 %3838
        %3840 = vrot.lane.b32.xlu0 %v831, 16
        %v3841 = vpop.permute.xlu0 %3840
        %3842 = vrot.lane.b32.xlu0 %v832, 16
        %v3843 = vpop.permute.xlu0 %3842
        %3844 = vrot.lane.b32.xlu0 %v833, 16
        %v3845 = vpop.permute.xlu0 %3844
        %3846 = vrot.lane.b32.xlu0 %v834, 16
        %v3847 = vpop.permute.xlu0 %3846
        %3848 = vrot.lane.b32.xlu0 %v835, 16
        %v3849 = vpop.permute.xlu0 %3848
        %3850 = vrot.lane.b32.xlu0 %v836, 16
        %v3851 = vpop.permute.xlu0 %3850
        %3852 = vrot.lane.b32.xlu0 %v837, 16
        %v3853 = vpop.permute.xlu0 %3852
        %3854 = vrot.lane.b32.xlu0 %v838, 16
        %v3855 = vpop.permute.xlu0 %3854
        %3856 = vrot.lane.b32.xlu0 %v839, 16
        %v3857 = vpop.permute.xlu0 %3856
        %3858 = vrot.lane.b32.xlu0 %v840, 16
        %v3859 = vpop.permute.xlu0 %3858
        %3860 = vrot.lane.b32.xlu0 %v841, 16
        %v3861 = vpop.permute.xlu0 %3860
        %3862 = vrot.lane.b32.xlu0 %v842, 16
        %v3863 = vpop.permute.xlu0 %3862
        %3864 = vrot.lane.b32.xlu0 %v843, 16
        %v3865 = vpop.permute.xlu0 %3864
        %3866 = vrot.lane.b32.xlu0 %v844, 16
        %v3867 = vpop.permute.xlu0 %3866
        %3932 = vrot.lane.b32.xlu0 %v845, 20
        %v3933 = vpop.permute.xlu0 %3932
        %3934 = vrot.lane.b32.xlu0 %v846, 20
        %v3935 = vpop.permute.xlu0 %3934
        %3936 = vrot.lane.b32.xlu0 %v847, 20
        %v3937 = vpop.permute.xlu0 %3936
        %3938 = vrot.lane.b32.xlu0 %v848, 20
        %v3939 = vpop.permute.xlu0 %3938
        %3940 = vrot.lane.b32.xlu0 %v849, 20
        %v3941 = vpop.permute.xlu0 %3940
        %3942 = vrot.lane.b32.xlu0 %v850, 20
        %v3943 = vpop.permute.xlu0 %3942
        %3944 = vrot.lane.b32.xlu0 %v851, 20
        %v3945 = vpop.permute.xlu0 %3944
        %3946 = vrot.lane.b32.xlu0 %v852, 20
        %v3947 = vpop.permute.xlu0 %3946
        %3948 = vrot.lane.b32.xlu0 %v853, 20
        %v3949 = vpop.permute.xlu0 %3948
        %3950 = vrot.lane.b32.xlu0 %v854, 20
        %v3951 = vpop.permute.xlu0 %3950
        %3952 = vrot.lane.b32.xlu0 %v855, 20
        %v3953 = vpop.permute.xlu0 %3952
        %3954 = vrot.lane.b32.xlu0 %v856, 20
        %v3955 = vpop.permute.xlu0 %3954
        %3956 = vrot.lane.b32.xlu0 %v857, 20
        %v3957 = vpop.permute.xlu0 %3956
        %3958 = vrot.lane.b32.xlu0 %v858, 20
        %v3959 = vpop.permute.xlu0 %3958
        %3960 = vrot.lane.b32.xlu0 %v859, 20
        %v3961 = vpop.permute.xlu0 %3960
        %3962 = vrot.lane.b32.xlu0 %v860, 20
        %v3963 = vpop.permute.xlu0 %3962
        %3964 = vrot.lane.b32.xlu0 %v861, 20
        %v3965 = vpop.permute.xlu0 %3964
        %3966 = vrot.lane.b32.xlu0 %v862, 20
        %v3967 = vpop.permute.xlu0 %3966
        %3968 = vrot.lane.b32.xlu0 %v863, 20
        %v3969 = vpop.permute.xlu0 %3968
        %3970 = vrot.lane.b32.xlu0 %v864, 20
        %v3971 = vpop.permute.xlu0 %3970
        %3972 = vrot.lane.b32.xlu0 %v865, 20
        %v3973 = vpop.permute.xlu0 %3972
        %3974 = vrot.lane.b32.xlu0 %v866, 20
        %v3975 = vpop.permute.xlu0 %3974
        %3976 = vrot.lane.b32.xlu0 %v867, 20
        %v3977 = vpop.permute.xlu0 %3976
        %3978 = vrot.lane.b32.xlu0 %v868, 20
        %v3979 = vpop.permute.xlu0 %3978
        %3980 = vrot.lane.b32.xlu0 %v869, 20
        %v3981 = vpop.permute.xlu0 %3980
        %3982 = vrot.lane.b32.xlu0 %v870, 20
        %v3983 = vpop.permute.xlu0 %3982
        %3984 = vrot.lane.b32.xlu0 %v871, 20
        %v3985 = vpop.permute.xlu0 %3984
        %3986 = vrot.lane.b32.xlu0 %v872, 20
        %v3987 = vpop.permute.xlu0 %3986
        %3988 = vrot.lane.b32.xlu0 %v873, 20
        %v3989 = vpop.permute.xlu0 %3988
        %3990 = vrot.lane.b32.xlu0 %v874, 20
        %v3991 = vpop.permute.xlu0 %3990
        %3992 = vrot.lane.b32.xlu0 %v875, 20
        %v3993 = vpop.permute.xlu0 %3992
        %3994 = vrot.lane.b32.xlu0 %v876, 20
        %v3995 = vpop.permute.xlu0 %3994
        %4060 = vrot.lane.b32.xlu0 %v877, 24
        %v4061 = vpop.permute.xlu0 %4060
        %4062 = vrot.lane.b32.xlu0 %v878, 24
        %v4063 = vpop.permute.xlu0 %4062
        %4064 = vrot.lane.b32.xlu0 %v879, 24
        %v4065 = vpop.permute.xlu0 %4064
        %4066 = vrot.lane.b32.xlu0 %v880, 24
        %v4067 = vpop.permute.xlu0 %4066
        %4068 = vrot.lane.b32.xlu0 %v881, 24
        %v4069 = vpop.permute.xlu0 %4068
        %4070 = vrot.lane.b32.xlu0 %v882, 24
        %v4071 = vpop.permute.xlu0 %4070
        %4072 = vrot.lane.b32.xlu0 %v883, 24
        %v4073 = vpop.permute.xlu0 %4072
        %4074 = vrot.lane.b32.xlu0 %v884, 24
        %v4075 = vpop.permute.xlu0 %4074
        %4076 = vrot.lane.b32.xlu0 %v885, 24
        %v4077 = vpop.permute.xlu0 %4076
        %4078 = vrot.lane.b32.xlu0 %v886, 24
        %v4079 = vpop.permute.xlu0 %4078
        %4080 = vrot.lane.b32.xlu0 %v887, 24
        %v4081 = vpop.permute.xlu0 %4080
        %4082 = vrot.lane.b32.xlu0 %v888, 24
        %v4083 = vpop.permute.xlu0 %4082
        %4084 = vrot.lane.b32.xlu0 %v889, 24
        %v4085 = vpop.permute.xlu0 %4084
        %4086 = vrot.lane.b32.xlu0 %v890, 24
        %v4087 = vpop.permute.xlu0 %4086
        %4088 = vrot.lane.b32.xlu0 %v891, 24
        %v4089 = vpop.permute.xlu0 %4088
        %4090 = vrot.lane.b32.xlu0 %v892, 24
        %v4091 = vpop.permute.xlu0 %4090
        %4092 = vrot.lane.b32.xlu0 %v893, 24
        %v4093 = vpop.permute.xlu0 %4092
        %4094 = vrot.lane.b32.xlu0 %v894, 24
        %v4095 = vpop.permute.xlu0 %4094
        %4096 = vrot.lane.b32.xlu0 %v895, 24
        %v4097 = vpop.permute.xlu0 %4096
        %4098 = vrot.lane.b32.xlu0 %v896, 24
        %v4099 = vpop.permute.xlu0 %4098
        %4100 = vrot.lane.b32.xlu0 %v897, 24
        %v4101 = vpop.permute.xlu0 %4100
        %4102 = vrot.lane.b32.xlu0 %v898, 24
        %v4103 = vpop.permute.xlu0 %4102
        %4104 = vrot.lane.b32.xlu0 %v899, 24
        %v4105 = vpop.permute.xlu0 %4104
        %4106 = vrot.lane.b32.xlu0 %v900, 24
        %v4107 = vpop.permute.xlu0 %4106
        %4108 = vrot.lane.b32.xlu0 %v901, 24
        %v4109 = vpop.permute.xlu0 %4108
        %4110 = vrot.lane.b32.xlu0 %v902, 24
        %v4111 = vpop.permute.xlu0 %4110
        %4112 = vrot.lane.b32.xlu0 %v903, 24
        %v4113 = vpop.permute.xlu0 %4112
        %4114 = vrot.lane.b32.xlu0 %v904, 24
        %v4115 = vpop.permute.xlu0 %4114
        %4116 = vrot.lane.b32.xlu0 %v905, 24
        %v4117 = vpop.permute.xlu0 %4116
        %4118 = vrot.lane.b32.xlu0 %v906, 24
        %v4119 = vpop.permute.xlu0 %4118
        %4120 = vrot.lane.b32.xlu0 %v907, 24
        %v4121 = vpop.permute.xlu0 %4120
        %4122 = vrot.lane.b32.xlu0 %v908, 24
        %v4123 = vpop.permute.xlu0 %4122
        %4188 = vrot.lane.b32.xlu0 %v909, 28
        %v4189 = vpop.permute.xlu0 %4188
        %4190 = vrot.lane.b32.xlu0 %v910, 28
        %v4191 = vpop.permute.xlu0 %4190
        %4192 = vrot.lane.b32.xlu0 %v911, 28
        %v4193 = vpop.permute.xlu0 %4192
        %4194 = vrot.lane.b32.xlu0 %v912, 28
        %v4195 = vpop.permute.xlu0 %4194
        %4196 = vrot.lane.b32.xlu0 %v913, 28
        %v4197 = vpop.permute.xlu0 %4196
        %4198 = vrot.lane.b32.xlu0 %v914, 28
        %v4199 = vpop.permute.xlu0 %4198
        %4200 = vrot.lane.b32.xlu0 %v915, 28
        %v4201 = vpop.permute.xlu0 %4200
        %4202 = vrot.lane.b32.xlu0 %v916, 28
        %v4203 = vpop.permute.xlu0 %4202
        %4204 = vrot.lane.b32.xlu0 %v917, 28
        %v4205 = vpop.permute.xlu0 %4204
        %4206 = vrot.lane.b32.xlu0 %v918, 28
        %v4207 = vpop.permute.xlu0 %4206
        %4208 = vrot.lane.b32.xlu0 %v919, 28
        %v4209 = vpop.permute.xlu0 %4208
        %4210 = vrot.lane.b32.xlu0 %v920, 28
        %v4211 = vpop.permute.xlu0 %4210
        %4212 = vrot.lane.b32.xlu0 %v921, 28
        %v4213 = vpop.permute.xlu0 %4212
        %4214 = vrot.lane.b32.xlu0 %v922, 28
        %v4215 = vpop.permute.xlu0 %4214
        %4216 = vrot.lane.b32.xlu0 %v923, 28
        %v4217 = vpop.permute.xlu0 %4216
        %4218 = vrot.lane.b32.xlu0 %v924, 28
        %v4219 = vpop.permute.xlu0 %4218
        %4220 = vrot.lane.b32.xlu0 %v925, 28
        %v4221 = vpop.permute.xlu0 %4220
        %4222 = vrot.lane.b32.xlu0 %v926, 28
        %v4223 = vpop.permute.xlu0 %4222
        %4224 = vrot.lane.b32.xlu0 %v927, 28
        %v4225 = vpop.permute.xlu0 %4224
        %4226 = vrot.lane.b32.xlu0 %v928, 28
        %v4227 = vpop.permute.xlu0 %4226
        %4228 = vrot.lane.b32.xlu0 %v929, 28
        %v4229 = vpop.permute.xlu0 %4228
        %4230 = vrot.lane.b32.xlu0 %v930, 28
        %v4231 = vpop.permute.xlu0 %4230
        %4232 = vrot.lane.b32.xlu0 %v931, 28
        %v4233 = vpop.permute.xlu0 %4232
        %4234 = vrot.lane.b32.xlu0 %v932, 28
        %v4235 = vpop.permute.xlu0 %4234
        %4236 = vrot.lane.b32.xlu0 %v933, 28
        %v4237 = vpop.permute.xlu0 %4236
        %4238 = vrot.lane.b32.xlu0 %v934, 28
        %v4239 = vpop.permute.xlu0 %4238
        %4240 = vrot.lane.b32.xlu0 %v935, 28
        %v4241 = vpop.permute.xlu0 %4240
        %4242 = vrot.lane.b32.xlu0 %v936, 28
        %v4243 = vpop.permute.xlu0 %4242
        %4244 = vrot.lane.b32.xlu0 %v937, 28
        %v4245 = vpop.permute.xlu0 %4244
        %4246 = vrot.lane.b32.xlu0 %v938, 28
        %v4247 = vpop.permute.xlu0 %4246
        %4248 = vrot.lane.b32.xlu0 %v939, 28
        %v4249 = vpop.permute.xlu0 %4248
        %4250 = vrot.lane.b32.xlu0 %v940, 28
        %v4251 = vpop.permute.xlu0 %4250
        %4316 = vrot.lane.b32.xlu0 %v941, 32
        %v4317 = vpop.permute.xlu0 %4316
        %4318 = vrot.lane.b32.xlu0 %v942, 32
        %v4319 = vpop.permute.xlu0 %4318
        %4320 = vrot.lane.b32.xlu0 %v943, 32
        %v4321 = vpop.permute.xlu0 %4320
        %4322 = vrot.lane.b32.xlu0 %v944, 32
        %v4323 = vpop.permute.xlu0 %4322
        %4324 = vrot.lane.b32.xlu0 %v945, 32
        %v4325 = vpop.permute.xlu0 %4324
        %4326 = vrot.lane.b32.xlu0 %v946, 32
        %v4327 = vpop.permute.xlu0 %4326
        %4328 = vrot.lane.b32.xlu0 %v947, 32
        %v4329 = vpop.permute.xlu0 %4328
        %4330 = vrot.lane.b32.xlu0 %v948, 32
        %v4331 = vpop.permute.xlu0 %4330
        %4332 = vrot.lane.b32.xlu0 %v949, 32
        %v4333 = vpop.permute.xlu0 %4332
        %4334 = vrot.lane.b32.xlu0 %v950, 32
        %v4335 = vpop.permute.xlu0 %4334
        %4336 = vrot.lane.b32.xlu0 %v951, 32
        %v4337 = vpop.permute.xlu0 %4336
        %4338 = vrot.lane.b32.xlu0 %v952, 32
        %v4339 = vpop.permute.xlu0 %4338
        %4340 = vrot.lane.b32.xlu0 %v953, 32
        %v4341 = vpop.permute.xlu0 %4340
        %4342 = vrot.lane.b32.xlu0 %v954, 32
        %v4343 = vpop.permute.xlu0 %4342
        %4344 = vrot.lane.b32.xlu0 %v955, 32
        %v4345 = vpop.permute.xlu0 %4344
        %4346 = vrot.lane.b32.xlu0 %v956, 32
        %v4347 = vpop.permute.xlu0 %4346
        %4348 = vrot.lane.b32.xlu0 %v957, 32
        %v4349 = vpop.permute.xlu0 %4348
        %4350 = vrot.lane.b32.xlu0 %v958, 32
        %v4351 = vpop.permute.xlu0 %4350
        %4352 = vrot.lane.b32.xlu0 %v959, 32
        %v4353 = vpop.permute.xlu0 %4352
        %4354 = vrot.lane.b32.xlu0 %v960, 32
        %v4355 = vpop.permute.xlu0 %4354
        %4356 = vrot.lane.b32.xlu0 %v961, 32
        %v4357 = vpop.permute.xlu0 %4356
        %4358 = vrot.lane.b32.xlu0 %v962, 32
        %v4359 = vpop.permute.xlu0 %4358
        %4360 = vrot.lane.b32.xlu0 %v963, 32
        %v4361 = vpop.permute.xlu0 %4360
        %4362 = vrot.lane.b32.xlu0 %v964, 32
        %v4363 = vpop.permute.xlu0 %4362
        %4364 = vrot.lane.b32.xlu0 %v965, 32
        %v4365 = vpop.permute.xlu0 %4364
        %4366 = vrot.lane.b32.xlu0 %v966, 32
        %v4367 = vpop.permute.xlu0 %4366
        %4368 = vrot.lane.b32.xlu0 %v967, 32
        %v4369 = vpop.permute.xlu0 %4368
        %4370 = vrot.lane.b32.xlu0 %v968, 32
        %v4371 = vpop.permute.xlu0 %4370
        %4372 = vrot.lane.b32.xlu0 %v969, 32
        %v4373 = vpop.permute.xlu0 %4372
        %4374 = vrot.lane.b32.xlu0 %v970, 32
        %v4375 = vpop.permute.xlu0 %4374
        %4376 = vrot.lane.b32.xlu0 %v971, 32
        %v4377 = vpop.permute.xlu0 %4376
        %4378 = vrot.lane.b32.xlu0 %v972, 32
        %v4379 = vpop.permute.xlu0 %4378
        %v4412 = vsel %vm2893, %v684, %v3421
        %v4413 = vsel %vm2893, %v685, %v3423
        %v4414 = vsel %vm2893, %v686, %v3425
        %v4415 = vsel %vm2893, %v687, %v3427
        %v4416 = vsel %vm2893, %v688, %v3429
        %v4417 = vsel %vm2893, %v689, %v3431
        %v4418 = vsel %vm2893, %v690, %v3433
        %v4419 = vsel %vm2893, %v691, %v3435
        %v4420 = vsel %vm2893, %v692, %v3437
        %v4421 = vsel %vm2893, %v693, %v3439
        %v4422 = vsel %vm2893, %v694, %v3441
        %v4423 = vsel %vm2893, %v695, %v3443
        %v4424 = vsel %vm2893, %v696, %v3445
        %v4425 = vsel %vm2893, %v697, %v3447
        %v4426 = vsel %vm2893, %v698, %v3449
        %v4427 = vsel %vm2893, %v699, %v3451
        %v4428 = vsel %vm2893, %v700, %v3453
        %v4429 = vsel %vm2893, %v701, %v3455
        %v4430 = vsel %vm2893, %v702, %v3457
        %v4431 = vsel %vm2893, %v703, %v3459
        %v4432 = vsel %vm2893, %v704, %v3461
        %v4433 = vsel %vm2893, %v705, %v3463
        %v4434 = vsel %vm2893, %v706, %v3465
        %v4435 = vsel %vm2893, %v707, %v3467
        %v4436 = vsel %vm2893, %v708, %v3469
        %v4437 = vsel %vm2893, %v709, %v3471
        %v4438 = vsel %vm2893, %v710, %v3473
        %v4439 = vsel %vm2893, %v711, %v3475
        %v4440 = vsel %vm2893, %v712, %v3477
        %v4441 = vsel %vm2893, %v713, %v3479
        %v4442 = vsel %vm2893, %v714, %v3481
        %v4443 = vsel %vm2893, %v715, %v3483
        %v4444 = vsel %vm2926, %v4412, %v3549
        %v4445 = vsel %vm2926, %v4413, %v3551
        %v4446 = vsel %vm2926, %v4414, %v3553
        %v4447 = vsel %vm2926, %v4415, %v3555
        %v4448 = vsel %vm2926, %v4416, %v3557
        %v4449 = vsel %vm2926, %v4417, %v3559
        %v4450 = vsel %vm2926, %v4418, %v3561
        %v4451 = vsel %vm2926, %v4419, %v3563
        %v4452 = vsel %vm2926, %v4420, %v3565
        %v4453 = vsel %vm2926, %v4421, %v3567
        %v4454 = vsel %vm2926, %v4422, %v3569
        %v4455 = vsel %vm2926, %v4423, %v3571
        %v4456 = vsel %vm2926, %v4424, %v3573
        %v4457 = vsel %vm2926, %v4425, %v3575
        %v4458 = vsel %vm2926, %v4426, %v3577
        %v4459 = vsel %vm2926, %v4427, %v3579
        %v4460 = vsel %vm2926, %v4428, %v3581
        %v4461 = vsel %vm2926, %v4429, %v3583
        %v4462 = vsel %vm2926, %v4430, %v3585
        %v4463 = vsel %vm2926, %v4431, %v3587
        %v4464 = vsel %vm2926, %v4432, %v3589
        %v4465 = vsel %vm2926, %v4433, %v3591
        %v4466 = vsel %vm2926, %v4434, %v3593
        %v4467 = vsel %vm2926, %v4435, %v3595
        %v4468 = vsel %vm2926, %v4436, %v3597
        %v4469 = vsel %vm2926, %v4437, %v3599
        %v4470 = vsel %vm2926, %v4438, %v3601
        %v4471 = vsel %vm2926, %v4439, %v3603
        %v4472 = vsel %vm2926, %v4440, %v3605
        %v4473 = vsel %vm2926, %v4441, %v3607
        %v4474 = vsel %vm2926, %v4442, %v3609
        %v4475 = vsel %vm2926, %v4443, %v3611
        %v4476 = vsel %vm2959, %v4444, %v3677
        %v4477 = vsel %vm2959, %v4445, %v3679
        %v4478 = vsel %vm2959, %v4446, %v3681
        %v4479 = vsel %vm2959, %v4447, %v3683
        %v4480 = vsel %vm2959, %v4448, %v3685
        %v4481 = vsel %vm2959, %v4449, %v3687
        %v4482 = vsel %vm2959, %v4450, %v3689
        %v4483 = vsel %vm2959, %v4451, %v3691
        %v4484 = vsel %vm2959, %v4452, %v3693
        %v4485 = vsel %vm2959, %v4453, %v3695
        %v4486 = vsel %vm2959, %v4454, %v3697
        %v4487 = vsel %vm2959, %v4455, %v3699
        %v4488 = vsel %vm2959, %v4456, %v3701
        %v4489 = vsel %vm2959, %v4457, %v3703
        %v4490 = vsel %vm2959, %v4458, %v3705
        %v4491 = vsel %vm2959, %v4459, %v3707
        %v4492 = vsel %vm2959, %v4460, %v3709
        %v4493 = vsel %vm2959, %v4461, %v3711
        %v4494 = vsel %vm2959, %v4462, %v3713
        %v4495 = vsel %vm2959, %v4463, %v3715
        %v4496 = vsel %vm2959, %v4464, %v3717
        %v4497 = vsel %vm2959, %v4465, %v3719
        %v4498 = vsel %vm2959, %v4466, %v3721
        %v4499 = vsel %vm2959, %v4467, %v3723
        %v4500 = vsel %vm2959, %v4468, %v3725
        %v4501 = vsel %vm2959, %v4469, %v3727
        %v4502 = vsel %vm2959, %v4470, %v3729
        %v4503 = vsel %vm2959, %v4471, %v3731
        %v4504 = vsel %vm2959, %v4472, %v3733
        %v4505 = vsel %vm2959, %v4473, %v3735
        %v4506 = vsel %vm2959, %v4474, %v3737
        %v4507 = vsel %vm2959, %v4475, %v3739
        %v4508 = vsel %vm2992, %v4476, %v3805
        %v4509 = vsel %vm2992, %v4477, %v3807
        %v4510 = vsel %vm2992, %v4478, %v3809
        %v4511 = vsel %vm2992, %v4479, %v3811
        %v4512 = vsel %vm2992, %v4480, %v3813
        %v4513 = vsel %vm2992, %v4481, %v3815
        %v4514 = vsel %vm2992, %v4482, %v3817
        %v4515 = vsel %vm2992, %v4483, %v3819
        %v4516 = vsel %vm2992, %v4484, %v3821
        %v4517 = vsel %vm2992, %v4485, %v3823
        %v4518 = vsel %vm2992, %v4486, %v3825
        %v4519 = vsel %vm2992, %v4487, %v3827
        %v4520 = vsel %vm2992, %v4488, %v3829
        %v4521 = vsel %vm2992, %v4489, %v3831
        %v4522 = vsel %vm2992, %v4490, %v3833
        %v4523 = vsel %vm2992, %v4491, %v3835
        %v4524 = vsel %vm2992, %v4492, %v3837
        %v4525 = vsel %vm2992, %v4493, %v3839
        %v4526 = vsel %vm2992, %v4494, %v3841
        %v4527 = vsel %vm2992, %v4495, %v3843
        %v4528 = vsel %vm2992, %v4496, %v3845
        %v4529 = vsel %vm2992, %v4497, %v3847
        %v4530 = vsel %vm2992, %v4498, %v3849
        %v4531 = vsel %vm2992, %v4499, %v3851
        %v4532 = vsel %vm2992, %v4500, %v3853
        %v4533 = vsel %vm2992, %v4501, %v3855
        %v4534 = vsel %vm2992, %v4502, %v3857
        %v4535 = vsel %vm2992, %v4503, %v3859
        %v4536 = vsel %vm2992, %v4504, %v3861
        %v4537 = vsel %vm2992, %v4505, %v3863
        %v4538 = vsel %vm2992, %v4506, %v3865
        %v4539 = vsel %vm2992, %v4507, %v3867
        %v4540 = vsel %vm3025, %v4508, %v3933
        %v4541 = vsel %vm3025, %v4509, %v3935
        %v4542 = vsel %vm3025, %v4510, %v3937
        %v4543 = vsel %vm3025, %v4511, %v3939
        %v4544 = vsel %vm3025, %v4512, %v3941
        %v4545 = vsel %vm3025, %v4513, %v3943
        %v4546 = vsel %vm3025, %v4514, %v3945
        %v4547 = vsel %vm3025, %v4515, %v3947
        %v4548 = vsel %vm3025, %v4516, %v3949
        %v4549 = vsel %vm3025, %v4517, %v3951
        %v4550 = vsel %vm3025, %v4518, %v3953
        %v4551 = vsel %vm3025, %v4519, %v3955
        %v4552 = vsel %vm3025, %v4520, %v3957
        %v4553 = vsel %vm3025, %v4521, %v3959
        %v4554 = vsel %vm3025, %v4522, %v3961
        %v4555 = vsel %vm3025, %v4523, %v3963
        %v4556 = vsel %vm3025, %v4524, %v3965
        %v4557 = vsel %vm3025, %v4525, %v3967
        %v4558 = vsel %vm3025, %v4526, %v3969
        %v4559 = vsel %vm3025, %v4527, %v3971
        %v4560 = vsel %vm3025, %v4528, %v3973
        %v4561 = vsel %vm3025, %v4529, %v3975
        %v4562 = vsel %vm3025, %v4530, %v3977
        %v4563 = vsel %vm3025, %v4531, %v3979
        %v4564 = vsel %vm3025, %v4532, %v3981
        %v4565 = vsel %vm3025, %v4533, %v3983
        %v4566 = vsel %vm3025, %v4534, %v3985
        %v4567 = vsel %vm3025, %v4535, %v3987
        %v4568 = vsel %vm3025, %v4536, %v3989
        %v4569 = vsel %vm3025, %v4537, %v3991
        %v4570 = vsel %vm3025, %v4538, %v3993
        %v4571 = vsel %vm3025, %v4539, %v3995
        %v4572 = vsel %vm3058, %v4540, %v4061
        %v4573 = vsel %vm3058, %v4541, %v4063
        %v4574 = vsel %vm3058, %v4542, %v4065
        %v4575 = vsel %vm3058, %v4543, %v4067
        %v4576 = vsel %vm3058, %v4544, %v4069
        %v4577 = vsel %vm3058, %v4545, %v4071
        %v4578 = vsel %vm3058, %v4546, %v4073
        %v4579 = vsel %vm3058, %v4547, %v4075
        %v4580 = vsel %vm3058, %v4548, %v4077
        %v4581 = vsel %vm3058, %v4549, %v4079
        %v4582 = vsel %vm3058, %v4550, %v4081
        %v4583 = vsel %vm3058, %v4551, %v4083
        %v4584 = vsel %vm3058, %v4552, %v4085
        %v4585 = vsel %vm3058, %v4553, %v4087
        %v4586 = vsel %vm3058, %v4554, %v4089
        %v4587 = vsel %vm3058, %v4555, %v4091
        %v4588 = vsel %vm3058, %v4556, %v4093
        %v4589 = vsel %vm3058, %v4557, %v4095
        %v4590 = vsel %vm3058, %v4558, %v4097
        %v4591 = vsel %vm3058, %v4559, %v4099
        %v4592 = vsel %vm3058, %v4560, %v4101
        %v4593 = vsel %vm3058, %v4561, %v4103
        %v4594 = vsel %vm3058, %v4562, %v4105
        %v4595 = vsel %vm3058, %v4563, %v4107
        %v4596 = vsel %vm3058, %v4564, %v4109
        %v4597 = vsel %vm3058, %v4565, %v4111
        %v4598 = vsel %vm3058, %v4566, %v4113
        %v4599 = vsel %vm3058, %v4567, %v4115
        %v4600 = vsel %vm3058, %v4568, %v4117
        %v4601 = vsel %vm3058, %v4569, %v4119
        %v4602 = vsel %vm3058, %v4570, %v4121
        %v4603 = vsel %vm3058, %v4571, %v4123
        %v4604 = vsel %vm3091, %v4572, %v4189
        %v4605 = vsel %vm3091, %v4573, %v4191
        %v4606 = vsel %vm3091, %v4574, %v4193
        %v4607 = vsel %vm3091, %v4575, %v4195
        %v4608 = vsel %vm3091, %v4576, %v4197
        %v4609 = vsel %vm3091, %v4577, %v4199
        %v4610 = vsel %vm3091, %v4578, %v4201
        %v4611 = vsel %vm3091, %v4579, %v4203
        %v4612 = vsel %vm3091, %v4580, %v4205
        %v4613 = vsel %vm3091, %v4581, %v4207
        %v4614 = vsel %vm3091, %v4582, %v4209
        %v4615 = vsel %vm3091, %v4583, %v4211
        %v4616 = vsel %vm3091, %v4584, %v4213
        %v4617 = vsel %vm3091, %v4585, %v4215
        %v4618 = vsel %vm3091, %v4586, %v4217
        %v4619 = vsel %vm3091, %v4587, %v4219
        %v4620 = vsel %vm3091, %v4588, %v4221
        %v4621 = vsel %vm3091, %v4589, %v4223
        %v4622 = vsel %vm3091, %v4590, %v4225
        %v4623 = vsel %vm3091, %v4591, %v4227
        %v4624 = vsel %vm3091, %v4592, %v4229
        %v4625 = vsel %vm3091, %v4593, %v4231
        %v4626 = vsel %vm3091, %v4594, %v4233
        %v4627 = vsel %vm3091, %v4595, %v4235
        %v4628 = vsel %vm3091, %v4596, %v4237
        %v4629 = vsel %vm3091, %v4597, %v4239
        %v4630 = vsel %vm3091, %v4598, %v4241
        %v4631 = vsel %vm3091, %v4599, %v4243
        %v4632 = vsel %vm3091, %v4600, %v4245
        %v4633 = vsel %vm3091, %v4601, %v4247
        %v4634 = vsel %vm3091, %v4602, %v4249
        %v4635 = vsel %vm3091, %v4603, %v4251
        %v4636 = vsel %vm3124, %v4604, %v4317
        %v4637 = vsel %vm3124, %v4605, %v4319
        %v4638 = vsel %vm3124, %v4606, %v4321
        %v4639 = vsel %vm3124, %v4607, %v4323
        %v4640 = vsel %vm3124, %v4608, %v4325
        %v4641 = vsel %vm3124, %v4609, %v4327
        %v4642 = vsel %vm3124, %v4610, %v4329
        %v4643 = vsel %vm3124, %v4611, %v4331
        %v4644 = vsel %vm3124, %v4612, %v4333
        %v4645 = vsel %vm3124, %v4613, %v4335
        %v4646 = vsel %vm3124, %v4614, %v4337
        %v4647 = vsel %vm3124, %v4615, %v4339
        %v4648 = vsel %vm3124, %v4616, %v4341
        %v4649 = vsel %vm3124, %v4617, %v4343
        %v4650 = vsel %vm3124, %v4618, %v4345
        %v4651 = vsel %vm3124, %v4619, %v4347
        %v4652 = vsel %vm3124, %v4620, %v4349
        %v4653 = vsel %vm3124, %v4621, %v4351
        %v4654 = vsel %vm3124, %v4622, %v4353
        %v4655 = vsel %vm3124, %v4623, %v4355
        %v4656 = vsel %vm3124, %v4624, %v4357
        %v4657 = vsel %vm3124, %v4625, %v4359
        %v4658 = vsel %vm3124, %v4626, %v4361
        %v4659 = vsel %vm3124, %v4627, %v4363
        %v4660 = vsel %vm3124, %v4628, %v4365
        %v4661 = vsel %vm3124, %v4629, %v4367
        %v4662 = vsel %vm3124, %v4630, %v4369
        %v4663 = vsel %vm3124, %v4631, %v4371
        %v4664 = vsel %vm3124, %v4632, %v4373
        %v4665 = vsel %vm3124, %v4633, %v4375
        %v4666 = vsel %vm3124, %v4634, %v4377
        %v4667 = vsel %vm3124, %v4635, %v4379
        %4700 = vrot.lane.b32.xlu0 %v4636, 64
        %v4701 = vpop.permute.xlu0 %4700
        %4702 = vrot.lane.b32.xlu0 %v4637, 64
        %v4703 = vpop.permute.xlu0 %4702
        %4704 = vrot.lane.b32.xlu0 %v4638, 64
        %v4705 = vpop.permute.xlu0 %4704
        %4706 = vrot.lane.b32.xlu0 %v4639, 64
        %v4707 = vpop.permute.xlu0 %4706
        %4708 = vrot.lane.b32.xlu0 %v4640, 64
        %v4709 = vpop.permute.xlu0 %4708
        %4710 = vrot.lane.b32.xlu0 %v4641, 64
        %v4711 = vpop.permute.xlu0 %4710
        %4712 = vrot.lane.b32.xlu0 %v4642, 64
        %v4713 = vpop.permute.xlu0 %4712
        %4714 = vrot.lane.b32.xlu0 %v4643, 64
        %v4715 = vpop.permute.xlu0 %4714
        %4716 = vrot.lane.b32.xlu0 %v4644, 64
        %v4717 = vpop.permute.xlu0 %4716
        %4718 = vrot.lane.b32.xlu0 %v4645, 64
        %v4719 = vpop.permute.xlu0 %4718
        %4720 = vrot.lane.b32.xlu0 %v4646, 64
        %v4721 = vpop.permute.xlu0 %4720
        %4722 = vrot.lane.b32.xlu0 %v4647, 64
        %v4723 = vpop.permute.xlu0 %4722
        %4724 = vrot.lane.b32.xlu0 %v4648, 64
        %v4725 = vpop.permute.xlu0 %4724
        %4726 = vrot.lane.b32.xlu0 %v4649, 64
        %v4727 = vpop.permute.xlu0 %4726
        %4728 = vrot.lane.b32.xlu0 %v4650, 64
        %v4729 = vpop.permute.xlu0 %4728
        %4730 = vrot.lane.b32.xlu0 %v4651, 64
        %v4731 = vpop.permute.xlu0 %4730
        %4732 = vrot.lane.b32.xlu0 %v4652, 64
        %v4733 = vpop.permute.xlu0 %4732
        %4734 = vrot.lane.b32.xlu0 %v4653, 64
        %v4735 = vpop.permute.xlu0 %4734
        %4736 = vrot.lane.b32.xlu0 %v4654, 64
        %v4737 = vpop.permute.xlu0 %4736
        %4738 = vrot.lane.b32.xlu0 %v4655, 64
        %v4739 = vpop.permute.xlu0 %4738
        %4740 = vrot.lane.b32.xlu0 %v4656, 64
        %v4741 = vpop.permute.xlu0 %4740
        %4742 = vrot.lane.b32.xlu0 %v4657, 64
        %v4743 = vpop.permute.xlu0 %4742
        %4744 = vrot.lane.b32.xlu0 %v4658, 64
        %v4745 = vpop.permute.xlu0 %4744
        %4746 = vrot.lane.b32.xlu0 %v4659, 64
        %v4747 = vpop.permute.xlu0 %4746
        %4748 = vrot.lane.b32.xlu0 %v4660, 64
        %v4749 = vpop.permute.xlu0 %4748
        %4750 = vrot.lane.b32.xlu0 %v4661, 64
        %v4751 = vpop.permute.xlu0 %4750
        %4752 = vrot.lane.b32.xlu0 %v4662, 64
        %v4753 = vpop.permute.xlu0 %4752
        %4754 = vrot.lane.b32.xlu0 %v4663, 64
        %v4755 = vpop.permute.xlu0 %4754
        %4756 = vrot.lane.b32.xlu0 %v4664, 64
        %v4757 = vpop.permute.xlu0 %4756
        %4758 = vrot.lane.b32.xlu0 %v4665, 64
        %v4759 = vpop.permute.xlu0 %4758
        %4760 = vrot.lane.b32.xlu0 %v4666, 64
        %v4761 = vpop.permute.xlu0 %4760
        %4762 = vrot.lane.b32.xlu0 %v4667, 64
        %v4763 = vpop.permute.xlu0 %4762
        %vm4796 = vcmask 523264
        %v4797 = vsel %vm4796, %v3356, %v4701
        %v4798 = vsel %vm4796, %v3357, %v4703
        %v4799 = vsel %vm4796, %v3358, %v4705
        %v4800 = vsel %vm4796, %v3359, %v4707
        %v4801 = vsel %vm4796, %v3360, %v4709
        %v4802 = vsel %vm4796, %v3361, %v4711
        %v4803 = vsel %vm4796, %v3362, %v4713
        %v4804 = vsel %vm4796, %v3363, %v4715
        %v4805 = vsel %vm4796, %v3364, %v4717
        %v4806 = vsel %vm4796, %v3365, %v4719
        %v4807 = vsel %vm4796, %v3366, %v4721
        %v4808 = vsel %vm4796, %v3367, %v4723
        %v4809 = vsel %vm4796, %v3368, %v4725
        %v4810 = vsel %vm4796, %v3369, %v4727
        %v4811 = vsel %vm4796, %v3370, %v4729
        %v4812 = vsel %vm4796, %v3371, %v4731
        %v4813 = vsel %vm4796, %v3372, %v4733
        %v4814 = vsel %vm4796, %v3373, %v4735
        %v4815 = vsel %vm4796, %v3374, %v4737
        %v4816 = vsel %vm4796, %v3375, %v4739
        %v4817 = vsel %vm4796, %v3376, %v4741
        %v4818 = vsel %vm4796, %v3377, %v4743
        %v4819 = vsel %vm4796, %v3378, %v4745
        %v4820 = vsel %vm4796, %v3379, %v4747
        %v4821 = vsel %vm4796, %v3380, %v4749
        %v4822 = vsel %vm4796, %v3381, %v4751
        %v4823 = vsel %vm4796, %v3382, %v4753
        %v4824 = vsel %vm4796, %v3383, %v4755
        %v4825 = vsel %vm4796, %v3384, %v4757
        %v4826 = vsel %vm4796, %v3385, %v4759
        %v4827 = vsel %vm4796, %v3386, %v4761
        %v4828 = vsel %vm4796, %v3387, %v4763
        %v4829 = vld [vmem:[%s1] sm:$0xff]
        %v4830 = vld [vmem:[%s1 + $0x8] sm:$0xff]
        %v4831 = vld [vmem:[%s1 + $0x10] sm:$0xff]
        %v4832 = vld [vmem:[%s1 + $0x18] sm:$0xff]
        %v4833 = vld [vmem:[%s1 + $0x20] sm:$0xff]
        %v4834 = vld [vmem:[%s1 + $0x28] sm:$0xff]
        %v4835 = vld [vmem:[%s1 + $0x30] sm:$0xff]
        %v4836 = vld [vmem:[%s1 + $0x38] sm:$0xff]
        %v4837 = vld [vmem:[%s1 + $0x40] sm:$0xff]
        %v4838 = vld [vmem:[%s1 + $0x48] sm:$0xff]
        %v4839 = vld [vmem:[%s1 + $0x50] sm:$0xff]
        %v4840 = vld [vmem:[%s1 + $0x58] sm:$0xff]
        %v4841 = vld [vmem:[%s1 + $0x60] sm:$0xf]
        %v4842 = vld [vmem:[%s2] sm:$0x1]
        %v4844 = vlaneseq
        %v4845 = vshrl.u32 %v4844, 7
        %v4846 = vsub.s32 0, %v4845
        %v4847 = vrot.slane %v4842, %v4846
        %vm4849 = vcmask 818176
        %v4851 = vsel %vm4849, %v4797, 0
        %v4854 = vsel %vm4849, %v4798, 0
        %v4857 = vsel %vm4849, %v4799, 0
        %v4860 = vsel %vm4849, %v4800, 0
        %v4863 = vsel %vm4849, %v4801, 0
        %v4866 = vsel %vm4849, %v4802, 0
        %v4869 = vsel %vm4849, %v4803, 0
        %v4872 = vsel %vm4849, %v4804, 0
        %v4875 = vsel %vm4849, %v4805, 0
        %v4878 = vsel %vm4849, %v4806, 0
        %v4881 = vsel %vm4849, %v4807, 0
        %v4884 = vsel %vm4849, %v4808, 0
        %v4887 = vsel %vm4849, %v4809, 0
        %v4890 = vsel %vm4849, %v4810, 0
        %v4893 = vsel %vm4849, %v4811, 0
        %v4896 = vsel %vm4849, %v4812, 0
        %v4899 = vsel %vm4849, %v4813, 0
        %v4902 = vsel %vm4849, %v4814, 0
        %v4905 = vsel %vm4849, %v4815, 0
        %v4908 = vsel %vm4849, %v4816, 0
        %v4911 = vsel %vm4849, %v4817, 0
        %v4914 = vsel %vm4849, %v4818, 0
        %v4917 = vsel %vm4849, %v4819, 0
        %v4920 = vsel %vm4849, %v4820, 0
        %v4923 = vsel %vm4849, %v4821, 0
        %v4926 = vsel %vm4849, %v4822, 0
        %v4929 = vsel %vm4849, %v4823, 0
        %v4932 = vsel %vm4849, %v4824, 0
        %v4935 = vsel %vm4849, %v4825, 0
        %v4938 = vsel %vm4849, %v4826, 0
        %v4941 = vsel %vm4849, %v4827, 0
        %v4944 = vsel %vm4849, %v4828, 0
        %vm4946 = vcmask 1043456
        %v4948 = vsel %vm4946, %v4841, 0
        %4950 = vmatprep.subr.mxu0 0.0
        %4951 = vmatpush1.msra.mxu0 0.0
        %4952 = vmatprep.subr.mxu0 0.0
        %4953 = vmatpush1.msra.mxu0 0.0
        %4954 = vmatprep.subr.mxu0 0.0
        %4955 = vmatpush1.msra.mxu0 0.0
        %4956 = vmatprep.subr.mxu0 0.0
        %4957 = vmatpush1.msra.mxu0 %v4948
        %4958 = vmatprep.subr.mxu0 0.0
        %4959 = vmatpush1.msra.mxu0 %v4840
        %4960 = vmatprep.subr.mxu0 0.0
        %4961 = vmatpush1.msra.mxu0 %v4839
        %4962 = vmatprep.subr.mxu0 0.0
        %4963 = vmatpush1.msra.mxu0 %v4838
        %4964 = vmatprep.subr.mxu0 0.0
        %4965 = vmatpush1.msra.mxu0 %v4837
        %4966 = vmatprep.subr.mxu0 0.0
        %4967 = vmatpush1.msra.mxu0 %v4836
        %4968 = vmatprep.subr.mxu0 0.0
        %4969 = vmatpush1.msra.mxu0 %v4835
        %4970 = vmatprep.subr.mxu0 0.0
        %4971 = vmatpush1.msra.mxu0 %v4834
        %4972 = vmatprep.subr.mxu0 0.0
        %4973 = vmatpush1.msra.mxu0 %v4833
        %4974 = vmatprep.subr.mxu0 0.0
        %4975 = vmatpush1.msra.mxu0 %v4832
        %4976 = vmatprep.subr.mxu0 0.0
        %4977 = vmatpush1.msra.mxu0 %v4831
        %4978 = vmatprep.subr.mxu0 0.0
        %4979 = vmatpush1.msra.mxu0 %v4830
        %4980 = vmatprep.subr.mxu0 0.0
        %4981 = vmatpush1.msra.mxu0 %v4829
        %4982 = vmatprep.subr.mxu0 0.0
        %4983 = vmatpush2.msra.mxu0 0.0
        %4984 = vmatprep.subr.mxu0 0.0
        %4985 = vmatpush2.msra.mxu0 0.0
        %4986 = vmatprep.subr.mxu0 0.0
        %4987 = vmatpush2.msra.mxu0 0.0
        %4988 = vmatprep.subr.mxu0 0.0
        %4989 = vmatpush2.msra.mxu0 0.0
        %4990 = vmatprep.subr.mxu0 0.0
        %4991 = vmatpush2.msra.mxu0 0.0
        %4992 = vmatprep.subr.mxu0 0.0
        %4993 = vmatpush2.msra.mxu0 0.0
        %4994 = vmatprep.subr.mxu0 0.0
        %4995 = vmatpush2.msra.mxu0 0.0
        %4996 = vmatprep.subr.mxu0 0.0
        %4997 = vmatpush2.msra.mxu0 0.0
        %4998 = vmatprep.subr.mxu0 0.0
        %4999 = vmatpush2.msra.mxu0 0.0
        %5000 = vmatprep.subr.mxu0 0.0
        %5001 = vmatpush2.msra.mxu0 0.0
        %5002 = vmatprep.subr.mxu0 0.0
        %5003 = vmatpush2.msra.mxu0 0.0
        %5004 = vmatprep.subr.mxu0 0.0
        %5005 = vmatpush2.msra.mxu0 0.0
        %5006 = vmatprep.subr.mxu0 0.0
        %5007 = vmatpush2.msra.mxu0 0.0
        %5008 = vmatprep.subr.mxu0 0.0
        %5009 = vmatpush2.msra.mxu0 0.0
        %5010 = vmatprep.subr.mxu0 0.0
        %5011 = vmatpush2.msra.mxu0 0.0
        %5012 = vmatprep.subr.mxu0 0.0
        %5013 = vmatpush2.msra.mxu0 0.0
        %5014 = vmatprep.mubr.f32.mxu0 0.0
        %5015 = vmatmul.mubr.f32.gmra.mxu0 %v4851
        %v5016 = vpop.f32.mrf.mxu0
        %v5017 = vadd.f32 %v4847, %v5016
        %v5018 = vpop.f32.mrf.mxu0
        %5019 = vmatprep.mubr.f32.mxu0 0.0
        %5020 = vmatmul.mubr.f32.gmra.mxu0 %v4854
        %v5021 = vpop.f32.mrf.mxu0
        %v5022 = vadd.f32 %v4847, %v5021
        %v5023 = vpop.f32.mrf.mxu0
        %5024 = vmatprep.mubr.f32.mxu0 0.0
        %5025 = vmatmul.mubr.f32.gmra.mxu0 %v4857
        %v5026 = vpop.f32.mrf.mxu0
        %v5027 = vadd.f32 %v4847, %v5026
        %v5028 = vpop.f32.mrf.mxu0
        %5029 = vmatprep.mubr.f32.mxu0 0.0
        %5030 = vmatmul.mubr.f32.gmra.mxu0 %v4860
        %v5031 = vpop.f32.mrf.mxu0
        %v5032 = vadd.f32 %v4847, %v5031
        %v5033 = vpop.f32.mrf.mxu0
        %5034 = vmatprep.mubr.f32.mxu0 0.0
        %5035 = vmatmul.mubr.f32.gmra.mxu0 %v4863
        %v5036 = vpop.f32.mrf.mxu0
        %v5037 = vadd.f32 %v4847, %v5036
        %v5038 = vpop.f32.mrf.mxu0
        %5039 = vmatprep.mubr.f32.mxu0 0.0
        %5040 = vmatmul.mubr.f32.gmra.mxu0 %v4866
        %v5041 = vpop.f32.mrf.mxu0
        %v5042 = vadd.f32 %v4847, %v5041
        %v5043 = vpop.f32.mrf.mxu0
        %5044 = vmatprep.mubr.f32.mxu0 0.0
        %5045 = vmatmul.mubr.f32.gmra.mxu0 %v4869
        %v5046 = vpop.f32.mrf.mxu0
        %v5047 = vadd.f32 %v4847, %v5046
        %v5048 = vpop.f32.mrf.mxu0
        %5049 = vmatprep.mubr.f32.mxu0 0.0
        %5050 = vmatmul.mubr.f32.gmra.mxu0 %v4872
        %v5051 = vpop.f32.mrf.mxu0
        %v5052 = vadd.f32 %v4847, %v5051
        %v5053 = vpop.f32.mrf.mxu0
        %5054 = vmatprep.mubr.f32.mxu0 0.0
        %5055 = vmatmul.mubr.f32.gmra.mxu0 %v4875
        %v5056 = vpop.f32.mrf.mxu0
        %v5057 = vadd.f32 %v4847, %v5056
        %v5058 = vpop.f32.mrf.mxu0
        %5059 = vmatprep.mubr.f32.mxu0 0.0
        %5060 = vmatmul.mubr.f32.gmra.mxu0 %v4878
        %v5061 = vpop.f32.mrf.mxu0
        %v5062 = vadd.f32 %v4847, %v5061
        %v5063 = vpop.f32.mrf.mxu0
        %5064 = vmatprep.mubr.f32.mxu0 0.0
        %5065 = vmatmul.mubr.f32.gmra.mxu0 %v4881
        %v5066 = vpop.f32.mrf.mxu0
        %v5067 = vadd.f32 %v4847, %v5066
        %v5068 = vpop.f32.mrf.mxu0
        %5069 = vmatprep.mubr.f32.mxu0 0.0
        %5070 = vmatmul.mubr.f32.gmra.mxu0 %v4884
        %v5071 = vpop.f32.mrf.mxu0
        %v5072 = vadd.f32 %v4847, %v5071
        %v5073 = vpop.f32.mrf.mxu0
        %5074 = vmatprep.mubr.f32.mxu0 0.0
        %5075 = vmatmul.mubr.f32.gmra.mxu0 %v4887
        %v5076 = vpop.f32.mrf.mxu0
        %v5077 = vadd.f32 %v4847, %v5076
        %v5078 = vpop.f32.mrf.mxu0
        %5079 = vmatprep.mubr.f32.mxu0 0.0
        %5080 = vmatmul.mubr.f32.gmra.mxu0 %v4890
        %v5081 = vpop.f32.mrf.mxu0
        %v5082 = vadd.f32 %v4847, %v5081
        %v5083 = vpop.f32.mrf.mxu0
        %5084 = vmatprep.mubr.f32.mxu0 0.0
        %5085 = vmatmul.mubr.f32.gmra.mxu0 %v4893
        %v5086 = vpop.f32.mrf.mxu0
        %v5087 = vadd.f32 %v4847, %v5086
        %v5088 = vpop.f32.mrf.mxu0
        %5089 = vmatprep.mubr.f32.mxu0 0.0
        %5090 = vmatmul.mubr.f32.gmra.mxu0 %v4896
        %v5091 = vpop.f32.mrf.mxu0
        %v5092 = vadd.f32 %v4847, %v5091
        %v5093 = vpop.f32.mrf.mxu0
        %5094 = vmatprep.mubr.f32.mxu0 0.0
        %5095 = vmatmul.mubr.f32.gmra.mxu0 %v4899
        %v5096 = vpop.f32.mrf.mxu0
        %v5097 = vadd.f32 %v4847, %v5096
        %v5098 = vpop.f32.mrf.mxu0
        %5099 = vmatprep.mubr.f32.mxu0 0.0
        %5100 = vmatmul.mubr.f32.gmra.mxu0 %v4902
        %v5101 = vpop.f32.mrf.mxu0
        %v5102 = vadd.f32 %v4847, %v5101
        %v5103 = vpop.f32.mrf.mxu0
        %5104 = vmatprep.mubr.f32.mxu0 0.0
        %5105 = vmatmul.mubr.f32.gmra.mxu0 %v4905
        %v5106 = vpop.f32.mrf.mxu0
        %v5107 = vadd.f32 %v4847, %v5106
        %v5108 = vpop.f32.mrf.mxu0
        %5109 = vmatprep.mubr.f32.mxu0 0.0
        %5110 = vmatmul.mubr.f32.gmra.mxu0 %v4908
        %v5111 = vpop.f32.mrf.mxu0
        %v5112 = vadd.f32 %v4847, %v5111
        %v5113 = vpop.f32.mrf.mxu0
        %5114 = vmatprep.mubr.f32.mxu0 0.0
        %5115 = vmatmul.mubr.f32.gmra.mxu0 %v4911
        %v5116 = vpop.f32.mrf.mxu0
        %v5117 = vadd.f32 %v4847, %v5116
        %v5118 = vpop.f32.mrf.mxu0
        %5119 = vmatprep.mubr.f32.mxu0 0.0
        %5120 = vmatmul.mubr.f32.gmra.mxu0 %v4914
        %v5121 = vpop.f32.mrf.mxu0
        %v5122 = vadd.f32 %v4847, %v5121
        %v5123 = vpop.f32.mrf.mxu0
        %5124 = vmatprep.mubr.f32.mxu0 0.0
        %5125 = vmatmul.mubr.f32.gmra.mxu0 %v4917
        %v5126 = vpop.f32.mrf.mxu0
        %v5127 = vadd.f32 %v4847, %v5126
        %v5128 = vpop.f32.mrf.mxu0
        %5129 = vmatprep.mubr.f32.mxu0 0.0
        %5130 = vmatmul.mubr.f32.gmra.mxu0 %v4920
        %v5131 = vpop.f32.mrf.mxu0
        %v5132 = vadd.f32 %v4847, %v5131
        %v5133 = vpop.f32.mrf.mxu0
        %5134 = vmatprep.mubr.f32.mxu0 0.0
        %5135 = vmatmul.mubr.f32.gmra.mxu0 %v4923
        %v5136 = vpop.f32.mrf.mxu0
        %v5137 = vadd.f32 %v4847, %v5136
        %v5138 = vpop.f32.mrf.mxu0
        %5139 = vmatprep.mubr.f32.mxu0 0.0
        %5140 = vmatmul.mubr.f32.gmra.mxu0 %v4926
        %v5141 = vpop.f32.mrf.mxu0
        %v5142 = vadd.f32 %v4847, %v5141
        %v5143 = vpop.f32.mrf.mxu0
        %5144 = vmatprep.mubr.f32.mxu0 0.0
        %5145 = vmatmul.mubr.f32.gmra.mxu0 %v4929
        %v5146 = vpop.f32.mrf.mxu0
        %v5147 = vadd.f32 %v4847, %v5146
        %v5148 = vpop.f32.mrf.mxu0
        %5149 = vmatprep.mubr.f32.mxu0 0.0
        %5150 = vmatmul.mubr.f32.gmra.mxu0 %v4932
        %v5151 = vpop.f32.mrf.mxu0
        %v5152 = vadd.f32 %v4847, %v5151
        %v5153 = vpop.f32.mrf.mxu0
        %5154 = vmatprep.mubr.f32.mxu0 0.0
        %5155 = vmatmul.mubr.f32.gmra.mxu0 %v4935
        %v5156 = vpop.f32.mrf.mxu0
        %v5157 = vadd.f32 %v4847, %v5156
        %v5158 = vpop.f32.mrf.mxu0
        %5159 = vmatprep.mubr.f32.mxu0 0.0
        %5160 = vmatmul.mubr.f32.gmra.mxu0 %v4938
        %v5161 = vpop.f32.mrf.mxu0
        %v5162 = vadd.f32 %v4847, %v5161
        %v5163 = vpop.f32.mrf.mxu0
        %5164 = vmatprep.mubr.f32.mxu0 0.0
        %5165 = vmatmul.mubr.f32.gmra.mxu0 %v4941
        %v5166 = vpop.f32.mrf.mxu0
        %v5167 = vadd.f32 %v4847, %v5166
        %v5168 = vpop.f32.mrf.mxu0
        %5169 = vmatprep.mubr.f32.mxu0 0.0
        %5170 = vmatmul.mubr.f32.gmra.mxu0 %v4944
        %v5171 = vpop.f32.mrf.mxu0
        %v5172 = vadd.f32 %v4847, %v5171
        %v5173 = vpop.f32.mrf.mxu0
        %5174 = vdwg.mxu0
        %v5175 = vlaneseq
        %v5176 = vshrl.u32 %v5175, 7
        %v5177 = vadd.s32 %v5176, 8
        %vm5178 = vcmp.ge.s32.totalorder %v5176, 1
        %vm5179 = vcmp.ge.s32.totalorder %v5177, 1
        %vm5180 = vmand 0, %vm5178
        %vm5181 = vmand 0, %vm5179
        %vm5182 = vmand 1, %vm5178
        %vm5183 = vmand 1, %vm5179
        %v5184 = vsel %vm5180, %v362, -inf
        %v5185 = vsel %vm5181, %v363, -inf
        %v5186 = vsel %vm5182, %v364, -inf
        %v5187 = vsel %vm5183, %v365, -inf
        %v5188 = vsel %vm5182, %v366, -inf
        %v5189 = vsel %vm5183, %v367, -inf
        %v5190 = vsel %vm5182, %v368, -inf
        %v5191 = vsel %vm5183, %v369, -inf
        %v5192 = vsel %vm5182, %v370, -inf
        %v5193 = vsel %vm5183, %v371, -inf
        %v5194 = vsel %vm5182, %v372, -inf
        %v5195 = vsel %vm5183, %v373, -inf
        %v5196 = vsel %vm5182, %v374, -inf
        %v5197 = vsel %vm5183, %v375, -inf
        %v5198 = vsel %vm5182, %v376, -inf
        %v5199 = vsel %vm5183, %v377, -inf
        %v5200 = vsel %vm5182, %v378, -inf
        %v5201 = vsel %vm5183, %v379, -inf
        %v5202 = vsel %vm5182, %v380, -inf
        %v5203 = vsel %vm5183, %v381, -inf
        %v5204 = vsel %vm5182, %v382, -inf
        %v5205 = vsel %vm5183, %v383, -inf
        %v5206 = vsel %vm5182, %v384, -inf
        %v5207 = vsel %vm5183, %v385, -inf
        %v5208 = vsel %vm5182, %v386, -inf
        %v5209 = vsel %vm5183, %v387, -inf
        %v5210 = vsel %vm5182, %v388, -inf
        %v5211 = vsel %vm5183, %v389, -inf
        %v5212 = vsel %vm5182, %v390, -inf
        %v5213 = vsel %vm5183, %v391, -inf
        %v5214 = vsel %vm5182, %v392, -inf
        %v5215 = vsel %vm5183, %v393, -inf
        %v5216 = vsel 0, %v394, -inf
        %v5217 = vsel 0, %v395, -inf
        %v5218 = vsel 1, %v396, -inf
        %v5219 = vsel 1, %v397, -inf
        %v5220 = vsel 1, %v398, -inf
        %v5221 = vsel 1, %v399, -inf
        %v5222 = vsel 1, %v400, -inf
        %v5223 = vsel 1, %v401, -inf
        %v5224 = vsel 1, %v402, -inf
        %v5225 = vsel 1, %v403, -inf
        %v5226 = vsel 1, %v404, -inf
        %v5227 = vsel 1, %v405, -inf
        %v5228 = vsel 1, %v406, -inf
        %v5229 = vsel 1, %v407, -inf
        %v5230 = vsel 1, %v408, -inf
        %v5231 = vsel 1, %v409, -inf
        %v5232 = vsel 1, %v410, -inf
        %v5233 = vsel 1, %v411, -inf
        %v5234 = vsel 1, %v412, -inf
        %v5235 = vsel 1, %v413, -inf
        %v5236 = vsel 1, %v414, -inf
        %v5237 = vsel 1, %v415, -inf
        %v5238 = vsel 1, %v416, -inf
        %v5239 = vsel 1, %v417, -inf
        %v5240 = vsel 1, %v418, -inf
        %v5241 = vsel 1, %v419, -inf
        %v5242 = vsel 1, %v420, -inf
        %v5243 = vsel 1, %v421, -inf
        %v5244 = vsel 1, %v422, -inf
        %v5245 = vsel 1, %v423, -inf
        %v5246 = vsel 1, %v424, -inf
        %v5247 = vsel 1, %v425, -inf
        %v5248 = vmax.f32 %v5184, %v5216
        %v5249 = vmax.f32 %v5185, %v5217
        %v5250 = vmax.f32 %v5186, %v5218
        %v5251 = vmax.f32 %v5187, %v5219
        %v5252 = vmax.f32 %v5188, %v5220
        %v5253 = vmax.f32 %v5189, %v5221
        %v5254 = vmax.f32 %v5190, %v5222
        %v5255 = vmax.f32 %v5191, %v5223
        %v5256 = vmax.f32 %v5192, %v5224
        %v5257 = vmax.f32 %v5193, %v5225
        %v5258 = vmax.f32 %v5194, %v5226
        %v5259 = vmax.f32 %v5195, %v5227
        %v5260 = vmax.f32 %v5196, %v5228
        %v5261 = vmax.f32 %v5197, %v5229
        %v5262 = vmax.f32 %v5198, %v5230
        %v5263 = vmax.f32 %v5199, %v5231
        %v5264 = vmax.f32 %v5200, %v5232
        %v5265 = vmax.f32 %v5201, %v5233
        %v5266 = vmax.f32 %v5202, %v5234
        %v5267 = vmax.f32 %v5203, %v5235
        %v5268 = vmax.f32 %v5204, %v5236
        %v5269 = vmax.f32 %v5205, %v5237
        %v5270 = vmax.f32 %v5206, %v5238
        %v5271 = vmax.f32 %v5207, %v5239
        %v5272 = vmax.f32 %v5208, %v5240
        %v5273 = vmax.f32 %v5209, %v5241
        %v5274 = vmax.f32 %v5210, %v5242
        %v5275 = vmax.f32 %v5211, %v5243
        %v5276 = vmax.f32 %v5212, %v5244
        %v5277 = vmax.f32 %v5213, %v5245
        %v5278 = vmax.f32 %v5214, %v5246
        %v5279 = vmax.f32 %v5215, %v5247
        %vm5280 = vcmp.le.s32.totalorder %v5176, 14
        %vm5281 = vcmp.le.s32.totalorder %v5177, 14
        %vm5282 = vmand 0, %vm5280
        %vm5283 = vmand 0, %vm5281
        %vm5284 = vmand 1, %vm5280
        %vm5285 = vmand 1, %vm5281
        %v5286 = vsel %vm5282, %v426, -inf
        %v5287 = vsel %vm5283, %v427, -inf
        %v5288 = vsel %vm5284, %v428, -inf
        %v5289 = vsel %vm5285, %v429, -inf
        %v5290 = vsel %vm5284, %v430, -inf
        %v5291 = vsel %vm5285, %v431, -inf
        %v5292 = vsel %vm5284, %v432, -inf
        %v5293 = vsel %vm5285, %v433, -inf
        %v5294 = vsel %vm5284, %v434, -inf
        %v5295 = vsel %vm5285, %v435, -inf
        %v5296 = vsel %vm5284, %v436, -inf
        %v5297 = vsel %vm5285, %v437, -inf
        %v5298 = vsel %vm5284, %v438, -inf
        %v5299 = vsel %vm5285, %v439, -inf
        %v5300 = vsel %vm5284, %v440, -inf
        %v5301 = vsel %vm5285, %v441, -inf
        %v5302 = vsel %vm5284, %v442, -inf
        %v5303 = vsel %vm5285, %v443, -inf
        %v5304 = vsel %vm5284, %v444, -inf
        %v5305 = vsel %vm5285, %v445, -inf
        %v5306 = vsel %vm5284, %v446, -inf
        %v5307 = vsel %vm5285, %v447, -inf
        %v5308 = vsel %vm5284, %v448, -inf
        %v5309 = vsel %vm5285, %v449, -inf
        %v5310 = vsel %vm5284, %v450, -inf
        %v5311 = vsel %vm5285, %v451, -inf
        %v5312 = vsel %vm5284, %v452, -inf
        %v5313 = vsel %vm5285, %v453, -inf
        %v5314 = vsel %vm5284, %v454, -inf
        %v5315 = vsel %vm5285, %v455, -inf
        %v5316 = vsel %vm5284, %v456, -inf
        %v5317 = vsel %vm5285, %v457, -inf
        %v5318 = vmax.f32 %v5248, %v5286
        %v5319 = vmax.f32 %v5249, %v5287
        %v5320 = vmax.f32 %v5250, %v5288
        %v5321 = vmax.f32 %v5251, %v5289
        %v5322 = vmax.f32 %v5252, %v5290
        %v5323 = vmax.f32 %v5253, %v5291
        %v5324 = vmax.f32 %v5254, %v5292
        %v5325 = vmax.f32 %v5255, %v5293
        %v5326 = vmax.f32 %v5256, %v5294
        %v5327 = vmax.f32 %v5257, %v5295
        %v5328 = vmax.f32 %v5258, %v5296
        %v5329 = vmax.f32 %v5259, %v5297
        %v5330 = vmax.f32 %v5260, %v5298
        %v5331 = vmax.f32 %v5261, %v5299
        %v5332 = vmax.f32 %v5262, %v5300
        %v5333 = vmax.f32 %v5263, %v5301
        %v5334 = vmax.f32 %v5264, %v5302
        %v5335 = vmax.f32 %v5265, %v5303
        %v5336 = vmax.f32 %v5266, %v5304
        %v5337 = vmax.f32 %v5267, %v5305
        %v5338 = vmax.f32 %v5268, %v5306
        %v5339 = vmax.f32 %v5269, %v5307
        %v5340 = vmax.f32 %v5270, %v5308
        %v5341 = vmax.f32 %v5271, %v5309
        %v5342 = vmax.f32 %v5272, %v5310
        %v5343 = vmax.f32 %v5273, %v5311
        %v5344 = vmax.f32 %v5274, %v5312
        %v5345 = vmax.f32 %v5275, %v5313
        %v5346 = vmax.f32 %v5276, %v5314
        %v5347 = vmax.f32 %v5277, %v5315
        %v5348 = vmax.f32 %v5278, %v5316
        %v5349 = vmax.f32 %v5279, %v5317
        %v5350 = vsel %vm5178, %v523, -inf
        %v5351 = vsel %vm5179, %v524, -inf
        %v5352 = vsel %vm5178, %v525, -inf
        %v5353 = vsel %vm5179, %v526, -inf
        %v5354 = vsel %vm5178, %v527, -inf
        %v5355 = vsel %vm5179, %v528, -inf
        %v5356 = vsel %vm5178, %v529, -inf
        %v5357 = vsel %vm5179, %v530, -inf
        %v5358 = vsel %vm5178, %v531, -inf
        %v5359 = vsel %vm5179, %v532, -inf
        %v5360 = vsel %vm5178, %v533, -inf
        %v5361 = vsel %vm5179, %v534, -inf
        %v5362 = vsel %vm5178, %v535, -inf
        %v5363 = vsel %vm5179, %v536, -inf
        %v5364 = vsel %vm5178, %v537, -inf
        %v5365 = vsel %vm5179, %v538, -inf
        %v5366 = vsel %vm5178, %v539, -inf
        %v5367 = vsel %vm5179, %v540, -inf
        %v5368 = vsel %vm5178, %v541, -inf
        %v5369 = vsel %vm5179, %v542, -inf
        %v5370 = vsel %vm5178, %v543, -inf
        %v5371 = vsel %vm5179, %v544, -inf
        %v5372 = vsel %vm5178, %v545, -inf
        %v5373 = vsel %vm5179, %v546, -inf
        %v5374 = vsel %vm5178, %v547, -inf
        %v5375 = vsel %vm5179, %v548, -inf
        %v5376 = vsel %vm5178, %v549, -inf
        %v5377 = vsel %vm5179, %v550, -inf
        %v5378 = vsel %vm5178, %v551, -inf
        %v5379 = vsel %vm5179, %v552, -inf
        %v5380 = vsel %vm5178, %v553, -inf
        %v5381 = vsel %vm5179, %v554, -inf
        %v5382 = vmax.f32 %v5318, %v5350
        %v5383 = vmax.f32 %v5319, %v5351
        %v5384 = vmax.f32 %v5320, %v5352
        %v5385 = vmax.f32 %v5321, %v5353
        %v5386 = vmax.f32 %v5322, %v5354
        %v5387 = vmax.f32 %v5323, %v5355
        %v5388 = vmax.f32 %v5324, %v5356
        %v5389 = vmax.f32 %v5325, %v5357
        %v5390 = vmax.f32 %v5326, %v5358
        %v5391 = vmax.f32 %v5327, %v5359
        %v5392 = vmax.f32 %v5328, %v5360
        %v5393 = vmax.f32 %v5329, %v5361
        %v5394 = vmax.f32 %v5330, %v5362
        %v5395 = vmax.f32 %v5331, %v5363
        %v5396 = vmax.f32 %v5332, %v5364
        %v5397 = vmax.f32 %v5333, %v5365
        %v5398 = vmax.f32 %v5334, %v5366
        %v5399 = vmax.f32 %v5335, %v5367
        %v5400 = vmax.f32 %v5336, %v5368
        %v5401 = vmax.f32 %v5337, %v5369
        %v5402 = vmax.f32 %v5338, %v5370
        %v5403 = vmax.f32 %v5339, %v5371
        %v5404 = vmax.f32 %v5340, %v5372
        %v5405 = vmax.f32 %v5341, %v5373
        %v5406 = vmax.f32 %v5342, %v5374
        %v5407 = vmax.f32 %v5343, %v5375
        %v5408 = vmax.f32 %v5344, %v5376
        %v5409 = vmax.f32 %v5345, %v5377
        %v5410 = vmax.f32 %v5346, %v5378
        %v5411 = vmax.f32 %v5347, %v5379
        %v5412 = vmax.f32 %v5348, %v5380
        %v5413 = vmax.f32 %v5349, %v5381
        %v5414 = vmax.f32 %v5382, %v555
        %v5415 = vmax.f32 %v5383, %v556
        %v5416 = vmax.f32 %v5384, %v557
        %v5417 = vmax.f32 %v5385, %v558
        %v5418 = vmax.f32 %v5386, %v559
        %v5419 = vmax.f32 %v5387, %v560
        %v5420 = vmax.f32 %v5388, %v561
        %v5421 = vmax.f32 %v5389, %v562
        %v5422 = vmax.f32 %v5390, %v563
        %v5423 = vmax.f32 %v5391, %v564
        %v5424 = vmax.f32 %v5392, %v565
        %v5425 = vmax.f32 %v5393, %v566
        %v5426 = vmax.f32 %v5394, %v567
        %v5427 = vmax.f32 %v5395, %v568
        %v5428 = vmax.f32 %v5396, %v569
        %v5429 = vmax.f32 %v5397, %v570
        %v5430 = vmax.f32 %v5398, %v571
        %v5431 = vmax.f32 %v5399, %v572
        %v5432 = vmax.f32 %v5400, %v573
        %v5433 = vmax.f32 %v5401, %v574
        %v5434 = vmax.f32 %v5402, %v575
        %v5435 = vmax.f32 %v5403, %v576
        %v5436 = vmax.f32 %v5404, %v577
        %v5437 = vmax.f32 %v5405, %v578
        %v5438 = vmax.f32 %v5406, %v579
        %v5439 = vmax.f32 %v5407, %v580
        %v5440 = vmax.f32 %v5408, %v581
        %v5441 = vmax.f32 %v5409, %v582
        %v5442 = vmax.f32 %v5410, %v583
        %v5443 = vmax.f32 %v5411, %v584
        %v5444 = vmax.f32 %v5412, %v585
        %v5445 = vmax.f32 %v5413, %v586
        %v5446 = vsel %vm5280, %v587, -inf
        %v5447 = vsel %vm5281, %v588, -inf
        %v5448 = vsel %vm5280, %v589, -inf
        %v5449 = vsel %vm5281, %v590, -inf
        %v5450 = vsel %vm5280, %v591, -inf
        %v5451 = vsel %vm5281, %v592, -inf
        %v5452 = vsel %vm5280, %v593, -inf
        %v5453 = vsel %vm5281, %v594, -inf
        %v5454 = vsel %vm5280, %v595, -inf
        %v5455 = vsel %vm5281, %v596, -inf
        %v5456 = vsel %vm5280, %v597, -inf
        %v5457 = vsel %vm5281, %v598, -inf
        %v5458 = vsel %vm5280, %v599, -inf
        %v5459 = vsel %vm5281, %v600, -inf
        %v5460 = vsel %vm5280, %v601, -inf
        %v5461 = vsel %vm5281, %v602, -inf
        %v5462 = vsel %vm5280, %v603, -inf
        %v5463 = vsel %vm5281, %v604, -inf
        %v5464 = vsel %vm5280, %v605, -inf
        %v5465 = vsel %vm5281, %v606, -inf
        %v5466 = vsel %vm5280, %v607, -inf
        %v5467 = vsel %vm5281, %v608, -inf
        %v5468 = vsel %vm5280, %v609, -inf
        %v5469 = vsel %vm5281, %v610, -inf
        %v5470 = vsel %vm5280, %v611, -inf
        %v5471 = vsel %vm5281, %v612, -inf
        %v5472 = vsel %vm5280, %v613, -inf
        %v5473 = vsel %vm5281, %v614, -inf
        %v5474 = vsel %vm5280, %v615, -inf
        %v5475 = vsel %vm5281, %v616, -inf
        %v5476 = vsel %vm5280, %v617, -inf
        %v5477 = vsel %vm5281, %v618, -inf
        %v5478 = vmax.f32 %v5414, %v5446
        %v5479 = vmax.f32 %v5415, %v5447
        %v5480 = vmax.f32 %v5416, %v5448
        %v5481 = vmax.f32 %v5417, %v5449
        %v5482 = vmax.f32 %v5418, %v5450
        %v5483 = vmax.f32 %v5419, %v5451
        %v5484 = vmax.f32 %v5420, %v5452
        %v5485 = vmax.f32 %v5421, %v5453
        %v5486 = vmax.f32 %v5422, %v5454
        %v5487 = vmax.f32 %v5423, %v5455
        %v5488 = vmax.f32 %v5424, %v5456
        %v5489 = vmax.f32 %v5425, %v5457
        %v5490 = vmax.f32 %v5426, %v5458
        %v5491 = vmax.f32 %v5427, %v5459
        %v5492 = vmax.f32 %v5428, %v5460
        %v5493 = vmax.f32 %v5429, %v5461
        %v5494 = vmax.f32 %v5430, %v5462
        %v5495 = vmax.f32 %v5431, %v5463
        %v5496 = vmax.f32 %v5432, %v5464
        %v5497 = vmax.f32 %v5433, %v5465
        %v5498 = vmax.f32 %v5434, %v5466
        %v5499 = vmax.f32 %v5435, %v5467
        %v5500 = vmax.f32 %v5436, %v5468
        %v5501 = vmax.f32 %v5437, %v5469
        %v5502 = vmax.f32 %v5438, %v5470
        %v5503 = vmax.f32 %v5439, %v5471
        %v5504 = vmax.f32 %v5440, %v5472
        %v5505 = vmax.f32 %v5441, %v5473
        %v5506 = vmax.f32 %v5442, %v5474
        %v5507 = vmax.f32 %v5443, %v5475
        %v5508 = vmax.f32 %v5444, %v5476
        %v5509 = vmax.f32 %v5445, %v5477
        %v5510 = vsel %vm5182, %v684, -inf
        %v5511 = vsel %vm5183, %v685, -inf
        %v5512 = vsel %vm5182, %v686, -inf
        %v5513 = vsel %vm5183, %v687, -inf
        %v5514 = vsel %vm5182, %v688, -inf
        %v5515 = vsel %vm5183, %v689, -inf
        %v5516 = vsel %vm5182, %v690, -inf
        %v5517 = vsel %vm5183, %v691, -inf
        %v5518 = vsel %vm5182, %v692, -inf
        %v5519 = vsel %vm5183, %v693, -inf
        %v5520 = vsel %vm5182, %v694, -inf
        %v5521 = vsel %vm5183, %v695, -inf
        %v5522 = vsel %vm5182, %v696, -inf
        %v5523 = vsel %vm5183, %v697, -inf
        %v5524 = vsel %vm5182, %v698, -inf
        %v5525 = vsel %vm5183, %v699, -inf
        %v5526 = vsel %vm5182, %v700, -inf
        %v5527 = vsel %vm5183, %v701, -inf
        %v5528 = vsel %vm5182, %v702, -inf
        %v5529 = vsel %vm5183, %v703, -inf
        %v5530 = vsel %vm5182, %v704, -inf
        %v5531 = vsel %vm5183, %v705, -inf
        %v5532 = vsel %vm5182, %v706, -inf
        %v5533 = vsel %vm5183, %v707, -inf
        %v5534 = vsel %vm5182, %v708, -inf
        %v5535 = vsel %vm5183, %v709, -inf
        %v5536 = vsel %vm5182, %v710, -inf
        %v5537 = vsel %vm5183, %v711, -inf
        %v5538 = vsel %vm5182, %v712, -inf
        %v5539 = vsel %vm5183, %v713, -inf
        %v5540 = vsel %vm5180, %v714, -inf
        %v5541 = vsel %vm5181, %v715, -inf
        %v5542 = vmax.f32 %v5478, %v5510
        %v5543 = vmax.f32 %v5479, %v5511
        %v5544 = vmax.f32 %v5480, %v5512
        %v5545 = vmax.f32 %v5481, %v5513
        %v5546 = vmax.f32 %v5482, %v5514
        %v5547 = vmax.f32 %v5483, %v5515
        %v5548 = vmax.f32 %v5484, %v5516
        %v5549 = vmax.f32 %v5485, %v5517
        %v5550 = vmax.f32 %v5486, %v5518
        %v5551 = vmax.f32 %v5487, %v5519
        %v5552 = vmax.f32 %v5488, %v5520
        %v5553 = vmax.f32 %v5489, %v5521
        %v5554 = vmax.f32 %v5490, %v5522
        %v5555 = vmax.f32 %v5491, %v5523
        %v5556 = vmax.f32 %v5492, %v5524
        %v5557 = vmax.f32 %v5493, %v5525
        %v5558 = vmax.f32 %v5494, %v5526
        %v5559 = vmax.f32 %v5495, %v5527
        %v5560 = vmax.f32 %v5496, %v5528
        %v5561 = vmax.f32 %v5497, %v5529
        %v5562 = vmax.f32 %v5498, %v5530
        %v5563 = vmax.f32 %v5499, %v5531
        %v5564 = vmax.f32 %v5500, %v5532
        %v5565 = vmax.f32 %v5501, %v5533
        %v5566 = vmax.f32 %v5502, %v5534
        %v5567 = vmax.f32 %v5503, %v5535
        %v5568 = vmax.f32 %v5504, %v5536
        %v5569 = vmax.f32 %v5505, %v5537
        %v5570 = vmax.f32 %v5506, %v5538
        %v5571 = vmax.f32 %v5507, %v5539
        %v5572 = vmax.f32 %v5508, %v5540
        %v5573 = vmax.f32 %v5509, %v5541
        %v5574 = vsel 1, %v716, -inf
        %v5575 = vsel 1, %v717, -inf
        %v5576 = vsel 1, %v718, -inf
        %v5577 = vsel 1, %v719, -inf
        %v5578 = vsel 1, %v720, -inf
        %v5579 = vsel 1, %v721, -inf
        %v5580 = vsel 1, %v722, -inf
        %v5581 = vsel 1, %v723, -inf
        %v5582 = vsel 1, %v724, -inf
        %v5583 = vsel 1, %v725, -inf
        %v5584 = vsel 1, %v726, -inf
        %v5585 = vsel 1, %v727, -inf
        %v5586 = vsel 1, %v728, -inf
        %v5587 = vsel 1, %v729, -inf
        %v5588 = vsel 1, %v730, -inf
        %v5589 = vsel 1, %v731, -inf
        %v5590 = vsel 1, %v732, -inf
        %v5591 = vsel 1, %v733, -inf
        %v5592 = vsel 1, %v734, -inf
        %v5593 = vsel 1, %v735, -inf
        %v5594 = vsel 1, %v736, -inf
        %v5595 = vsel 1, %v737, -inf
        %v5596 = vsel 1, %v738, -inf
        %v5597 = vsel 1, %v739, -inf
        %v5598 = vsel 1, %v740, -inf
        %v5599 = vsel 1, %v741, -inf
        %v5600 = vsel 1, %v742, -inf
        %v5601 = vsel 1, %v743, -inf
        %v5602 = vsel 1, %v744, -inf
        %v5603 = vsel 1, %v745, -inf
        %v5604 = vsel 0, %v746, -inf
        %v5605 = vsel 0, %v747, -inf
        %v5606 = vmax.f32 %v5542, %v5574
        %v5607 = vmax.f32 %v5543, %v5575
        %v5608 = vmax.f32 %v5544, %v5576
        %v5609 = vmax.f32 %v5545, %v5577
        %v5610 = vmax.f32 %v5546, %v5578
        %v5611 = vmax.f32 %v5547, %v5579
        %v5612 = vmax.f32 %v5548, %v5580
        %v5613 = vmax.f32 %v5549, %v5581
        %v5614 = vmax.f32 %v5550, %v5582
        %v5615 = vmax.f32 %v5551, %v5583
        %v5616 = vmax.f32 %v5552, %v5584
        %v5617 = vmax.f32 %v5553, %v5585
        %v5618 = vmax.f32 %v5554, %v5586
        %v5619 = vmax.f32 %v5555, %v5587
        %v5620 = vmax.f32 %v5556, %v5588
        %v5621 = vmax.f32 %v5557, %v5589
        %v5622 = vmax.f32 %v5558, %v5590
        %v5623 = vmax.f32 %v5559, %v5591
        %v5624 = vmax.f32 %v5560, %v5592
        %v5625 = vmax.f32 %v5561, %v5593
        %v5626 = vmax.f32 %v5562, %v5594
        %v5627 = vmax.f32 %v5563, %v5595
        %v5628 = vmax.f32 %v5564, %v5596
        %v5629 = vmax.f32 %v5565, %v5597
        %v5630 = vmax.f32 %v5566, %v5598
        %v5631 = vmax.f32 %v5567, %v5599
        %v5632 = vmax.f32 %v5568, %v5600
        %v5633 = vmax.f32 %v5569, %v5601
        %v5634 = vmax.f32 %v5570, %v5602
        %v5635 = vmax.f32 %v5571, %v5603
        %v5636 = vmax.f32 %v5572, %v5604
        %v5637 = vmax.f32 %v5573, %v5605
        %v5638 = vsel %vm5284, %v748, -inf
        %v5639 = vsel %vm5285, %v749, -inf
        %v5640 = vsel %vm5284, %v750, -inf
        %v5641 = vsel %vm5285, %v751, -inf
        %v5642 = vsel %vm5284, %v752, -inf
        %v5643 = vsel %vm5285, %v753, -inf
        %v5644 = vsel %vm5284, %v754, -inf
        %v5645 = vsel %vm5285, %v755, -inf
        %v5646 = vsel %vm5284, %v756, -inf
        %v5647 = vsel %vm5285, %v757, -inf
        %v5648 = vsel %vm5284, %v758, -inf
        %v5649 = vsel %vm5285, %v759, -inf
        %v5650 = vsel %vm5284, %v760, -inf
        %v5651 = vsel %vm5285, %v761, -inf
        %v5652 = vsel %vm5284, %v762, -inf
        %v5653 = vsel %vm5285, %v763, -inf
        %v5654 = vsel %vm5284, %v764, -inf
        %v5655 = vsel %vm5285, %v765, -inf
        %v5656 = vsel %vm5284, %v766, -inf
        %v5657 = vsel %vm5285, %v767, -inf
        %v5658 = vsel %vm5284, %v768, -inf
        %v5659 = vsel %vm5285, %v769, -inf
        %v5660 = vsel %vm5284, %v770, -inf
        %v5661 = vsel %vm5285, %v771, -inf
        %v5662 = vsel %vm5284, %v772, -inf
        %v5663 = vsel %vm5285, %v773, -inf
        %v5664 = vsel %vm5284, %v774, -inf
        %v5665 = vsel %vm5285, %v775, -inf
        %v5666 = vsel %vm5284, %v776, -inf
        %v5667 = vsel %vm5285, %v777, -inf
        %v5668 = vsel %vm5282, %v778, -inf
        %v5669 = vsel %vm5283, %v779, -inf
        %v5670 = vmax.f32 %v5606, %v5638
        %v5671 = vmax.f32 %v5607, %v5639
        %v5672 = vmax.f32 %v5608, %v5640
        %v5673 = vmax.f32 %v5609, %v5641
        %v5674 = vmax.f32 %v5610, %v5642
        %v5675 = vmax.f32 %v5611, %v5643
        %v5676 = vmax.f32 %v5612, %v5644
        %v5677 = vmax.f32 %v5613, %v5645
        %v5678 = vmax.f32 %v5614, %v5646
        %v5679 = vmax.f32 %v5615, %v5647
        %v5680 = vmax.f32 %v5616, %v5648
        %v5681 = vmax.f32 %v5617, %v5649
        %v5682 = vmax.f32 %v5618, %v5650
        %v5683 = vmax.f32 %v5619, %v5651
        %v5684 = vmax.f32 %v5620, %v5652
        %v5685 = vmax.f32 %v5621, %v5653
        %v5686 = vmax.f32 %v5622, %v5654
        %v5687 = vmax.f32 %v5623, %v5655
        %v5688 = vmax.f32 %v5624, %v5656
        %v5689 = vmax.f32 %v5625, %v5657
        %v5690 = vmax.f32 %v5626, %v5658
        %v5691 = vmax.f32 %v5627, %v5659
        %v5692 = vmax.f32 %v5628, %v5660
        %v5693 = vmax.f32 %v5629, %v5661
        %v5694 = vmax.f32 %v5630, %v5662
        %v5695 = vmax.f32 %v5631, %v5663
        %v5696 = vmax.f32 %v5632, %v5664
        %v5697 = vmax.f32 %v5633, %v5665
        %v5698 = vmax.f32 %v5634, %v5666
        %v5699 = vmax.f32 %v5635, %v5667
        %v5700 = vmax.f32 %v5636, %v5668
        %v5701 = vmax.f32 %v5637, %v5669
        %5734 = vrot.lane.b32.xlu0 %v5670, 32
        %v5735 = vpop.permute.xlu0 %5734
        %5736 = vrot.lane.b32.xlu0 %v5671, 32
        %v5737 = vpop.permute.xlu0 %5736
        %5738 = vrot.lane.b32.xlu0 %v5672, 32
        %v5739 = vpop.permute.xlu0 %5738
        %5740 = vrot.lane.b32.xlu0 %v5673, 32
        %v5741 = vpop.permute.xlu0 %5740
        %5742 = vrot.lane.b32.xlu0 %v5674, 32
        %v5743 = vpop.permute.xlu0 %5742
        %5744 = vrot.lane.b32.xlu0 %v5675, 32
        %v5745 = vpop.permute.xlu0 %5744
        %5746 = vrot.lane.b32.xlu0 %v5676, 32
        %v5747 = vpop.permute.xlu0 %5746
        %5748 = vrot.lane.b32.xlu0 %v5677, 32
        %v5749 = vpop.permute.xlu0 %5748
        %5750 = vrot.lane.b32.xlu0 %v5678, 32
        %v5751 = vpop.permute.xlu0 %5750
        %5752 = vrot.lane.b32.xlu0 %v5679, 32
        %v5753 = vpop.permute.xlu0 %5752
        %5754 = vrot.lane.b32.xlu0 %v5680, 32
        %v5755 = vpop.permute.xlu0 %5754
        %5756 = vrot.lane.b32.xlu0 %v5681, 32
        %v5757 = vpop.permute.xlu0 %5756
        %5758 = vrot.lane.b32.xlu0 %v5682, 32
        %v5759 = vpop.permute.xlu0 %5758
        %5760 = vrot.lane.b32.xlu0 %v5683, 32
        %v5761 = vpop.permute.xlu0 %5760
        %5762 = vrot.lane.b32.xlu0 %v5684, 32
        %v5763 = vpop.permute.xlu0 %5762
        %5764 = vrot.lane.b32.xlu0 %v5685, 32
        %v5765 = vpop.permute.xlu0 %5764
        %5766 = vrot.lane.b32.xlu0 %v5686, 32
        %v5767 = vpop.permute.xlu0 %5766
        %5768 = vrot.lane.b32.xlu0 %v5687, 32
        %v5769 = vpop.permute.xlu0 %5768
        %5770 = vrot.lane.b32.xlu0 %v5688, 32
        %v5771 = vpop.permute.xlu0 %5770
        %5772 = vrot.lane.b32.xlu0 %v5689, 32
        %v5773 = vpop.permute.xlu0 %5772
        %5774 = vrot.lane.b32.xlu0 %v5690, 32
        %v5775 = vpop.permute.xlu0 %5774
        %5776 = vrot.lane.b32.xlu0 %v5691, 32
        %v5777 = vpop.permute.xlu0 %5776
        %5778 = vrot.lane.b32.xlu0 %v5692, 32
        %v5779 = vpop.permute.xlu0 %5778
        %5780 = vrot.lane.b32.xlu0 %v5693, 32
        %v5781 = vpop.permute.xlu0 %5780
        %5782 = vrot.lane.b32.xlu0 %v5694, 32
        %v5783 = vpop.permute.xlu0 %5782
        %5784 = vrot.lane.b32.xlu0 %v5695, 32
        %v5785 = vpop.permute.xlu0 %5784
        %5786 = vrot.lane.b32.xlu0 %v5696, 32
        %v5787 = vpop.permute.xlu0 %5786
        %5788 = vrot.lane.b32.xlu0 %v5697, 32
        %v5789 = vpop.permute.xlu0 %5788
        %5790 = vrot.lane.b32.xlu0 %v5698, 32
        %v5791 = vpop.permute.xlu0 %5790
        %5792 = vrot.lane.b32.xlu0 %v5699, 32
        %v5793 = vpop.permute.xlu0 %5792
        %5794 = vrot.lane.b32.xlu0 %v5700, 32
        %v5795 = vpop.permute.xlu0 %5794
        %5796 = vrot.lane.b32.xlu0 %v5701, 32
        %v5797 = vpop.permute.xlu0 %5796
        %v5830 = vsel %vm3124, %v5017, %v5735
        %v5831 = vsel %vm3124, %v5022, %v5737
        %v5832 = vsel %vm3124, %v5027, %v5739
        %v5833 = vsel %vm3124, %v5032, %v5741
        %v5834 = vsel %vm3124, %v5037, %v5743
        %v5835 = vsel %vm3124, %v5042, %v5745
        %v5836 = vsel %vm3124, %v5047, %v5747
        %v5837 = vsel %vm3124, %v5052, %v5749
        %v5838 = vsel %vm3124, %v5057, %v5751
        %v5839 = vsel %vm3124, %v5062, %v5753
        %v5840 = vsel %vm3124, %v5067, %v5755
        %v5841 = vsel %vm3124, %v5072, %v5757
        %v5842 = vsel %vm3124, %v5077, %v5759
        %v5843 = vsel %vm3124, %v5082, %v5761
        %v5844 = vsel %vm3124, %v5087, %v5763
        %v5845 = vsel %vm3124, %v5092, %v5765
        %v5846 = vsel %vm3124, %v5097, %v5767
        %v5847 = vsel %vm3124, %v5102, %v5769
        %v5848 = vsel %vm3124, %v5107, %v5771
        %v5849 = vsel %vm3124, %v5112, %v5773
        %v5850 = vsel %vm3124, %v5117, %v5775
        %v5851 = vsel %vm3124, %v5122, %v5777
        %v5852 = vsel %vm3124, %v5127, %v5779
        %v5853 = vsel %vm3124, %v5132, %v5781
        %v5854 = vsel %vm3124, %v5137, %v5783
        %v5855 = vsel %vm3124, %v5142, %v5785
        %v5856 = vsel %vm3124, %v5147, %v5787
        %v5857 = vsel %vm3124, %v5152, %v5789
        %v5858 = vsel %vm3124, %v5157, %v5791
        %v5859 = vsel %vm3124, %v5162, %v5793
        %v5860 = vsel %vm3124, %v5167, %v5795
        %v5861 = vsel %vm3124, %v5172, %v5797
        %5862 = vst.msk [vmem:[%s163] sm:$0xff] %vm3157, %v5830
        %5863 = vst.msk [vmem:[%s163 + $0x8] sm:$0xff] %vm3157, %v5831
        %5864 = vst.msk [vmem:[%s163 + $0x10] sm:$0xff] %vm3157, %v5832
        %5865 = vst.msk [vmem:[%s163 + $0x18] sm:$0xff] %vm3157, %v5833
        %5866 = vst.msk [vmem:[%s163 + $0x20] sm:$0xff] %vm3157, %v5834
        %5867 = vst.msk [vmem:[%s163 + $0x28] sm:$0xff] %vm3157, %v5835
        %5868 = vst.msk [vmem:[%s163 + $0x30] sm:$0xff] %vm3157, %v5836
        %5869 = vst.msk [vmem:[%s163 + $0x38] sm:$0xff] %vm3157, %v5837
        %5870 = vst.msk [vmem:[%s163 + $0x40] sm:$0xff] %vm3157, %v5838
        %5871 = vst.msk [vmem:[%s163 + $0x48] sm:$0xff] %vm3157, %v5839
        %5872 = vst.msk [vmem:[%s163 + $0x50] sm:$0xff] %vm3157, %v5840
        %5873 = vst.msk [vmem:[%s163 + $0x58] sm:$0xff] %vm3157, %v5841
        %5874 = vst.msk [vmem:[%s163 + $0x60] sm:$0xff] %vm3157, %v5842
        %5875 = vst.msk [vmem:[%s163 + $0x68] sm:$0xff] %vm3157, %v5843
        %5876 = vst.msk [vmem:[%s163 + $0x70] sm:$0xff] %vm3157, %v5844
        %5877 = vst.msk [vmem:[%s163 + $0x78] sm:$0xff] %vm3157, %v5845
        %5878 = vst.msk [vmem:[%s163 + $0x80] sm:$0xff] %vm3157, %v5846
        %5879 = vst.msk [vmem:[%s163 + $0x88] sm:$0xff] %vm3157, %v5847
        %5880 = vst.msk [vmem:[%s163 + $0x90] sm:$0xff] %vm3157, %v5848
        %5881 = vst.msk [vmem:[%s163 + $0x98] sm:$0xff] %vm3157, %v5849
        %5882 = vst.msk [vmem:[%s163 + $0xa0] sm:$0xff] %vm3157, %v5850
        %5883 = vst.msk [vmem:[%s163 + $0xa8] sm:$0xff] %vm3157, %v5851
        %5884 = vst.msk [vmem:[%s163 + $0xb0] sm:$0xff] %vm3157, %v5852
        %5885 = vst.msk [vmem:[%s163 + $0xb8] sm:$0xff] %vm3157, %v5853
        %5886 = vst.msk [vmem:[%s163 + $0xc0] sm:$0xff] %vm3157, %v5854
        %5887 = vst.msk [vmem:[%s163 + $0xc8] sm:$0xff] %vm3157, %v5855
        %5888 = vst.msk [vmem:[%s163 + $0xd0] sm:$0xff] %vm3157, %v5856
        %5889 = vst.msk [vmem:[%s163 + $0xd8] sm:$0xff] %vm3157, %v5857
        %5890 = vst.msk [vmem:[%s163 + $0xe0] sm:$0xff] %vm3157, %v5858
        %5891 = vst.msk [vmem:[%s163 + $0xe8] sm:$0xff] %vm3157, %v5859
        %5892 = vst.msk [vmem:[%s163 + $0xf0] sm:$0xff] %vm3157, %v5860
        %5893 = vst.msk [vmem:[%s163 + $0xf8] sm:$0xff] %vm3157, %v5861
        %s5894 = sand.u32 %s93, 1
        %s5895 = scalar_lea.sflag [#allocation3], %s5894
        %s5896 = sand.u32 %s93, 1
        %s5897 = smul.addr %s5896, 256
        %s5898 = scalar_lea.vmem [#allocation2], %s5897
        // Predicated region
        $region33: #{tpu_custom_call.1} parent=31 // pred_check
          %p5899 = pneg %p103
        $region34: #{tpu_custom_call.1} parent=31 // pred_check_branch
          %5901 = sbr.rel (%p5899) target = $region36
        $region35: #{tpu_custom_call.1} parent=31 // pred_region
          %s5903 = ssub.s32 4096, 4096
          %5904 = vsyncadd %s5895, %s5903
          %s5905 = smul.addr %s17, 32
          %s5906 = smul.addr %s5905, 128
          %s5907 = scalar_lea.hbm %s3, %s5906
          %s5908 = sshll.u32 %s5898, 4
          %s5909 = int_to_ptr.vmem [resolvable:$true] %s5908
          %5914 = dma.vmem_to_hbm [thread:$0]  %s5909, 4096, %s5907, %s5895, 128, 128, 8
        $region36: #{tpu_custom_call.1} parent=31 // pred_fallthru
          _
      $region32: #{tpu_custom_call.1} parent=5 // pred_fallthru
        _
      %p5915 = scmp.le.s32.totalorder 2, %s12
      // Predicated region
      $region37: #{tpu_custom_call.1} parent=5 // pred_check
        %p5916 = pneg %p5915
      $region38: #{tpu_custom_call.1} parent=5 // pred_check_branch
        %5918 = sbr.rel (%p5916) target = $region40
      $region39: #{tpu_custom_call.1} parent=5 // pred_region
        %s5919 = ssub.s32 %s12, 2
        // Predicated region
        $region41: #{tpu_custom_call.1} parent=39 // pred_check
          %p5920 = pneg %p109
        $region42: #{tpu_custom_call.1} parent=39 // pred_check_branch
          %5922 = sbr.rel (%p5920) target = $region44
        $region43: #{tpu_custom_call.1} parent=39 // pred_region
          %s5923 = sand.u32 %s94, 1
          %s5924 = scalar_lea.sflag [#allocation3], %s5923
          %s5925 = sand.u32 %s94, 1
          %s5926 = smul.addr %s5925, 256
          %s5927 = scalar_lea.vmem [#allocation2], %s5926
          %5928 = dma.done %s5924, 4096
        $region44: #{tpu_custom_call.1} parent=39 // pred_fallthru
          _
      $region40: #{tpu_custom_call.1} parent=5 // pred_fallthru
        _
    $region6: #{tpu_custom_call.1} parent=1 // loop_footer
      %s16 = sadd.s32 1, %s12
    $region7: #{tpu_custom_call.1} parent=1 // loop_footer_branch
      %11 = sbr.rel target = $region3
    $region8: #{tpu_custom_call.1} parent=1 // loop_exit
      _
    %5929 = vsyncpa [#allocation3], 1
    %s5930 = scalar_lea.sflag [#allocation3], 1
    %5931 = vsyncpa %s5930, 1

</llo_original>
